<compile_context>
chip_gen: v7x
topology: tpu7x:2x2x1
jax: 0.10.0
libtpu: 0.0.40
codegen_flags: <defaults>
</compile_context>

<pallas_src>
import math

import jax
import jax.numpy as jnp
from jax.experimental import pallas as pl
from jax.experimental.pallas import tpu as pltpu

# ----------------------------- config ---------------------------------------
B = 2            # batch
S = 8            # sequence length
H = 32           # hidden size      (768 in bert-base)
NH = 4           # attention heads  (12 in bert-base)
DH = H // NH     # head dim
I = 64           # intermediate/FFN (3072 in bert-base)
L = 2            # encoder layers   (12 in bert-base)
VOCAB = 50
TYPE_VOCAB = 2
MAX_POS = 16
NUM_CLASSES = 8
LN_EPS = 1e-12   # BERT layernorm eps
ATTN_SCALE = 1.0 / math.sqrt(DH)


# --------------------------- in-kernel helpers -------------------------------
def _layernorm(x, g, b):
    mu = jnp.mean(x, axis=-1, keepdims=True)
    xc = x - mu
    var = jnp.mean(xc * xc, axis=-1, keepdims=True)
    return xc * jax.lax.rsqrt(var + LN_EPS) * g + b


def _erf(x):
    # Abramowitz & Stegun 7.1.26, |error| < 1.5e-7; uses only exp (EUP) + VPU ops.
    a1, a2, a3, a4, a5 = (0.254829592, -0.284496736, 1.421413741,
                          -1.453152027, 1.061405429)
    p = 0.3275911
    sign = jnp.where(x >= 0.0, 1.0, -1.0)
    ax = jnp.abs(x)
    t = 1.0 / (1.0 + p * ax)
    poly = ((((a5 * t + a4) * t + a3) * t + a2) * t + a1) * t
    return sign * (1.0 - poly * jnp.exp(-ax * ax))


def _gelu_exact(x):
    # exact (erf-based) GELU, matching HF bert-base 'gelu'
    return 0.5 * x * (1.0 + _erf(x * (1.0 / math.sqrt(2.0))))


# --------------------------- fused Pallas kernel -----------------------------
def _fused_bert_kernel(emb_ref, mask_ref,
                       emb_ln_g_ref, emb_ln_b_ref,
                       wqkv_ref, bqkv_ref, wo_ref, bo_ref,
                       ln1_g_ref, ln1_b_ref,
                       wi_ref, bi_ref, wf_ref, bf_ref,
                       ln2_g_ref, ln2_b_ref,
                       pool_w_ref, pool_b_ref, cls_w_ref, cls_b_ref,
                       out_ref):
    """Entire CpsBertModel forward for one batch element (grid axis = batch)."""
    x = emb_ref[0]                  # (S, H) summed word+pos+type embeddings
    add_mask = mask_ref[0]          # (1, S) additive attention mask over keys

    # embedding LayerNorm (dropout is a no-op in eval mode)
    x = _layernorm(x, emb_ln_g_ref[...], emb_ln_b_ref[...])

    for l in range(L):              # L=2, unrolled at trace time
        # fused Q|K|V projection: (S, H) @ (H, 3H)
        qkv = (jnp.dot(x, wqkv_ref[l], preferred_element_type=jnp.float32)
               + bqkv_ref[l])
        wo_l = wo_ref[l]            # (H, H)

        # self-attention; per-head context folded directly into the output
        # projection:  ctx @ Wo == sum_h ctx_h @ Wo[h*DH:(h+1)*DH, :]
        attn = jnp.zeros((S, H), jnp.float32)
        for h in range(NH):
            qh = qkv[:, h * DH:(h + 1) * DH]
            kh = qkv[:, H + h * DH:H + (h + 1) * DH]
            vh = qkv[:, 2 * H + h * DH:2 * H + (h + 1) * DH]
            s = (jnp.dot(qh, kh.T, preferred_element_type=jnp.float32)
                 * ATTN_SCALE + add_mask)
            s = s - jnp.max(s, axis=-1, keepdims=True)
            p = jnp.exp(s)
            p = p * pl.reciprocal(jnp.sum(p, axis=-1, keepdims=True), approx=True)
            ctx_h = jnp.dot(p, vh, preferred_element_type=jnp.float32)    # (S, DH)
            attn = attn + jnp.dot(ctx_h, wo_l[h * DH:(h + 1) * DH, :],
                                  preferred_element_type=jnp.float32)
        attn = attn + bo_ref[l]
        x = _layernorm(attn + x, ln1_g_ref[l], ln1_b_ref[l])

        # feed-forward
        inter = (jnp.dot(x, wi_ref[l], preferred_element_type=jnp.float32)
                 + bi_ref[l])
        inter = _gelu_exact(inter)
        ffn = (jnp.dot(inter, wf_ref[l], preferred_element_type=jnp.float32)
               + bf_ref[l])
        x = _layernorm(ffn + x, ln2_g_ref[l], ln2_b_ref[l])

    # pooler on the CLS token (row 0), then the Linear(768->8) analogue
    cls = x[0:1, :]                                                       # (1, H)
    pooled = jnp.tanh(jnp.dot(cls, pool_w_ref[...],
                              preferred_element_type=jnp.float32)
                      + pool_b_ref[...])
    logits = (jnp.dot(pooled, cls_w_ref[...],
                      preferred_element_type=jnp.float32) + cls_b_ref[...])
    out_ref[0] = logits.astype(out_ref.dtype)


# ----------------------------- parameters ------------------------------------
def init_params(key):
    std = 0.02  # BERT initializer_range
    keys = iter(jax.random.split(key, 64))

    def nrm(shape):
        return (std * jax.random.normal(next(keys), shape)).astype(jnp.float32)

    def stack(make):
        return jnp.stack([make() for _ in range(L)], axis=0)

    return {
        "word_emb": nrm((VOCAB, H)),
        "pos_emb": nrm((MAX_POS, H)),
        "type_emb": nrm((TYPE_VOCAB, H)),
        "emb_ln_g": jnp.ones((1, H), jnp.float32),
        "emb_ln_b": jnp.zeros((1, H), jnp.float32),
        # per-layer weights stacked along a leading L axis; Q|K|V fused -> (H, 3H)
        "wqkv": stack(lambda: nrm((H, 3 * H))),
        "bqkv": jnp.zeros((L, 1, 3 * H), jnp.float32),
        "wo": stack(lambda: nrm((H, H))),
        "bo": jnp.zeros((L, 1, H), jnp.float32),
        "ln1_g": jnp.ones((L, 1, H), jnp.float32),
        "ln1_b": jnp.zeros((L, 1, H), jnp.float32),
        "wi": stack(lambda: nrm((H, I))),
        "bi": jnp.zeros((L, 1, I), jnp.float32),
        "wf": stack(lambda: nrm((I, H))),
        "bf": jnp.zeros((L, 1, H), jnp.float32),
        "ln2_g": jnp.ones((L, 1, H), jnp.float32),
        "ln2_b": jnp.zeros((L, 1, H), jnp.float32),
        "pool_w": nrm((H, H)),
        "pool_b": jnp.zeros((1, H), jnp.float32),
        # CpsBertModel.linear: weight uniform(-0.5, 0.5), bias zero
        "cls_w": jax.random.uniform(next(keys), (H, NUM_CLASSES),
                                    minval=-0.5, maxval=0.5).astype(jnp.float32),
        "cls_b": jnp.zeros((1, NUM_CLASSES), jnp.float32),
    }


_WEIGHT_ORDER = ["emb_ln_g", "emb_ln_b", "wqkv", "bqkv", "wo", "bo",
                 "ln1_g", "ln1_b", "wi", "bi", "wf", "bf",
                 "ln2_g", "ln2_b", "pool_w", "pool_b", "cls_w", "cls_b"]


# ------------------------------ forward --------------------------------------
def cps_bert_forward(params, input_ids, attention_mask, token_type_ids):
    # TODO(synk): embedding-table gathers (word/pos/type) stay in plain JAX;
    # a DMA-gather Pallas kernel adds no value at these sizes.
    pos_ids = jnp.arange(S, dtype=jnp.int32)
    emb = (jnp.take(params["word_emb"], input_ids, axis=0)
           + jnp.take(params["pos_emb"], pos_ids, axis=0)[None, :, :]
           + jnp.take(params["type_emb"], token_type_ids, axis=0))       # (B,S,H)
    add_mask = ((1.0 - attention_mask.astype(jnp.float32)) * -10000.0
                ).reshape(B, 1, S)

    weights = [params[n] for n in _WEIGHT_ORDER]

    def full_spec(a):
        # whole array resident in VMEM, same block for every grid step
        return pl.BlockSpec(a.shape, lambda b, _nd=a.ndim: (0,) * _nd)

    out = pl.pallas_call(
        _fused_bert_kernel,
        out_shape=jax.ShapeDtypeStruct((B, 1, NUM_CLASSES), jnp.float32),
        grid=(B,),
        in_specs=[pl.BlockSpec((1, S, H), lambda b: (b, 0, 0)),
                  pl.BlockSpec((1, 1, S), lambda b: (b, 0, 0))]
                 + [full_spec(w) for w in weights],
        out_specs=pl.BlockSpec((1, 1, NUM_CLASSES), lambda b: (b, 0, 0)),
        compiler_params=pltpu.CompilerParams(
            dimension_semantics=("parallel",)),
    )(emb, add_mask, *weights)
    return out.reshape(B, NUM_CLASSES)


# --------------------------- pure-JAX reference -------------------------------
def cps_bert_reference(params, input_ids, attention_mask, token_type_ids):
    pos_ids = jnp.arange(S, dtype=jnp.int32)
    x = (jnp.take(params["word_emb"], input_ids, axis=0)
         + jnp.take(params["pos_emb"], pos_ids, axis=0)[None]
         + jnp.take(params["type_emb"], token_type_ids, axis=0))

    def ln(v, g, b):
        mu = v.mean(-1, keepdims=True)
        var = ((v - mu) ** 2).mean(-1, keepdims=True)
        return (v - mu) / jnp.sqrt(var + LN_EPS) * g + b

    x = ln(x, params["emb_ln_g"], params["emb_ln_b"])
    add_mask = (1.0 - attention_mask.astype(jnp.float32))[:, None, None, :] * -10000.0
    for l in range(L):
        qkv = x @ params["wqkv"][l] + params["bqkv"][l]
        q, k, v = jnp.split(qkv, 3, axis=-1)
        split = lambda t: t.reshape(B, S, NH, DH).transpose(0, 2, 1, 3)
        q, k, v = split(q), split(k), split(v)
        s = jnp.einsum("bhqd,bhkd->bhqk", q, k) * ATTN_SCALE + add_mask
        p = jax.nn.softmax(s, axis=-1)
        ctx = jnp.einsum("bhqk,bhkd->bhqd", p, v).transpose(0, 2, 1, 3).reshape(B, S, H)
        attn = ctx @ params["wo"][l] + params["bo"][l]
        x = ln(attn + x, params["ln1_g"][l], params["ln1_b"][l])
        inter = jax.nn.gelu(x @ params["wi"][l] + params["bi"][l], approximate=False)
        ffn = inter @ params["wf"][l] + params["bf"][l]
        x = ln(ffn + x, params["ln2_g"][l], params["ln2_b"][l])
    pooled = jnp.tanh(x[:, 0, :] @ params["pool_w"] + params["pool_b"])
    return pooled @ params["cls_w"] + params["cls_b"]


# ------------------------------- main -----------------------------------------
if __name__ == "__main__":
    key = jax.random.PRNGKey(0)
    pkey, ikey = jax.random.split(key)
    params = init_params(pkey)

    input_ids = jax.random.randint(ikey, (B, S), 0, VOCAB, dtype=jnp.int32)
    attention_mask = jnp.ones((B, S), dtype=jnp.int32)
    token_type_ids = jnp.zeros((B, S), dtype=jnp.int32)

    logits = jax.jit(cps_bert_forward)(params, input_ids, attention_mask,
                                       token_type_ids)
    logits = jax.block_until_ready(logits)
    assert logits.shape == (B, NUM_CLASSES) and logits.dtype == jnp.float32

    ref = cps_bert_reference(params, input_ids, attention_mask, token_type_ids)
    max_err = float(jnp.max(jnp.abs(logits - ref)))
    assert max_err < 5e-2, f"mismatch vs reference: max abs err = {max_err}"
    print("KERNEL_OK")
</pallas_src>

<mosaic_0001>
module attributes {stable_mosaic.version = 11 : i64} {
  func.func @_fused_bert_kernel(%arg0: i32, %arg1: memref<1x8x32xf32, #tpu.memory_space<vmem>>, %arg2: memref<1x1x8xf32, #tpu.memory_space<vmem>>, %arg3: memref<1x32xf32, #tpu.memory_space<vmem>>, %arg4: memref<1x32xf32, #tpu.memory_space<vmem>>, %arg5: memref<2x32x96xf32, #tpu.memory_space<vmem>>, %arg6: memref<2x1x96xf32, #tpu.memory_space<vmem>>, %arg7: memref<2x32x32xf32, #tpu.memory_space<vmem>>, %arg8: memref<2x1x32xf32, #tpu.memory_space<vmem>>, %arg9: memref<2x1x32xf32, #tpu.memory_space<vmem>>, %arg10: memref<2x1x32xf32, #tpu.memory_space<vmem>>, %arg11: memref<2x32x64xf32, #tpu.memory_space<vmem>>, %arg12: memref<2x1x64xf32, #tpu.memory_space<vmem>>, %arg13: memref<2x64x32xf32, #tpu.memory_space<vmem>>, %arg14: memref<2x1x32xf32, #tpu.memory_space<vmem>>, %arg15: memref<2x1x32xf32, #tpu.memory_space<vmem>>, %arg16: memref<2x1x32xf32, #tpu.memory_space<vmem>>, %arg17: memref<32x32xf32, #tpu.memory_space<vmem>>, %arg18: memref<1x32xf32, #tpu.memory_space<vmem>>, %arg19: memref<32x8xf32, #tpu.memory_space<vmem>>, %arg20: memref<1x8xf32, #tpu.memory_space<vmem>>, %arg21: memref<1x1x8xf32, #tpu.memory_space<vmem>>) attributes {dimension_semantics = [#tpu.dimension_semantics<parallel>], iteration_bounds = array<i64: 2>, scalar_prefetch = 0 : i64, scratch_operands = 0 : i64, tpu.core_type = #tpu.core_type<tc>, window_params = [{transform_indices = @transform_0, window_bounds = array<i64: 1, 8, 32>}, {transform_indices = @transform_1, window_bounds = array<i64: 1, 1, 8>}, {pipeline_mode = #tpu.pipeline_mode<synchronous>, transform_indices = @transform_2, window_bounds = array<i64: 1, 32>}, {pipeline_mode = #tpu.pipeline_mode<synchronous>, transform_indices = @transform_3, window_bounds = array<i64: 1, 32>}, {pipeline_mode = #tpu.pipeline_mode<synchronous>, transform_indices = @transform_4, window_bounds = array<i64: 2, 32, 96>}, {pipeline_mode = #tpu.pipeline_mode<synchronous>, transform_indices = @transform_5, window_bounds = array<i64: 2, 1, 96>}, {pipeline_mode = #tpu.pipeline_mode<synchronous>, transform_indices = @transform_6, window_bounds = array<i64: 2, 32, 32>}, {pipeline_mode = #tpu.pipeline_mode<synchronous>, transform_indices = @transform_7, window_bounds = array<i64: 2, 1, 32>}, {pipeline_mode = #tpu.pipeline_mode<synchronous>, transform_indices = @transform_8, window_bounds = array<i64: 2, 1, 32>}, {pipeline_mode = #tpu.pipeline_mode<synchronous>, transform_indices = @transform_9, window_bounds = array<i64: 2, 1, 32>}, {pipeline_mode = #tpu.pipeline_mode<synchronous>, transform_indices = @transform_10, window_bounds = array<i64: 2, 32, 64>}, {pipeline_mode = #tpu.pipeline_mode<synchronous>, transform_indices = @transform_11, window_bounds = array<i64: 2, 1, 64>}, {pipeline_mode = #tpu.pipeline_mode<synchronous>, transform_indices = @transform_12, window_bounds = array<i64: 2, 64, 32>}, {pipeline_mode = #tpu.pipeline_mode<synchronous>, transform_indices = @transform_13, window_bounds = array<i64: 2, 1, 32>}, {pipeline_mode = #tpu.pipeline_mode<synchronous>, transform_indices = @transform_14, window_bounds = array<i64: 2, 1, 32>}, {pipeline_mode = #tpu.pipeline_mode<synchronous>, transform_indices = @transform_15, window_bounds = array<i64: 2, 1, 32>}, {pipeline_mode = #tpu.pipeline_mode<synchronous>, transform_indices = @transform_16, window_bounds = array<i64: 32, 32>}, {pipeline_mode = #tpu.pipeline_mode<synchronous>, transform_indices = @transform_17, window_bounds = array<i64: 1, 32>}, {pipeline_mode = #tpu.pipeline_mode<synchronous>, transform_indices = @transform_18, window_bounds = array<i64: 32, 8>}, {pipeline_mode = #tpu.pipeline_mode<synchronous>, transform_indices = @transform_19, window_bounds = array<i64: 1, 8>}, {transform_indices = @transform_20, window_bounds = array<i64: 1, 1, 8>}]} {
    %c0 = arith.constant 0 : index
    %c0_0 = arith.constant 0 : index
    %c0_1 = arith.constant 0 : index
    %0 = vector.load %arg1[%c0, %c0_0, %c0_1] : memref<1x8x32xf32, #tpu.memory_space<vmem>>, vector<1x8x32xf32>
    %1 = vector.shape_cast %0 : vector<1x8x32xf32> to vector<8x32xf32>
    %c0_2 = arith.constant 0 : index
    %c0_3 = arith.constant 0 : index
    %c0_4 = arith.constant 0 : index
    %2 = vector.load %arg2[%c0_2, %c0_3, %c0_4] : memref<1x1x8xf32, #tpu.memory_space<vmem>>, vector<1x1x8xf32>
    %3 = vector.shape_cast %2 : vector<1x1x8xf32> to vector<1x8xf32>
    %c0_5 = arith.constant 0 : index
    %c0_6 = arith.constant 0 : index
    %4 = vector.load %arg3[%c0_5, %c0_6] : memref<1x32xf32, #tpu.memory_space<vmem>>, vector<1x32xf32>
    %c0_7 = arith.constant 0 : index
    %c0_8 = arith.constant 0 : index
    %5 = vector.load %arg4[%c0_7, %c0_8] : memref<1x32xf32, #tpu.memory_space<vmem>>, vector<1x32xf32>
    %cst = arith.constant dense<0.000000e+00> : vector<8xf32>
    %6 = vector.multi_reduction <add>, %1, %cst [1] : vector<8x32xf32> to vector<8xf32>
    %7 = vector.shape_cast %6 : vector<8xf32> to vector<8x1xf32>
    %cst_9 = arith.constant 3.200000e+01 : f32
    %8 = vector.broadcast %cst_9 : f32 to vector<8x1xf32>
    %9 = arith.divf %7, %8 : vector<8x1xf32>
    %10 = vector.broadcast %9 : vector<8x1xf32> to vector<8x32xf32>
    %11 = arith.subf %1, %10 : vector<8x32xf32>
    %12 = arith.mulf %11, %11 : vector<8x32xf32>
    %cst_10 = arith.constant dense<0.000000e+00> : vector<8xf32>
    %13 = vector.multi_reduction <add>, %12, %cst_10 [1] : vector<8x32xf32> to vector<8xf32>
    %14 = vector.shape_cast %13 : vector<8xf32> to vector<8x1xf32>
    %cst_11 = arith.constant 3.200000e+01 : f32
    %15 = vector.broadcast %cst_11 : f32 to vector<8x1xf32>
    %16 = arith.divf %14, %15 : vector<8x1xf32>
    %cst_12 = arith.constant 9.99999996E-13 : f32
    %17 = vector.broadcast %cst_12 : f32 to vector<8x1xf32>
    %18 = arith.addf %16, %17 : vector<8x1xf32>
    %19 = math.rsqrt %18 : vector<8x1xf32>
    %20 = vector.broadcast %19 : vector<8x1xf32> to vector<8x32xf32>
    %21 = arith.mulf %11, %20 : vector<8x32xf32>
    %22 = vector.broadcast %4 : vector<1x32xf32> to vector<8x32xf32>
    %23 = arith.mulf %21, %22 : vector<8x32xf32>
    %24 = vector.broadcast %5 : vector<1x32xf32> to vector<8x32xf32>
    %25 = arith.addf %23, %24 : vector<8x32xf32>
    %c0_13 = arith.constant 0 : index
    %c0_14 = arith.constant 0 : index
    %c0_15 = arith.constant 0 : index
    %26 = vector.load %arg5[%c0_13, %c0_14, %c0_15] : memref<2x32x96xf32, #tpu.memory_space<vmem>>, vector<1x32x96xf32>
    %27 = vector.shape_cast %26 : vector<1x32x96xf32> to vector<32x96xf32>
    %cst_16 = arith.constant dense<0.000000e+00> : vector<8x96xf32>
    %28 = tpu.matmul %25, %27, %cst_16 {dimension_numbers = #tpu.dot_dimension_numbers<[1], [0], [0], [1], [0, 0, 1, 1], [], []>} : vector<8x32xf32>, vector<32x96xf32>, vector<8x96xf32> -> vector<8x96xf32>
    %c0_17 = arith.constant 0 : index
    %c0_18 = arith.constant 0 : index
    %c0_19 = arith.constant 0 : index
    %29 = vector.load %arg6[%c0_17, %c0_18, %c0_19] : memref<2x1x96xf32, #tpu.memory_space<vmem>>, vector<1x1x96xf32>
    %30 = vector.shape_cast %29 : vector<1x1x96xf32> to vector<1x96xf32>
    %31 = vector.broadcast %30 : vector<1x96xf32> to vector<8x96xf32>
    %32 = arith.addf %28, %31 : vector<8x96xf32>
    %c0_20 = arith.constant 0 : index
    %c0_21 = arith.constant 0 : index
    %c0_22 = arith.constant 0 : index
    %33 = vector.load %arg7[%c0_20, %c0_21, %c0_22] : memref<2x32x32xf32, #tpu.memory_space<vmem>>, vector<1x32x32xf32>
    %34 = vector.shape_cast %33 : vector<1x32x32xf32> to vector<32x32xf32>
    %cst_23 = arith.constant 0.000000e+00 : f32
    %35 = vector.broadcast %cst_23 : f32 to vector<8x32xf32>
    %36 = vector.extract_strided_slice %32 {offsets = [0, 0], sizes = [8, 8], strides = [1, 1]} : vector<8x96xf32> to vector<8x8xf32>
    %37 = vector.extract_strided_slice %32 {offsets = [0, 32], sizes = [8, 8], strides = [1, 1]} : vector<8x96xf32> to vector<8x8xf32>
    %38 = vector.extract_strided_slice %32 {offsets = [0, 64], sizes = [8, 8], strides = [1, 1]} : vector<8x96xf32> to vector<8x8xf32>
    %39 = tpu.transpose %37, [1, 0] : vector<8x8xf32> -> vector<8x8xf32>
    %cst_24 = arith.constant dense<0.000000e+00> : vector<8x8xf32>
    %40 = tpu.matmul %36, %39, %cst_24 {dimension_numbers = #tpu.dot_dimension_numbers<[1], [0], [0], [1], [0, 0, 1, 1], [], []>} : vector<8x8xf32>, vector<8x8xf32>, vector<8x8xf32> -> vector<8x8xf32>
    %cst_25 = arith.constant 0.353553385 : f32
    %41 = vector.broadcast %cst_25 : f32 to vector<8x8xf32>
    %42 = arith.mulf %40, %41 : vector<8x8xf32>
    %43 = vector.broadcast %3 : vector<1x8xf32> to vector<8x8xf32>
    %44 = arith.addf %42, %43 : vector<8x8xf32>
    %cst_26 = arith.constant dense<0xFF800000> : vector<8xf32>
    %45 = vector.multi_reduction <maximumf>, %44, %cst_26 [1] : vector<8x8xf32> to vector<8xf32>
    %46 = vector.shape_cast %45 : vector<8xf32> to vector<8x1xf32>
    %47 = vector.broadcast %46 : vector<8x1xf32> to vector<8x8xf32>
    %48 = arith.subf %44, %47 : vector<8x8xf32>
    %49 = math.exp %48 : vector<8x8xf32>
    %cst_27 = arith.constant dense<0.000000e+00> : vector<8xf32>
    %50 = vector.multi_reduction <add>, %49, %cst_27 [1] : vector<8x8xf32> to vector<8xf32>
    %51 = vector.shape_cast %50 : vector<8xf32> to vector<8x1xf32>
    %52 = tpu.reciprocal %51 {approx = true} : vector<8x1xf32> -> vector<8x1xf32>
    %53 = vector.broadcast %52 : vector<8x1xf32> to vector<8x8xf32>
    %54 = arith.mulf %49, %53 : vector<8x8xf32>
    %cst_28 = arith.constant dense<0.000000e+00> : vector<8x8xf32>
    %55 = tpu.matmul %54, %38, %cst_28 {dimension_numbers = #tpu.dot_dimension_numbers<[1], [0], [0], [1], [0, 0, 1, 1], [], []>} : vector<8x8xf32>, vector<8x8xf32>, vector<8x8xf32> -> vector<8x8xf32>
    %56 = vector.extract_strided_slice %34 {offsets = [0, 0], sizes = [8, 32], strides = [1, 1]} : vector<32x32xf32> to vector<8x32xf32>
    %cst_29 = arith.constant dense<0.000000e+00> : vector<8x32xf32>
    %57 = tpu.matmul %55, %56, %cst_29 {dimension_numbers = #tpu.dot_dimension_numbers<[1], [0], [0], [1], [0, 0, 1, 1], [], []>} : vector<8x8xf32>, vector<8x32xf32>, vector<8x32xf32> -> vector<8x32xf32>
    %58 = arith.addf %35, %57 : vector<8x32xf32>
    %59 = vector.extract_strided_slice %32 {offsets = [0, 8], sizes = [8, 8], strides = [1, 1]} : vector<8x96xf32> to vector<8x8xf32>
    %60 = vector.extract_strided_slice %32 {offsets = [0, 40], sizes = [8, 8], strides = [1, 1]} : vector<8x96xf32> to vector<8x8xf32>
    %61 = vector.extract_strided_slice %32 {offsets = [0, 72], sizes = [8, 8], strides = [1, 1]} : vector<8x96xf32> to vector<8x8xf32>
    %62 = tpu.transpose %60, [1, 0] : vector<8x8xf32> -> vector<8x8xf32>
    %cst_30 = arith.constant dense<0.000000e+00> : vector<8x8xf32>
    %63 = tpu.matmul %59, %62, %cst_30 {dimension_numbers = #tpu.dot_dimension_numbers<[1], [0], [0], [1], [0, 0, 1, 1], [], []>} : vector<8x8xf32>, vector<8x8xf32>, vector<8x8xf32> -> vector<8x8xf32>
    %cst_31 = arith.constant 0.353553385 : f32
    %64 = vector.broadcast %cst_31 : f32 to vector<8x8xf32>
    %65 = arith.mulf %63, %64 : vector<8x8xf32>
    %66 = vector.broadcast %3 : vector<1x8xf32> to vector<8x8xf32>
    %67 = arith.addf %65, %66 : vector<8x8xf32>
    %cst_32 = arith.constant dense<0xFF800000> : vector<8xf32>
    %68 = vector.multi_reduction <maximumf>, %67, %cst_32 [1] : vector<8x8xf32> to vector<8xf32>
    %69 = vector.shape_cast %68 : vector<8xf32> to vector<8x1xf32>
    %70 = vector.broadcast %69 : vector<8x1xf32> to vector<8x8xf32>
    %71 = arith.subf %67, %70 : vector<8x8xf32>
    %72 = math.exp %71 : vector<8x8xf32>
    %cst_33 = arith.constant dense<0.000000e+00> : vector<8xf32>
    %73 = vector.multi_reduction <add>, %72, %cst_33 [1] : vector<8x8xf32> to vector<8xf32>
    %74 = vector.shape_cast %73 : vector<8xf32> to vector<8x1xf32>
    %75 = tpu.reciprocal %74 {approx = true} : vector<8x1xf32> -> vector<8x1xf32>
    %76 = vector.broadcast %75 : vector<8x1xf32> to vector<8x8xf32>
    %77 = arith.mulf %72, %76 : vector<8x8xf32>
    %cst_34 = arith.constant dense<0.000000e+00> : vector<8x8xf32>
    %78 = tpu.matmul %77, %61, %cst_34 {dimension_numbers = #tpu.dot_dimension_numbers<[1], [0], [0], [1], [0, 0, 1, 1], [], []>} : vector<8x8xf32>, vector<8x8xf32>, vector<8x8xf32> -> vector<8x8xf32>
    %79 = vector.extract_strided_slice %34 {offsets = [8, 0], sizes = [8, 32], strides = [1, 1]} : vector<32x32xf32> to vector<8x32xf32>
    %cst_35 = arith.constant dense<0.000000e+00> : vector<8x32xf32>
    %80 = tpu.matmul %78, %79, %cst_35 {dimension_numbers = #tpu.dot_dimension_numbers<[1], [0], [0], [1], [0, 0, 1, 1], [], []>} : vector<8x8xf32>, vector<8x32xf32>, vector<8x32xf32> -> vector<8x32xf32>
    %81 = arith.addf %58, %80 : vector<8x32xf32>
    %82 = vector.extract_strided_slice %32 {offsets = [0, 16], sizes = [8, 8], strides = [1, 1]} : vector<8x96xf32> to vector<8x8xf32>
    %83 = vector.extract_strided_slice %32 {offsets = [0, 48], sizes = [8, 8], strides = [1, 1]} : vector<8x96xf32> to vector<8x8xf32>
    %84 = vector.extract_strided_slice %32 {offsets = [0, 80], sizes = [8, 8], strides = [1, 1]} : vector<8x96xf32> to vector<8x8xf32>
    %85 = tpu.transpose %83, [1, 0] : vector<8x8xf32> -> vector<8x8xf32>
    %cst_36 = arith.constant dense<0.000000e+00> : vector<8x8xf32>
    %86 = tpu.matmul %82, %85, %cst_36 {dimension_numbers = #tpu.dot_dimension_numbers<[1], [0], [0], [1], [0, 0, 1, 1], [], []>} : vector<8x8xf32>, vector<8x8xf32>, vector<8x8xf32> -> vector<8x8xf32>
    %cst_37 = arith.constant 0.353553385 : f32
    %87 = vector.broadcast %cst_37 : f32 to vector<8x8xf32>
    %88 = arith.mulf %86, %87 : vector<8x8xf32>
    %89 = vector.broadcast %3 : vector<1x8xf32> to vector<8x8xf32>
    %90 = arith.addf %88, %89 : vector<8x8xf32>
    %cst_38 = arith.constant dense<0xFF800000> : vector<8xf32>
    %91 = vector.multi_reduction <maximumf>, %90, %cst_38 [1] : vector<8x8xf32> to vector<8xf32>
    %92 = vector.shape_cast %91 : vector<8xf32> to vector<8x1xf32>
    %93 = vector.broadcast %92 : vector<8x1xf32> to vector<8x8xf32>
    %94 = arith.subf %90, %93 : vector<8x8xf32>
    %95 = math.exp %94 : vector<8x8xf32>
    %cst_39 = arith.constant dense<0.000000e+00> : vector<8xf32>
    %96 = vector.multi_reduction <add>, %95, %cst_39 [1] : vector<8x8xf32> to vector<8xf32>
    %97 = vector.shape_cast %96 : vector<8xf32> to vector<8x1xf32>
    %98 = tpu.reciprocal %97 {approx = true} : vector<8x1xf32> -> vector<8x1xf32>
    %99 = vector.broadcast %98 : vector<8x1xf32> to vector<8x8xf32>
    %100 = arith.mulf %95, %99 : vector<8x8xf32>
    %cst_40 = arith.constant dense<0.000000e+00> : vector<8x8xf32>
    %101 = tpu.matmul %100, %84, %cst_40 {dimension_numbers = #tpu.dot_dimension_numbers<[1], [0], [0], [1], [0, 0, 1, 1], [], []>} : vector<8x8xf32>, vector<8x8xf32>, vector<8x8xf32> -> vector<8x8xf32>
    %102 = vector.extract_strided_slice %34 {offsets = [16, 0], sizes = [8, 32], strides = [1, 1]} : vector<32x32xf32> to vector<8x32xf32>
    %cst_41 = arith.constant dense<0.000000e+00> : vector<8x32xf32>
    %103 = tpu.matmul %101, %102, %cst_41 {dimension_numbers = #tpu.dot_dimension_numbers<[1], [0], [0], [1], [0, 0, 1, 1], [], []>} : vector<8x8xf32>, vector<8x32xf32>, vector<8x32xf32> -> vector<8x32xf32>
    %104 = arith.addf %81, %103 : vector<8x32xf32>
    %105 = vector.extract_strided_slice %32 {offsets = [0, 24], sizes = [8, 8], strides = [1, 1]} : vector<8x96xf32> to vector<8x8xf32>
    %106 = vector.extract_strided_slice %32 {offsets = [0, 56], sizes = [8, 8], strides = [1, 1]} : vector<8x96xf32> to vector<8x8xf32>
    %107 = vector.extract_strided_slice %32 {offsets = [0, 88], sizes = [8, 8], strides = [1, 1]} : vector<8x96xf32> to vector<8x8xf32>
    %108 = tpu.transpose %106, [1, 0] : vector<8x8xf32> -> vector<8x8xf32>
    %cst_42 = arith.constant dense<0.000000e+00> : vector<8x8xf32>
    %109 = tpu.matmul %105, %108, %cst_42 {dimension_numbers = #tpu.dot_dimension_numbers<[1], [0], [0], [1], [0, 0, 1, 1], [], []>} : vector<8x8xf32>, vector<8x8xf32>, vector<8x8xf32> -> vector<8x8xf32>
    %cst_43 = arith.constant 0.353553385 : f32
    %110 = vector.broadcast %cst_43 : f32 to vector<8x8xf32>
    %111 = arith.mulf %109, %110 : vector<8x8xf32>
    %112 = vector.broadcast %3 : vector<1x8xf32> to vector<8x8xf32>
    %113 = arith.addf %111, %112 : vector<8x8xf32>
    %cst_44 = arith.constant dense<0xFF800000> : vector<8xf32>
    %114 = vector.multi_reduction <maximumf>, %113, %cst_44 [1] : vector<8x8xf32> to vector<8xf32>
    %115 = vector.shape_cast %114 : vector<8xf32> to vector<8x1xf32>
    %116 = vector.broadcast %115 : vector<8x1xf32> to vector<8x8xf32>
    %117 = arith.subf %113, %116 : vector<8x8xf32>
    %118 = math.exp %117 : vector<8x8xf32>
    %cst_45 = arith.constant dense<0.000000e+00> : vector<8xf32>
    %119 = vector.multi_reduction <add>, %118, %cst_45 [1] : vector<8x8xf32> to vector<8xf32>
    %120 = vector.shape_cast %119 : vector<8xf32> to vector<8x1xf32>
    %121 = tpu.reciprocal %120 {approx = true} : vector<8x1xf32> -> vector<8x1xf32>
    %122 = vector.broadcast %121 : vector<8x1xf32> to vector<8x8xf32>
    %123 = arith.mulf %118, %122 : vector<8x8xf32>
    %cst_46 = arith.constant dense<0.000000e+00> : vector<8x8xf32>
    %124 = tpu.matmul %123, %107, %cst_46 {dimension_numbers = #tpu.dot_dimension_numbers<[1], [0], [0], [1], [0, 0, 1, 1], [], []>} : vector<8x8xf32>, vector<8x8xf32>, vector<8x8xf32> -> vector<8x8xf32>
    %125 = vector.extract_strided_slice %34 {offsets = [24, 0], sizes = [8, 32], strides = [1, 1]} : vector<32x32xf32> to vector<8x32xf32>
    %cst_47 = arith.constant dense<0.000000e+00> : vector<8x32xf32>
    %126 = tpu.matmul %124, %125, %cst_47 {dimension_numbers = #tpu.dot_dimension_numbers<[1], [0], [0], [1], [0, 0, 1, 1], [], []>} : vector<8x8xf32>, vector<8x32xf32>, vector<8x32xf32> -> vector<8x32xf32>
    %127 = arith.addf %104, %126 : vector<8x32xf32>
    %c0_48 = arith.constant 0 : index
    %c0_49 = arith.constant 0 : index
    %c0_50 = arith.constant 0 : index
    %128 = vector.load %arg8[%c0_48, %c0_49, %c0_50] : memref<2x1x32xf32, #tpu.memory_space<vmem>>, vector<1x1x32xf32>
    %129 = vector.shape_cast %128 : vector<1x1x32xf32> to vector<1x32xf32>
    %130 = vector.broadcast %129 : vector<1x32xf32> to vector<8x32xf32>
    %131 = arith.addf %127, %130 : vector<8x32xf32>
    %132 = arith.addf %131, %25 : vector<8x32xf32>
    %c0_51 = arith.constant 0 : index
    %c0_52 = arith.constant 0 : index
    %c0_53 = arith.constant 0 : index
    %133 = vector.load %arg9[%c0_51, %c0_52, %c0_53] : memref<2x1x32xf32, #tpu.memory_space<vmem>>, vector<1x1x32xf32>
    %134 = vector.shape_cast %133 : vector<1x1x32xf32> to vector<1x32xf32>
    %c0_54 = arith.constant 0 : index
    %c0_55 = arith.constant 0 : index
    %c0_56 = arith.constant 0 : index
    %135 = vector.load %arg10[%c0_54, %c0_55, %c0_56] : memref<2x1x32xf32, #tpu.memory_space<vmem>>, vector<1x1x32xf32>
    %136 = vector.shape_cast %135 : vector<1x1x32xf32> to vector<1x32xf32>
    %cst_57 = arith.constant dense<0.000000e+00> : vector<8xf32>
    %137 = vector.multi_reduction <add>, %132, %cst_57 [1] : vector<8x32xf32> to vector<8xf32>
    %138 = vector.shape_cast %137 : vector<8xf32> to vector<8x1xf32>
    %cst_58 = arith.constant 3.200000e+01 : f32
    %139 = vector.broadcast %cst_58 : f32 to vector<8x1xf32>
    %140 = arith.divf %138, %139 : vector<8x1xf32>
    %141 = vector.broadcast %140 : vector<8x1xf32> to vector<8x32xf32>
    %142 = arith.subf %132, %141 : vector<8x32xf32>
    %143 = arith.mulf %142, %142 : vector<8x32xf32>
    %cst_59 = arith.constant dense<0.000000e+00> : vector<8xf32>
    %144 = vector.multi_reduction <add>, %143, %cst_59 [1] : vector<8x32xf32> to vector<8xf32>
    %145 = vector.shape_cast %144 : vector<8xf32> to vector<8x1xf32>
    %cst_60 = arith.constant 3.200000e+01 : f32
    %146 = vector.broadcast %cst_60 : f32 to vector<8x1xf32>
    %147 = arith.divf %145, %146 : vector<8x1xf32>
    %cst_61 = arith.constant 9.99999996E-13 : f32
    %148 = vector.broadcast %cst_61 : f32 to vector<8x1xf32>
    %149 = arith.addf %147, %148 : vector<8x1xf32>
    %150 = math.rsqrt %149 : vector<8x1xf32>
    %151 = vector.broadcast %150 : vector<8x1xf32> to vector<8x32xf32>
    %152 = arith.mulf %142, %151 : vector<8x32xf32>
    %153 = vector.broadcast %134 : vector<1x32xf32> to vector<8x32xf32>
    %154 = arith.mulf %152, %153 : vector<8x32xf32>
    %155 = vector.broadcast %136 : vector<1x32xf32> to vector<8x32xf32>
    %156 = arith.addf %154, %155 : vector<8x32xf32>
    %c0_62 = arith.constant 0 : index
    %c0_63 = arith.constant 0 : index
    %c0_64 = arith.constant 0 : index
    %157 = vector.load %arg11[%c0_62, %c0_63, %c0_64] : memref<2x32x64xf32, #tpu.memory_space<vmem>>, vector<1x32x64xf32>
    %158 = vector.shape_cast %157 : vector<1x32x64xf32> to vector<32x64xf32>
    %cst_65 = arith.constant dense<0.000000e+00> : vector<8x64xf32>
    %159 = tpu.matmul %156, %158, %cst_65 {dimension_numbers = #tpu.dot_dimension_numbers<[1], [0], [0], [1], [0, 0, 1, 1], [], []>} : vector<8x32xf32>, vector<32x64xf32>, vector<8x64xf32> -> vector<8x64xf32>
    %c0_66 = arith.constant 0 : index
    %c0_67 = arith.constant 0 : index
    %c0_68 = arith.constant 0 : index
    %160 = vector.load %arg12[%c0_66, %c0_67, %c0_68] : memref<2x1x64xf32, #tpu.memory_space<vmem>>, vector<1x1x64xf32>
    %161 = vector.shape_cast %160 : vector<1x1x64xf32> to vector<1x64xf32>
    %162 = vector.broadcast %161 : vector<1x64xf32> to vector<8x64xf32>
    %163 = arith.addf %159, %162 : vector<8x64xf32>
    %cst_69 = arith.constant 5.000000e-01 : f32
    %164 = vector.broadcast %cst_69 : f32 to vector<8x64xf32>
    %165 = arith.mulf %164, %163 : vector<8x64xf32>
    %cst_70 = arith.constant 0.707106769 : f32
    %166 = vector.broadcast %cst_70 : f32 to vector<8x64xf32>
    %167 = arith.mulf %163, %166 : vector<8x64xf32>
    %cst_71 = arith.constant 0.000000e+00 : f32
    %168 = vector.broadcast %cst_71 : f32 to vector<8x64xf32>
    %169 = arith.cmpf oge, %167, %168 : vector<8x64xf32>
    %cst_72 = arith.constant 1.000000e+00 : f32
    %cst_73 = arith.constant -1.000000e+00 : f32
    %170 = vector.broadcast %cst_72 : f32 to vector<8x64xf32>
    %171 = vector.broadcast %cst_73 : f32 to vector<8x64xf32>
    %172 = arith.select %169, %170, %171 : vector<8x64xi1>, vector<8x64xf32>
    %173 = math.absf %167 : vector<8x64xf32>
    %cst_74 = arith.constant 0.327591091 : f32
    %174 = vector.broadcast %cst_74 : f32 to vector<8x64xf32>
    %175 = arith.mulf %174, %173 : vector<8x64xf32>
    %cst_75 = arith.constant 1.000000e+00 : f32
    %176 = vector.broadcast %cst_75 : f32 to vector<8x64xf32>
    %177 = arith.addf %176, %175 : vector<8x64xf32>
    %cst_76 = arith.constant 1.000000e+00 : f32
    %178 = vector.broadcast %cst_76 : f32 to vector<8x64xf32>
    %179 = arith.divf %178, %177 : vector<8x64xf32>
    %cst_77 = arith.constant 1.06140542 : f32
    %180 = vector.broadcast %cst_77 : f32 to vector<8x64xf32>
    %181 = arith.mulf %180, %179 : vector<8x64xf32>
    %cst_78 = arith.constant -1.45315206 : f32
    %182 = vector.broadcast %cst_78 : f32 to vector<8x64xf32>
    %183 = arith.addf %181, %182 : vector<8x64xf32>
    %184 = arith.mulf %183, %179 : vector<8x64xf32>
    %cst_79 = arith.constant 1.42141378 : f32
    %185 = vector.broadcast %cst_79 : f32 to vector<8x64xf32>
    %186 = arith.addf %184, %185 : vector<8x64xf32>
    %187 = arith.mulf %186, %179 : vector<8x64xf32>
    %cst_80 = arith.constant -0.284496725 : f32
    %188 = vector.broadcast %cst_80 : f32 to vector<8x64xf32>
    %189 = arith.addf %187, %188 : vector<8x64xf32>
    %190 = arith.mulf %189, %179 : vector<8x64xf32>
    %cst_81 = arith.constant 0.254829586 : f32
    %191 = vector.broadcast %cst_81 : f32 to vector<8x64xf32>
    %192 = arith.addf %190, %191 : vector<8x64xf32>
    %193 = arith.mulf %192, %179 : vector<8x64xf32>
    %cst_82 = arith.constant 0.000000e+00 : f32
    %194 = vector.broadcast %cst_82 : f32 to vector<8x64xf32>
    %195 = arith.subf %194, %173 : vector<8x64xf32>
    %196 = arith.mulf %195, %173 : vector<8x64xf32>
    %197 = math.exp %196 : vector<8x64xf32>
    %198 = arith.mulf %193, %197 : vector<8x64xf32>
    %cst_83 = arith.constant 1.000000e+00 : f32
    %199 = vector.broadcast %cst_83 : f32 to vector<8x64xf32>
    %200 = arith.subf %199, %198 : vector<8x64xf32>
    %201 = arith.mulf %172, %200 : vector<8x64xf32>
    %cst_84 = arith.constant 1.000000e+00 : f32
    %202 = vector.broadcast %cst_84 : f32 to vector<8x64xf32>
    %203 = arith.addf %202, %201 : vector<8x64xf32>
    %204 = arith.mulf %165, %203 : vector<8x64xf32>
    %c0_85 = arith.constant 0 : index
    %c0_86 = arith.constant 0 : index
    %c0_87 = arith.constant 0 : index
    %205 = vector.load %arg13[%c0_85, %c0_86, %c0_87] : memref<2x64x32xf32, #tpu.memory_space<vmem>>, vector<1x64x32xf32>
    %206 = vector.shape_cast %205 : vector<1x64x32xf32> to vector<64x32xf32>
    %cst_88 = arith.constant dense<0.000000e+00> : vector<8x32xf32>
    %207 = tpu.matmul %204, %206, %cst_88 {dimension_numbers = #tpu.dot_dimension_numbers<[1], [0], [0], [1], [0, 0, 1, 1], [], []>} : vector<8x64xf32>, vector<64x32xf32>, vector<8x32xf32> -> vector<8x32xf32>
    %c0_89 = arith.constant 0 : index
    %c0_90 = arith.constant 0 : index
    %c0_91 = arith.constant 0 : index
    %208 = vector.load %arg14[%c0_89, %c0_90, %c0_91] : memref<2x1x32xf32, #tpu.memory_space<vmem>>, vector<1x1x32xf32>
    %209 = vector.shape_cast %208 : vector<1x1x32xf32> to vector<1x32xf32>
    %210 = vector.broadcast %209 : vector<1x32xf32> to vector<8x32xf32>
    %211 = arith.addf %207, %210 : vector<8x32xf32>
    %212 = arith.addf %211, %156 : vector<8x32xf32>
    %c0_92 = arith.constant 0 : index
    %c0_93 = arith.constant 0 : index
    %c0_94 = arith.constant 0 : index
    %213 = vector.load %arg15[%c0_92, %c0_93, %c0_94] : memref<2x1x32xf32, #tpu.memory_space<vmem>>, vector<1x1x32xf32>
    %214 = vector.shape_cast %213 : vector<1x1x32xf32> to vector<1x32xf32>
    %c0_95 = arith.constant 0 : index
    %c0_96 = arith.constant 0 : index
    %c0_97 = arith.constant 0 : index
    %215 = vector.load %arg16[%c0_95, %c0_96, %c0_97] : memref<2x1x32xf32, #tpu.memory_space<vmem>>, vector<1x1x32xf32>
    %216 = vector.shape_cast %215 : vector<1x1x32xf32> to vector<1x32xf32>
    %cst_98 = arith.constant dense<0.000000e+00> : vector<8xf32>
    %217 = vector.multi_reduction <add>, %212, %cst_98 [1] : vector<8x32xf32> to vector<8xf32>
    %218 = vector.shape_cast %217 : vector<8xf32> to vector<8x1xf32>
    %cst_99 = arith.constant 3.200000e+01 : f32
    %219 = vector.broadcast %cst_99 : f32 to vector<8x1xf32>
    %220 = arith.divf %218, %219 : vector<8x1xf32>
    %221 = vector.broadcast %220 : vector<8x1xf32> to vector<8x32xf32>
    %222 = arith.subf %212, %221 : vector<8x32xf32>
    %223 = arith.mulf %222, %222 : vector<8x32xf32>
    %cst_100 = arith.constant dense<0.000000e+00> : vector<8xf32>
    %224 = vector.multi_reduction <add>, %223, %cst_100 [1] : vector<8x32xf32> to vector<8xf32>
    %225 = vector.shape_cast %224 : vector<8xf32> to vector<8x1xf32>
    %cst_101 = arith.constant 3.200000e+01 : f32
    %226 = vector.broadcast %cst_101 : f32 to vector<8x1xf32>
    %227 = arith.divf %225, %226 : vector<8x1xf32>
    %cst_102 = arith.constant 9.99999996E-13 : f32
    %228 = vector.broadcast %cst_102 : f32 to vector<8x1xf32>
    %229 = arith.addf %227, %228 : vector<8x1xf32>
    %230 = math.rsqrt %229 : vector<8x1xf32>
    %231 = vector.broadcast %230 : vector<8x1xf32> to vector<8x32xf32>
    %232 = arith.mulf %222, %231 : vector<8x32xf32>
    %233 = vector.broadcast %214 : vector<1x32xf32> to vector<8x32xf32>
    %234 = arith.mulf %232, %233 : vector<8x32xf32>
    %235 = vector.broadcast %216 : vector<1x32xf32> to vector<8x32xf32>
    %236 = arith.addf %234, %235 : vector<8x32xf32>
    %c1 = arith.constant 1 : index
    %c0_103 = arith.constant 0 : index
    %c0_104 = arith.constant 0 : index
    %237 = vector.load %arg5[%c1, %c0_103, %c0_104] : memref<2x32x96xf32, #tpu.memory_space<vmem>>, vector<1x32x96xf32>
    %238 = vector.shape_cast %237 : vector<1x32x96xf32> to vector<32x96xf32>
    %cst_105 = arith.constant dense<0.000000e+00> : vector<8x96xf32>
    %239 = tpu.matmul %236, %238, %cst_105 {dimension_numbers = #tpu.dot_dimension_numbers<[1], [0], [0], [1], [0, 0, 1, 1], [], []>} : vector<8x32xf32>, vector<32x96xf32>, vector<8x96xf32> -> vector<8x96xf32>
    %c1_106 = arith.constant 1 : index
    %c0_107 = arith.constant 0 : index
    %c0_108 = arith.constant 0 : index
    %240 = vector.load %arg6[%c1_106, %c0_107, %c0_108] : memref<2x1x96xf32, #tpu.memory_space<vmem>>, vector<1x1x96xf32>
    %241 = vector.shape_cast %240 : vector<1x1x96xf32> to vector<1x96xf32>
    %242 = vector.broadcast %241 : vector<1x96xf32> to vector<8x96xf32>
    %243 = arith.addf %239, %242 : vector<8x96xf32>
    %c1_109 = arith.constant 1 : index
    %c0_110 = arith.constant 0 : index
    %c0_111 = arith.constant 0 : index
    %244 = vector.load %arg7[%c1_109, %c0_110, %c0_111] : memref<2x32x32xf32, #tpu.memory_space<vmem>>, vector<1x32x32xf32>
    %245 = vector.shape_cast %244 : vector<1x32x32xf32> to vector<32x32xf32>
    %cst_112 = arith.constant 0.000000e+00 : f32
    %246 = vector.broadcast %cst_112 : f32 to vector<8x32xf32>
    %247 = vector.extract_strided_slice %243 {offsets = [0, 0], sizes = [8, 8], strides = [1, 1]} : vector<8x96xf32> to vector<8x8xf32>
    %248 = vector.extract_strided_slice %243 {offsets = [0, 32], sizes = [8, 8], strides = [1, 1]} : vector<8x96xf32> to vector<8x8xf32>
    %249 = vector.extract_strided_slice %243 {offsets = [0, 64], sizes = [8, 8], strides = [1, 1]} : vector<8x96xf32> to vector<8x8xf32>
    %250 = tpu.transpose %248, [1, 0] : vector<8x8xf32> -> vector<8x8xf32>
    %cst_113 = arith.constant dense<0.000000e+00> : vector<8x8xf32>
    %251 = tpu.matmul %247, %250, %cst_113 {dimension_numbers = #tpu.dot_dimension_numbers<[1], [0], [0], [1], [0, 0, 1, 1], [], []>} : vector<8x8xf32>, vector<8x8xf32>, vector<8x8xf32> -> vector<8x8xf32>
    %cst_114 = arith.constant 0.353553385 : f32
    %252 = vector.broadcast %cst_114 : f32 to vector<8x8xf32>
    %253 = arith.mulf %251, %252 : vector<8x8xf32>
    %254 = vector.broadcast %3 : vector<1x8xf32> to vector<8x8xf32>
    %255 = arith.addf %253, %254 : vector<8x8xf32>
    %cst_115 = arith.constant dense<0xFF800000> : vector<8xf32>
    %256 = vector.multi_reduction <maximumf>, %255, %cst_115 [1] : vector<8x8xf32> to vector<8xf32>
    %257 = vector.shape_cast %256 : vector<8xf32> to vector<8x1xf32>
    %258 = vector.broadcast %257 : vector<8x1xf32> to vector<8x8xf32>
    %259 = arith.subf %255, %258 : vector<8x8xf32>
    %260 = math.exp %259 : vector<8x8xf32>
    %cst_116 = arith.constant dense<0.000000e+00> : vector<8xf32>
    %261 = vector.multi_reduction <add>, %260, %cst_116 [1] : vector<8x8xf32> to vector<8xf32>
    %262 = vector.shape_cast %261 : vector<8xf32> to vector<8x1xf32>
    %263 = tpu.reciprocal %262 {approx = true} : vector<8x1xf32> -> vector<8x1xf32>
    %264 = vector.broadcast %263 : vector<8x1xf32> to vector<8x8xf32>
    %265 = arith.mulf %260, %264 : vector<8x8xf32>
    %cst_117 = arith.constant dense<0.000000e+00> : vector<8x8xf32>
    %266 = tpu.matmul %265, %249, %cst_117 {dimension_numbers = #tpu.dot_dimension_numbers<[1], [0], [0], [1], [0, 0, 1, 1], [], []>} : vector<8x8xf32>, vector<8x8xf32>, vector<8x8xf32> -> vector<8x8xf32>
    %267 = vector.extract_strided_slice %245 {offsets = [0, 0], sizes = [8, 32], strides = [1, 1]} : vector<32x32xf32> to vector<8x32xf32>
    %cst_118 = arith.constant dense<0.000000e+00> : vector<8x32xf32>
    %268 = tpu.matmul %266, %267, %cst_118 {dimension_numbers = #tpu.dot_dimension_numbers<[1], [0], [0], [1], [0, 0, 1, 1], [], []>} : vector<8x8xf32>, vector<8x32xf32>, vector<8x32xf32> -> vector<8x32xf32>
    %269 = arith.addf %246, %268 : vector<8x32xf32>
    %270 = vector.extract_strided_slice %243 {offsets = [0, 8], sizes = [8, 8], strides = [1, 1]} : vector<8x96xf32> to vector<8x8xf32>
    %271 = vector.extract_strided_slice %243 {offsets = [0, 40], sizes = [8, 8], strides = [1, 1]} : vector<8x96xf32> to vector<8x8xf32>
    %272 = vector.extract_strided_slice %243 {offsets = [0, 72], sizes = [8, 8], strides = [1, 1]} : vector<8x96xf32> to vector<8x8xf32>
    %273 = tpu.transpose %271, [1, 0] : vector<8x8xf32> -> vector<8x8xf32>
    %cst_119 = arith.constant dense<0.000000e+00> : vector<8x8xf32>
    %274 = tpu.matmul %270, %273, %cst_119 {dimension_numbers = #tpu.dot_dimension_numbers<[1], [0], [0], [1], [0, 0, 1, 1], [], []>} : vector<8x8xf32>, vector<8x8xf32>, vector<8x8xf32> -> vector<8x8xf32>
    %cst_120 = arith.constant 0.353553385 : f32
    %275 = vector.broadcast %cst_120 : f32 to vector<8x8xf32>
    %276 = arith.mulf %274, %275 : vector<8x8xf32>
    %277 = vector.broadcast %3 : vector<1x8xf32> to vector<8x8xf32>
    %278 = arith.addf %276, %277 : vector<8x8xf32>
    %cst_121 = arith.constant dense<0xFF800000> : vector<8xf32>
    %279 = vector.multi_reduction <maximumf>, %278, %cst_121 [1] : vector<8x8xf32> to vector<8xf32>
    %280 = vector.shape_cast %279 : vector<8xf32> to vector<8x1xf32>
    %281 = vector.broadcast %280 : vector<8x1xf32> to vector<8x8xf32>
    %282 = arith.subf %278, %281 : vector<8x8xf32>
    %283 = math.exp %282 : vector<8x8xf32>
    %cst_122 = arith.constant dense<0.000000e+00> : vector<8xf32>
    %284 = vector.multi_reduction <add>, %283, %cst_122 [1] : vector<8x8xf32> to vector<8xf32>
    %285 = vector.shape_cast %284 : vector<8xf32> to vector<8x1xf32>
    %286 = tpu.reciprocal %285 {approx = true} : vector<8x1xf32> -> vector<8x1xf32>
    %287 = vector.broadcast %286 : vector<8x1xf32> to vector<8x8xf32>
    %288 = arith.mulf %283, %287 : vector<8x8xf32>
    %cst_123 = arith.constant dense<0.000000e+00> : vector<8x8xf32>
    %289 = tpu.matmul %288, %272, %cst_123 {dimension_numbers = #tpu.dot_dimension_numbers<[1], [0], [0], [1], [0, 0, 1, 1], [], []>} : vector<8x8xf32>, vector<8x8xf32>, vector<8x8xf32> -> vector<8x8xf32>
    %290 = vector.extract_strided_slice %245 {offsets = [8, 0], sizes = [8, 32], strides = [1, 1]} : vector<32x32xf32> to vector<8x32xf32>
    %cst_124 = arith.constant dense<0.000000e+00> : vector<8x32xf32>
    %291 = tpu.matmul %289, %290, %cst_124 {dimension_numbers = #tpu.dot_dimension_numbers<[1], [0], [0], [1], [0, 0, 1, 1], [], []>} : vector<8x8xf32>, vector<8x32xf32>, vector<8x32xf32> -> vector<8x32xf32>
    %292 = arith.addf %269, %291 : vector<8x32xf32>
    %293 = vector.extract_strided_slice %243 {offsets = [0, 16], sizes = [8, 8], strides = [1, 1]} : vector<8x96xf32> to vector<8x8xf32>
    %294 = vector.extract_strided_slice %243 {offsets = [0, 48], sizes = [8, 8], strides = [1, 1]} : vector<8x96xf32> to vector<8x8xf32>
    %295 = vector.extract_strided_slice %243 {offsets = [0, 80], sizes = [8, 8], strides = [1, 1]} : vector<8x96xf32> to vector<8x8xf32>
    %296 = tpu.transpose %294, [1, 0] : vector<8x8xf32> -> vector<8x8xf32>
    %cst_125 = arith.constant dense<0.000000e+00> : vector<8x8xf32>
    %297 = tpu.matmul %293, %296, %cst_125 {dimension_numbers = #tpu.dot_dimension_numbers<[1], [0], [0], [1], [0, 0, 1, 1], [], []>} : vector<8x8xf32>, vector<8x8xf32>, vector<8x8xf32> -> vector<8x8xf32>
    %cst_126 = arith.constant 0.353553385 : f32
    %298 = vector.broadcast %cst_126 : f32 to vector<8x8xf32>
    %299 = arith.mulf %297, %298 : vector<8x8xf32>
    %300 = vector.broadcast %3 : vector<1x8xf32> to vector<8x8xf32>
    %301 = arith.addf %299, %300 : vector<8x8xf32>
    %cst_127 = arith.constant dense<0xFF800000> : vector<8xf32>
    %302 = vector.multi_reduction <maximumf>, %301, %cst_127 [1] : vector<8x8xf32> to vector<8xf32>
    %303 = vector.shape_cast %302 : vector<8xf32> to vector<8x1xf32>
    %304 = vector.broadcast %303 : vector<8x1xf32> to vector<8x8xf32>
    %305 = arith.subf %301, %304 : vector<8x8xf32>
    %306 = math.exp %305 : vector<8x8xf32>
    %cst_128 = arith.constant dense<0.000000e+00> : vector<8xf32>
    %307 = vector.multi_reduction <add>, %306, %cst_128 [1] : vector<8x8xf32> to vector<8xf32>
    %308 = vector.shape_cast %307 : vector<8xf32> to vector<8x1xf32>
    %309 = tpu.reciprocal %308 {approx = true} : vector<8x1xf32> -> vector<8x1xf32>
    %310 = vector.broadcast %309 : vector<8x1xf32> to vector<8x8xf32>
    %311 = arith.mulf %306, %310 : vector<8x8xf32>
    %cst_129 = arith.constant dense<0.000000e+00> : vector<8x8xf32>
    %312 = tpu.matmul %311, %295, %cst_129 {dimension_numbers = #tpu.dot_dimension_numbers<[1], [0], [0], [1], [0, 0, 1, 1], [], []>} : vector<8x8xf32>, vector<8x8xf32>, vector<8x8xf32> -> vector<8x8xf32>
    %313 = vector.extract_strided_slice %245 {offsets = [16, 0], sizes = [8, 32], strides = [1, 1]} : vector<32x32xf32> to vector<8x32xf32>
    %cst_130 = arith.constant dense<0.000000e+00> : vector<8x32xf32>
    %314 = tpu.matmul %312, %313, %cst_130 {dimension_numbers = #tpu.dot_dimension_numbers<[1], [0], [0], [1], [0, 0, 1, 1], [], []>} : vector<8x8xf32>, vector<8x32xf32>, vector<8x32xf32> -> vector<8x32xf32>
    %315 = arith.addf %292, %314 : vector<8x32xf32>
    %316 = vector.extract_strided_slice %243 {offsets = [0, 24], sizes = [8, 8], strides = [1, 1]} : vector<8x96xf32> to vector<8x8xf32>
    %317 = vector.extract_strided_slice %243 {offsets = [0, 56], sizes = [8, 8], strides = [1, 1]} : vector<8x96xf32> to vector<8x8xf32>
    %318 = vector.extract_strided_slice %243 {offsets = [0, 88], sizes = [8, 8], strides = [1, 1]} : vector<8x96xf32> to vector<8x8xf32>
    %319 = tpu.transpose %317, [1, 0] : vector<8x8xf32> -> vector<8x8xf32>
    %cst_131 = arith.constant dense<0.000000e+00> : vector<8x8xf32>
    %320 = tpu.matmul %316, %319, %cst_131 {dimension_numbers = #tpu.dot_dimension_numbers<[1], [0], [0], [1], [0, 0, 1, 1], [], []>} : vector<8x8xf32>, vector<8x8xf32>, vector<8x8xf32> -> vector<8x8xf32>
    %cst_132 = arith.constant 0.353553385 : f32
    %321 = vector.broadcast %cst_132 : f32 to vector<8x8xf32>
    %322 = arith.mulf %320, %321 : vector<8x8xf32>
    %323 = vector.broadcast %3 : vector<1x8xf32> to vector<8x8xf32>
    %324 = arith.addf %322, %323 : vector<8x8xf32>
    %cst_133 = arith.constant dense<0xFF800000> : vector<8xf32>
    %325 = vector.multi_reduction <maximumf>, %324, %cst_133 [1] : vector<8x8xf32> to vector<8xf32>
    %326 = vector.shape_cast %325 : vector<8xf32> to vector<8x1xf32>
    %327 = vector.broadcast %326 : vector<8x1xf32> to vector<8x8xf32>
    %328 = arith.subf %324, %327 : vector<8x8xf32>
    %329 = math.exp %328 : vector<8x8xf32>
    %cst_134 = arith.constant dense<0.000000e+00> : vector<8xf32>
    %330 = vector.multi_reduction <add>, %329, %cst_134 [1] : vector<8x8xf32> to vector<8xf32>
    %331 = vector.shape_cast %330 : vector<8xf32> to vector<8x1xf32>
    %332 = tpu.reciprocal %331 {approx = true} : vector<8x1xf32> -> vector<8x1xf32>
    %333 = vector.broadcast %332 : vector<8x1xf32> to vector<8x8xf32>
    %334 = arith.mulf %329, %333 : vector<8x8xf32>
    %cst_135 = arith.constant dense<0.000000e+00> : vector<8x8xf32>
    %335 = tpu.matmul %334, %318, %cst_135 {dimension_numbers = #tpu.dot_dimension_numbers<[1], [0], [0], [1], [0, 0, 1, 1], [], []>} : vector<8x8xf32>, vector<8x8xf32>, vector<8x8xf32> -> vector<8x8xf32>
    %336 = vector.extract_strided_slice %245 {offsets = [24, 0], sizes = [8, 32], strides = [1, 1]} : vector<32x32xf32> to vector<8x32xf32>
    %cst_136 = arith.constant dense<0.000000e+00> : vector<8x32xf32>
    %337 = tpu.matmul %335, %336, %cst_136 {dimension_numbers = #tpu.dot_dimension_numbers<[1], [0], [0], [1], [0, 0, 1, 1], [], []>} : vector<8x8xf32>, vector<8x32xf32>, vector<8x32xf32> -> vector<8x32xf32>
    %338 = arith.addf %315, %337 : vector<8x32xf32>
    %c1_137 = arith.constant 1 : index
    %c0_138 = arith.constant 0 : index
    %c0_139 = arith.constant 0 : index
    %339 = vector.load %arg8[%c1_137, %c0_138, %c0_139] : memref<2x1x32xf32, #tpu.memory_space<vmem>>, vector<1x1x32xf32>
    %340 = vector.shape_cast %339 : vector<1x1x32xf32> to vector<1x32xf32>
    %341 = vector.broadcast %340 : vector<1x32xf32> to vector<8x32xf32>
    %342 = arith.addf %338, %341 : vector<8x32xf32>
    %343 = arith.addf %342, %236 : vector<8x32xf32>
    %c1_140 = arith.constant 1 : index
    %c0_141 = arith.constant 0 : index
    %c0_142 = arith.constant 0 : index
    %344 = vector.load %arg9[%c1_140, %c0_141, %c0_142] : memref<2x1x32xf32, #tpu.memory_space<vmem>>, vector<1x1x32xf32>
    %345 = vector.shape_cast %344 : vector<1x1x32xf32> to vector<1x32xf32>
    %c1_143 = arith.constant 1 : index
    %c0_144 = arith.constant 0 : index
    %c0_145 = arith.constant 0 : index
    %346 = vector.load %arg10[%c1_143, %c0_144, %c0_145] : memref<2x1x32xf32, #tpu.memory_space<vmem>>, vector<1x1x32xf32>
    %347 = vector.shape_cast %346 : vector<1x1x32xf32> to vector<1x32xf32>
    %cst_146 = arith.constant dense<0.000000e+00> : vector<8xf32>
    %348 = vector.multi_reduction <add>, %343, %cst_146 [1] : vector<8x32xf32> to vector<8xf32>
    %349 = vector.shape_cast %348 : vector<8xf32> to vector<8x1xf32>
    %cst_147 = arith.constant 3.200000e+01 : f32
    %350 = vector.broadcast %cst_147 : f32 to vector<8x1xf32>
    %351 = arith.divf %349, %350 : vector<8x1xf32>
    %352 = vector.broadcast %351 : vector<8x1xf32> to vector<8x32xf32>
    %353 = arith.subf %343, %352 : vector<8x32xf32>
    %354 = arith.mulf %353, %353 : vector<8x32xf32>
    %cst_148 = arith.constant dense<0.000000e+00> : vector<8xf32>
    %355 = vector.multi_reduction <add>, %354, %cst_148 [1] : vector<8x32xf32> to vector<8xf32>
    %356 = vector.shape_cast %355 : vector<8xf32> to vector<8x1xf32>
    %cst_149 = arith.constant 3.200000e+01 : f32
    %357 = vector.broadcast %cst_149 : f32 to vector<8x1xf32>
    %358 = arith.divf %356, %357 : vector<8x1xf32>
    %cst_150 = arith.constant 9.99999996E-13 : f32
    %359 = vector.broadcast %cst_150 : f32 to vector<8x1xf32>
    %360 = arith.addf %358, %359 : vector<8x1xf32>
    %361 = math.rsqrt %360 : vector<8x1xf32>
    %362 = vector.broadcast %361 : vector<8x1xf32> to vector<8x32xf32>
    %363 = arith.mulf %353, %362 : vector<8x32xf32>
    %364 = vector.broadcast %345 : vector<1x32xf32> to vector<8x32xf32>
    %365 = arith.mulf %363, %364 : vector<8x32xf32>
    %366 = vector.broadcast %347 : vector<1x32xf32> to vector<8x32xf32>
    %367 = arith.addf %365, %366 : vector<8x32xf32>
    %c1_151 = arith.constant 1 : index
    %c0_152 = arith.constant 0 : index
    %c0_153 = arith.constant 0 : index
    %368 = vector.load %arg11[%c1_151, %c0_152, %c0_153] : memref<2x32x64xf32, #tpu.memory_space<vmem>>, vector<1x32x64xf32>
    %369 = vector.shape_cast %368 : vector<1x32x64xf32> to vector<32x64xf32>
    %cst_154 = arith.constant dense<0.000000e+00> : vector<8x64xf32>
    %370 = tpu.matmul %367, %369, %cst_154 {dimension_numbers = #tpu.dot_dimension_numbers<[1], [0], [0], [1], [0, 0, 1, 1], [], []>} : vector<8x32xf32>, vector<32x64xf32>, vector<8x64xf32> -> vector<8x64xf32>
    %c1_155 = arith.constant 1 : index
    %c0_156 = arith.constant 0 : index
    %c0_157 = arith.constant 0 : index
    %371 = vector.load %arg12[%c1_155, %c0_156, %c0_157] : memref<2x1x64xf32, #tpu.memory_space<vmem>>, vector<1x1x64xf32>
    %372 = vector.shape_cast %371 : vector<1x1x64xf32> to vector<1x64xf32>
    %373 = vector.broadcast %372 : vector<1x64xf32> to vector<8x64xf32>
    %374 = arith.addf %370, %373 : vector<8x64xf32>
    %cst_158 = arith.constant 5.000000e-01 : f32
    %375 = vector.broadcast %cst_158 : f32 to vector<8x64xf32>
    %376 = arith.mulf %375, %374 : vector<8x64xf32>
    %cst_159 = arith.constant 0.707106769 : f32
    %377 = vector.broadcast %cst_159 : f32 to vector<8x64xf32>
    %378 = arith.mulf %374, %377 : vector<8x64xf32>
    %cst_160 = arith.constant 0.000000e+00 : f32
    %379 = vector.broadcast %cst_160 : f32 to vector<8x64xf32>
    %380 = arith.cmpf oge, %378, %379 : vector<8x64xf32>
    %cst_161 = arith.constant 1.000000e+00 : f32
    %cst_162 = arith.constant -1.000000e+00 : f32
    %381 = vector.broadcast %cst_161 : f32 to vector<8x64xf32>
    %382 = vector.broadcast %cst_162 : f32 to vector<8x64xf32>
    %383 = arith.select %380, %381, %382 : vector<8x64xi1>, vector<8x64xf32>
    %384 = math.absf %378 : vector<8x64xf32>
    %cst_163 = arith.constant 0.327591091 : f32
    %385 = vector.broadcast %cst_163 : f32 to vector<8x64xf32>
    %386 = arith.mulf %385, %384 : vector<8x64xf32>
    %cst_164 = arith.constant 1.000000e+00 : f32
    %387 = vector.broadcast %cst_164 : f32 to vector<8x64xf32>
    %388 = arith.addf %387, %386 : vector<8x64xf32>
    %cst_165 = arith.constant 1.000000e+00 : f32
    %389 = vector.broadcast %cst_165 : f32 to vector<8x64xf32>
    %390 = arith.divf %389, %388 : vector<8x64xf32>
    %cst_166 = arith.constant 1.06140542 : f32
    %391 = vector.broadcast %cst_166 : f32 to vector<8x64xf32>
    %392 = arith.mulf %391, %390 : vector<8x64xf32>
    %cst_167 = arith.constant -1.45315206 : f32
    %393 = vector.broadcast %cst_167 : f32 to vector<8x64xf32>
    %394 = arith.addf %392, %393 : vector<8x64xf32>
    %395 = arith.mulf %394, %390 : vector<8x64xf32>
    %cst_168 = arith.constant 1.42141378 : f32
    %396 = vector.broadcast %cst_168 : f32 to vector<8x64xf32>
    %397 = arith.addf %395, %396 : vector<8x64xf32>
    %398 = arith.mulf %397, %390 : vector<8x64xf32>
    %cst_169 = arith.constant -0.284496725 : f32
    %399 = vector.broadcast %cst_169 : f32 to vector<8x64xf32>
    %400 = arith.addf %398, %399 : vector<8x64xf32>
    %401 = arith.mulf %400, %390 : vector<8x64xf32>
    %cst_170 = arith.constant 0.254829586 : f32
    %402 = vector.broadcast %cst_170 : f32 to vector<8x64xf32>
    %403 = arith.addf %401, %402 : vector<8x64xf32>
    %404 = arith.mulf %403, %390 : vector<8x64xf32>
    %cst_171 = arith.constant 0.000000e+00 : f32
    %405 = vector.broadcast %cst_171 : f32 to vector<8x64xf32>
    %406 = arith.subf %405, %384 : vector<8x64xf32>
    %407 = arith.mulf %406, %384 : vector<8x64xf32>
    %408 = math.exp %407 : vector<8x64xf32>
    %409 = arith.mulf %404, %408 : vector<8x64xf32>
    %cst_172 = arith.constant 1.000000e+00 : f32
    %410 = vector.broadcast %cst_172 : f32 to vector<8x64xf32>
    %411 = arith.subf %410, %409 : vector<8x64xf32>
    %412 = arith.mulf %383, %411 : vector<8x64xf32>
    %cst_173 = arith.constant 1.000000e+00 : f32
    %413 = vector.broadcast %cst_173 : f32 to vector<8x64xf32>
    %414 = arith.addf %413, %412 : vector<8x64xf32>
    %415 = arith.mulf %376, %414 : vector<8x64xf32>
    %c1_174 = arith.constant 1 : index
    %c0_175 = arith.constant 0 : index
    %c0_176 = arith.constant 0 : index
    %416 = vector.load %arg13[%c1_174, %c0_175, %c0_176] : memref<2x64x32xf32, #tpu.memory_space<vmem>>, vector<1x64x32xf32>
    %417 = vector.shape_cast %416 : vector<1x64x32xf32> to vector<64x32xf32>
    %cst_177 = arith.constant dense<0.000000e+00> : vector<8x32xf32>
    %418 = tpu.matmul %415, %417, %cst_177 {dimension_numbers = #tpu.dot_dimension_numbers<[1], [0], [0], [1], [0, 0, 1, 1], [], []>} : vector<8x64xf32>, vector<64x32xf32>, vector<8x32xf32> -> vector<8x32xf32>
    %c1_178 = arith.constant 1 : index
    %c0_179 = arith.constant 0 : index
    %c0_180 = arith.constant 0 : index
    %419 = vector.load %arg14[%c1_178, %c0_179, %c0_180] : memref<2x1x32xf32, #tpu.memory_space<vmem>>, vector<1x1x32xf32>
    %420 = vector.shape_cast %419 : vector<1x1x32xf32> to vector<1x32xf32>
    %421 = vector.broadcast %420 : vector<1x32xf32> to vector<8x32xf32>
    %422 = arith.addf %418, %421 : vector<8x32xf32>
    %423 = arith.addf %422, %367 : vector<8x32xf32>
    %c1_181 = arith.constant 1 : index
    %c0_182 = arith.constant 0 : index
    %c0_183 = arith.constant 0 : index
    %424 = vector.load %arg15[%c1_181, %c0_182, %c0_183] : memref<2x1x32xf32, #tpu.memory_space<vmem>>, vector<1x1x32xf32>
    %425 = vector.shape_cast %424 : vector<1x1x32xf32> to vector<1x32xf32>
    %c1_184 = arith.constant 1 : index
    %c0_185 = arith.constant 0 : index
    %c0_186 = arith.constant 0 : index
    %426 = vector.load %arg16[%c1_184, %c0_185, %c0_186] : memref<2x1x32xf32, #tpu.memory_space<vmem>>, vector<1x1x32xf32>
    %427 = vector.shape_cast %426 : vector<1x1x32xf32> to vector<1x32xf32>
    %cst_187 = arith.constant dense<0.000000e+00> : vector<8xf32>
    %428 = vector.multi_reduction <add>, %423, %cst_187 [1] : vector<8x32xf32> to vector<8xf32>
    %429 = vector.shape_cast %428 : vector<8xf32> to vector<8x1xf32>
    %cst_188 = arith.constant 3.200000e+01 : f32
    %430 = vector.broadcast %cst_188 : f32 to vector<8x1xf32>
    %431 = arith.divf %429, %430 : vector<8x1xf32>
    %432 = vector.broadcast %431 : vector<8x1xf32> to vector<8x32xf32>
    %433 = arith.subf %423, %432 : vector<8x32xf32>
    %434 = arith.mulf %433, %433 : vector<8x32xf32>
    %cst_189 = arith.constant dense<0.000000e+00> : vector<8xf32>
    %435 = vector.multi_reduction <add>, %434, %cst_189 [1] : vector<8x32xf32> to vector<8xf32>
    %436 = vector.shape_cast %435 : vector<8xf32> to vector<8x1xf32>
    %cst_190 = arith.constant 3.200000e+01 : f32
    %437 = vector.broadcast %cst_190 : f32 to vector<8x1xf32>
    %438 = arith.divf %436, %437 : vector<8x1xf32>
    %cst_191 = arith.constant 9.99999996E-13 : f32
    %439 = vector.broadcast %cst_191 : f32 to vector<8x1xf32>
    %440 = arith.addf %438, %439 : vector<8x1xf32>
    %441 = math.rsqrt %440 : vector<8x1xf32>
    %442 = vector.broadcast %441 : vector<8x1xf32> to vector<8x32xf32>
    %443 = arith.mulf %433, %442 : vector<8x32xf32>
    %444 = vector.broadcast %425 : vector<1x32xf32> to vector<8x32xf32>
    %445 = arith.mulf %443, %444 : vector<8x32xf32>
    %446 = vector.broadcast %427 : vector<1x32xf32> to vector<8x32xf32>
    %447 = arith.addf %445, %446 : vector<8x32xf32>
    %448 = vector.extract_strided_slice %447 {offsets = [0, 0], sizes = [1, 32], strides = [1, 1]} : vector<8x32xf32> to vector<1x32xf32>
    %c0_192 = arith.constant 0 : index
    %c0_193 = arith.constant 0 : index
    %449 = vector.load %arg17[%c0_192, %c0_193] : memref<32x32xf32, #tpu.memory_space<vmem>>, vector<32x32xf32>
    %cst_194 = arith.constant dense<0.000000e+00> : vector<1x32xf32>
    %450 = tpu.matmul %448, %449, %cst_194 {dimension_numbers = #tpu.dot_dimension_numbers<[1], [0], [0], [1], [0, 0, 1, 1], [], []>} : vector<1x32xf32>, vector<32x32xf32>, vector<1x32xf32> -> vector<1x32xf32>
    %c0_195 = arith.constant 0 : index
    %c0_196 = arith.constant 0 : index
    %451 = vector.load %arg18[%c0_195, %c0_196] : memref<1x32xf32, #tpu.memory_space<vmem>>, vector<1x32xf32>
    %452 = arith.addf %450, %451 : vector<1x32xf32>
    %453 = math.tanh %452 : vector<1x32xf32>
    %c0_197 = arith.constant 0 : index
    %c0_198 = arith.constant 0 : index
    %454 = vector.load %arg19[%c0_197, %c0_198] : memref<32x8xf32, #tpu.memory_space<vmem>>, vector<32x8xf32>
    %cst_199 = arith.constant dense<0.000000e+00> : vector<1x8xf32>
    %455 = tpu.matmul %453, %454, %cst_199 {dimension_numbers = #tpu.dot_dimension_numbers<[1], [0], [0], [1], [0, 0, 1, 1], [], []>} : vector<1x32xf32>, vector<32x8xf32>, vector<1x8xf32> -> vector<1x8xf32>
    %c0_200 = arith.constant 0 : index
    %c0_201 = arith.constant 0 : index
    %456 = vector.load %arg20[%c0_200, %c0_201] : memref<1x8xf32, #tpu.memory_space<vmem>>, vector<1x8xf32>
    %457 = arith.addf %455, %456 : vector<1x8xf32>
    %c0_202 = arith.constant 0 : index
    %c0_203 = arith.constant 0 : index
    %c0_204 = arith.constant 0 : index
    %458 = vector.load %arg21[%c0_202, %c0_203, %c0_204] : memref<1x1x8xf32, #tpu.memory_space<vmem>>, vector<1x1x8xf32>
    %459 = vector.shape_cast %458 : vector<1x1x8xf32> to vector<1x8xf32>
    %460 = vector.shape_cast %457 : vector<1x8xf32> to vector<1x1x8xf32>
    tpu.vector_store %arg21[%c0_202, %c0_203, %c0_204], %460 {strides = array<i32>} : memref<1x1x8xf32, #tpu.memory_space<vmem>>, vector<1x1x8xf32>,
    return
  }
  func.func @transform_0(%arg0: i32) -> (i32, i32, i32) {
    %c0_i32 = arith.constant 0 : i32
    %c0_i32_0 = arith.constant 0 : i32
    %c0_i32_1 = arith.constant 0 : i32
    return %arg0, %c0_i32, %c0_i32_0 : i32, i32, i32
  }
  func.func @transform_1(%arg0: i32) -> (i32, i32, i32) {
    %c0_i32 = arith.constant 0 : i32
    %c0_i32_0 = arith.constant 0 : i32
    %c0_i32_1 = arith.constant 0 : i32
    return %arg0, %c0_i32, %c0_i32_0 : i32, i32, i32
  }
  func.func @transform_2(%arg0: i32) -> (i32, i32) {
    %c0_i32 = arith.constant 0 : i32
    %c0_i32_0 = arith.constant 0 : i32
    %c0_i32_1 = arith.constant 0 : i32
    return %c0_i32, %c0_i32_0 : i32, i32
  }
  func.func @transform_3(%arg0: i32) -> (i32, i32) {
    %c0_i32 = arith.constant 0 : i32
    %c0_i32_0 = arith.constant 0 : i32
    %c0_i32_1 = arith.constant 0 : i32
    return %c0_i32, %c0_i32_0 : i32, i32
  }
  func.func @transform_4(%arg0: i32) -> (i32, i32, i32) {
    %c0_i32 = arith.constant 0 : i32
    %c0_i32_0 = arith.constant 0 : i32
    %c0_i32_1 = arith.constant 0 : i32
    %c0_i32_2 = arith.constant 0 : i32
    return %c0_i32, %c0_i32_0, %c0_i32_1 : i32, i32, i32
  }
  func.func @transform_5(%arg0: i32) -> (i32, i32, i32) {
    %c0_i32 = arith.constant 0 : i32
    %c0_i32_0 = arith.constant 0 : i32
    %c0_i32_1 = arith.constant 0 : i32
    %c0_i32_2 = arith.constant 0 : i32
    return %c0_i32, %c0_i32_0, %c0_i32_1 : i32, i32, i32
  }
  func.func @transform_6(%arg0: i32) -> (i32, i32, i32) {
    %c0_i32 = arith.constant 0 : i32
    %c0_i32_0 = arith.constant 0 : i32
    %c0_i32_1 = arith.constant 0 : i32
    %c0_i32_2 = arith.constant 0 : i32
    return %c0_i32, %c0_i32_0, %c0_i32_1 : i32, i32, i32
  }
  func.func @transform_7(%arg0: i32) -> (i32, i32, i32) {
    %c0_i32 = arith.constant 0 : i32
    %c0_i32_0 = arith.constant 0 : i32
    %c0_i32_1 = arith.constant 0 : i32
    %c0_i32_2 = arith.constant 0 : i32
    return %c0_i32, %c0_i32_0, %c0_i32_1 : i32, i32, i32
  }
  func.func @transform_8(%arg0: i32) -> (i32, i32, i32) {
    %c0_i32 = arith.constant 0 : i32
    %c0_i32_0 = arith.constant 0 : i32
    %c0_i32_1 = arith.constant 0 : i32
    %c0_i32_2 = arith.constant 0 : i32
    return %c0_i32, %c0_i32_0, %c0_i32_1 : i32, i32, i32
  }
  func.func @transform_9(%arg0: i32) -> (i32, i32, i32) {
    %c0_i32 = arith.constant 0 : i32
    %c0_i32_0 = arith.constant 0 : i32
    %c0_i32_1 = arith.constant 0 : i32
    %c0_i32_2 = arith.constant 0 : i32
    return %c0_i32, %c0_i32_0, %c0_i32_1 : i32, i32, i32
  }
  func.func @transform_10(%arg0: i32) -> (i32, i32, i32) {
    %c0_i32 = arith.constant 0 : i32
    %c0_i32_0 = arith.constant 0 : i32
    %c0_i32_1 = arith.constant 0 : i32
    %c0_i32_2 = arith.constant 0 : i32
    return %c0_i32, %c0_i32_0, %c0_i32_1 : i32, i32, i32
  }
  func.func @transform_11(%arg0: i32) -> (i32, i32, i32) {
    %c0_i32 = arith.constant 0 : i32
    %c0_i32_0 = arith.constant 0 : i32
    %c0_i32_1 = arith.constant 0 : i32
    %c0_i32_2 = arith.constant 0 : i32
    return %c0_i32, %c0_i32_0, %c0_i32_1 : i32, i32, i32
  }
  func.func @transform_12(%arg0: i32) -> (i32, i32, i32) {
    %c0_i32 = arith.constant 0 : i32
    %c0_i32_0 = arith.constant 0 : i32
    %c0_i32_1 = arith.constant 0 : i32
    %c0_i32_2 = arith.constant 0 : i32
    return %c0_i32, %c0_i32_0, %c0_i32_1 : i32, i32, i32
  }
  func.func @transform_13(%arg0: i32) -> (i32, i32, i32) {
    %c0_i32 = arith.constant 0 : i32
    %c0_i32_0 = arith.constant 0 : i32
    %c0_i32_1 = arith.constant 0 : i32
    %c0_i32_2 = arith.constant 0 : i32
    return %c0_i32, %c0_i32_0, %c0_i32_1 : i32, i32, i32
  }
  func.func @transform_14(%arg0: i32) -> (i32, i32, i32) {
    %c0_i32 = arith.constant 0 : i32
    %c0_i32_0 = arith.constant 0 : i32
    %c0_i32_1 = arith.constant 0 : i32
    %c0_i32_2 = arith.constant 0 : i32
    return %c0_i32, %c0_i32_0, %c0_i32_1 : i32, i32, i32
  }
  func.func @transform_15(%arg0: i32) -> (i32, i32, i32) {
    %c0_i32 = arith.constant 0 : i32
    %c0_i32_0 = arith.constant 0 : i32
    %c0_i32_1 = arith.constant 0 : i32
    %c0_i32_2 = arith.constant 0 : i32
    return %c0_i32, %c0_i32_0, %c0_i32_1 : i32, i32, i32
  }
  func.func @transform_16(%arg0: i32) -> (i32, i32) {
    %c0_i32 = arith.constant 0 : i32
    %c0_i32_0 = arith.constant 0 : i32
    %c0_i32_1 = arith.constant 0 : i32
    return %c0_i32, %c0_i32_0 : i32, i32
  }
  func.func @transform_17(%arg0: i32) -> (i32, i32) {
    %c0_i32 = arith.constant 0 : i32
    %c0_i32_0 = arith.constant 0 : i32
    %c0_i32_1 = arith.constant 0 : i32
    return %c0_i32, %c0_i32_0 : i32, i32
  }
  func.func @transform_18(%arg0: i32) -> (i32, i32) {
    %c0_i32 = arith.constant 0 : i32
    %c0_i32_0 = arith.constant 0 : i32
    %c0_i32_1 = arith.constant 0 : i32
    return %c0_i32, %c0_i32_0 : i32, i32
  }
  func.func @transform_19(%arg0: i32) -> (i32, i32) {
    %c0_i32 = arith.constant 0 : i32
    %c0_i32_0 = arith.constant 0 : i32
    %c0_i32_1 = arith.constant 0 : i32
    return %c0_i32, %c0_i32_0 : i32, i32
  }
  func.func @transform_20(%arg0: i32) -> (i32, i32, i32) {
    %c0_i32 = arith.constant 0 : i32
    %c0_i32_0 = arith.constant 0 : i32
    %c0_i32_1 = arith.constant 0 : i32
    return %arg0, %c0_i32, %c0_i32_0 : i32, i32, i32
  }
}

</mosaic_0001>

<llo_original>
// kernel: cps_bert_forward.1
$region0: #{cps_bert_forward.1}
  #allocation0 [shape = 'u32[]', space=smem, size = 0x4, offset = 0x4, fixed_abs, tag = 'smem constant byte address 0x4 - core index']
  #allocation1 [shape = 'u32[144,128]{1,0:T(1,128)}', space=vmem, size = 0x12000, scoped, tag = 'internal scratch']
  %s0 = inlined_call_operand.vmem [shape: f32[2,8,32], index: 0, kind: input, shape index: {}]
  %s1 = inlined_call_operand.vmem [shape: f32[2,1,8], index: 1, kind: input, shape index: {}]
  %s2 = inlined_call_operand.vmem [shape: f32[1,32], index: 2, kind: input, shape index: {}]
  %s3 = inlined_call_operand.vmem [shape: f32[1,32], index: 3, kind: input, shape index: {}]
  %s4 = inlined_call_operand.vmem [shape: f32[2,32,96], index: 4, kind: input, shape index: {}]
  %s5 = inlined_call_operand.vmem [shape: f32[2,1,96], index: 5, kind: input, shape index: {}]
  %s6 = inlined_call_operand.vmem [shape: f32[2,32,32], index: 6, kind: input, shape index: {}]
  %s7 = inlined_call_operand.vmem [shape: f32[2,1,32], index: 7, kind: input, shape index: {}]
  %s8 = inlined_call_operand.vmem [shape: f32[2,1,32], index: 8, kind: input, shape index: {}]
  %s9 = inlined_call_operand.vmem [shape: f32[2,1,32], index: 9, kind: input, shape index: {}]
  %s10 = inlined_call_operand.vmem [shape: f32[2,32,64], index: 10, kind: input, shape index: {}]
  %s11 = inlined_call_operand.vmem [shape: f32[2,1,64], index: 11, kind: input, shape index: {}]
  %s12 = inlined_call_operand.vmem [shape: f32[2,64,32], index: 12, kind: input, shape index: {}]
  %s13 = inlined_call_operand.vmem [shape: f32[2,1,32], index: 13, kind: input, shape index: {}]
  %s14 = inlined_call_operand.vmem [shape: f32[2,1,32], index: 14, kind: input, shape index: {}]
  %s15 = inlined_call_operand.vmem [shape: f32[2,1,32], index: 15, kind: input, shape index: {}]
  %s16 = inlined_call_operand.vmem [shape: f32[32,32], index: 16, kind: input, shape index: {}]
  %s17 = inlined_call_operand.vmem [shape: f32[1,32], index: 17, kind: input, shape index: {}]
  %s18 = inlined_call_operand.vmem [shape: f32[32,8], index: 18, kind: input, shape index: {}]
  %s19 = inlined_call_operand.vmem [shape: f32[1,8], index: 19, kind: input, shape index: {}]
  %s20 = inlined_call_operand.hbm [shape: f32[2,1,8], index: 20, kind: output, shape index: {}]
  %s21 = sld [smem:[#allocation0]]
  $region113: #{cps_bert_forward.1} parent=0
    _
  %s23 = ssub.s32 1, %s21
  %s24 = scalar_select 0, %s23, %s21
  $region1: #{cps_bert_forward.1} parent=0
    #allocation2 [shape = 'u8[1024]{0}', space=vmem, size = 0x400, scoped, tag = 'output window, operand 0']
    #allocation3 [shape = 's32[2]{0}', space=sflag, size = 0x8, scoped, tag = 'scoped memory for cps_bert_forward.1']
    %25 = vsyncpa [#allocation3], 0
    %s26 = scalar_lea.sflag [#allocation3], 1
    %27 = vsyncpa %s26, 0
    loop: start=0, step=1, limit=4
    $region2: #{cps_bert_forward.1} parent=1 // loop_pre_header
      _
    $region3: #{cps_bert_forward.1} parent=1 // loop_header
      %s29 = sphi 0, %s33
      %p30 = scmp.ge.s32.totalorder %s29, 4
      %s39 = sphi 0, %s41
      %s42 = sphi 0, %s39
      %s43 = sphi 0, %s42
      %s59 = sphi 0, %s43
      %s65 = sphi 0, %s67
      %s68 = sphi 0, %s65
      %s69 = sphi 0, %s68
      %s85 = sphi 0, %s69
      %s89 = sphi 0, %s89
      %s91 = sphi 0, %s89
      %s92 = sphi 0, %s91
      %s106 = sphi 0, %s92
      %s110 = sphi 0, %s110
      %s112 = sphi 0, %s110
      %s113 = sphi 0, %s112
      %s127 = sphi 0, %s113
      %s131 = sphi 0, %s131
      %s133 = sphi 0, %s131
      %s134 = sphi 0, %s133
      %s148 = sphi 0, %s134
      %s152 = sphi 0, %s152
      %s154 = sphi 0, %s152
      %s155 = sphi 0, %s154
      %s169 = sphi 0, %s155
      %s173 = sphi 0, %s173
      %s175 = sphi 0, %s173
      %s176 = sphi 0, %s175
      %s190 = sphi 0, %s176
      %s194 = sphi 0, %s194
      %s196 = sphi 0, %s194
      %s197 = sphi 0, %s196
      %s211 = sphi 0, %s197
      %s215 = sphi 0, %s215
      %s217 = sphi 0, %s215
      %s218 = sphi 0, %s217
      %s232 = sphi 0, %s218
      %s236 = sphi 0, %s236
      %s238 = sphi 0, %s236
      %s239 = sphi 0, %s238
      %s253 = sphi 0, %s239
      %s257 = sphi 0, %s257
      %s259 = sphi 0, %s257
      %s260 = sphi 0, %s259
      %s274 = sphi 0, %s260
      %s278 = sphi 0, %s278
      %s280 = sphi 0, %s278
      %s281 = sphi 0, %s280
      %s295 = sphi 0, %s281
      %s299 = sphi 0, %s299
      %s301 = sphi 0, %s299
      %s302 = sphi 0, %s301
      %s316 = sphi 0, %s302
      %s320 = sphi 0, %s320
      %s322 = sphi 0, %s320
      %s323 = sphi 0, %s322
      %s337 = sphi 0, %s323
      %s341 = sphi 0, %s341
      %s343 = sphi 0, %s341
      %s344 = sphi 0, %s343
      %s358 = sphi 0, %s344
      %s362 = sphi 0, %s362
      %s364 = sphi 0, %s362
      %s365 = sphi 0, %s364
      %s379 = sphi 0, %s365
      %s383 = sphi 0, %s383
      %s385 = sphi 0, %s383
      %s386 = sphi 0, %s385
      %s400 = sphi 0, %s386
      %s404 = sphi 0, %s404
      %s406 = sphi 0, %s404
      %s407 = sphi 0, %s406
      %s421 = sphi 0, %s407
      %s425 = sphi 0, %s425
      %s427 = sphi 0, %s425
      %s428 = sphi 0, %s427
      %s442 = sphi 0, %s428
      %s446 = sphi 0, %s446
      %s448 = sphi 0, %s446
      %s449 = sphi 0, %s448
      %s463 = sphi 0, %s449
      %s469 = sphi 0, %s471
      %s472 = sphi 0, %s469
      %s473 = sphi 0, %s472
      %s489 = sphi 0, %s473
    $region4: #{cps_bert_forward.1} parent=1 // loop_header_branch
      %32 = sbr.rel (%p30) target = $region8
    $region5: #{cps_bert_forward.1} parent=1 // loop_body
      %s34 = ssub.s32 %s29, 1
      %s35 = ssub.s32 %s29, 2
      %s36 = sadd.s32 %s29, 1
      %s37 = ssub.s32 %s29, %s36
      %p38 = scmp.eq.s32.totalorder %s37, 0
      %s40 = sadd.s32 %s39, 1
      %s41 = scalar_select %p38, %s39, %s40
      %p44 = pneg %p38
      %p45 = scmp.eq.s32.totalorder %s29, 1
      %p46 = por %p44, %p45
      %p47 = scmp.ne.s32.totalorder %s39, %s42
      %p48 = scmp.eq.s32.totalorder %s29, 0
      %p49 = por %p47, %p48
      %p50 = scmp.ne.s32.totalorder %s39, %s42
      %p51 = scmp.eq.s32.totalorder %s34, 1
      %p52 = por %p50, %p51
      %p53 = scmp.ne.s32.totalorder %s42, %s43
      %p54 = scmp.eq.s32.totalorder %s34, 0
      %p55 = por %p53, %p54
      %p56 = scmp.ne.s32.totalorder %s42, %s43
      %p57 = scmp.eq.s32.totalorder %s35, 1
      %p58 = por %p56, %p57
      %p60 = scmp.ne.s32.totalorder %s43, %s59
      %p61 = scmp.eq.s32.totalorder %s35, 0
      %p62 = por %p60, %p61
      %s63 = ssub.s32 %s29, %s36
      %p64 = scmp.eq.s32.totalorder %s63, 0
      %s66 = sadd.s32 %s65, 1
      %s67 = scalar_select %p64, %s65, %s66
      %p70 = pneg %p64
      %p71 = scmp.eq.s32.totalorder %s29, 1
      %p72 = por %p70, %p71
      %p73 = scmp.ne.s32.totalorder %s65, %s68
      %p74 = scmp.eq.s32.totalorder %s29, 0
      %p75 = por %p73, %p74
      %p76 = scmp.ne.s32.totalorder %s65, %s68
      %p77 = scmp.eq.s32.totalorder %s34, 1
      %p78 = por %p76, %p77
      %p79 = scmp.ne.s32.totalorder %s68, %s69
      %p80 = scmp.eq.s32.totalorder %s34, 0
      %p81 = por %p79, %p80
      %p82 = scmp.ne.s32.totalorder %s68, %s69
      %p83 = scmp.eq.s32.totalorder %s35, 1
      %p84 = por %p82, %p83
      %p86 = scmp.ne.s32.totalorder %s69, %s85
      %p87 = scmp.eq.s32.totalorder %s35, 0
      %p88 = por %p86, %p87
      %s90 = sadd.s32 %s89, 1
      %p93 = scmp.eq.s32.totalorder %s29, 1
      %p94 = scmp.ne.s32.totalorder %s89, %s91
      %p95 = scmp.eq.s32.totalorder %s29, 0
      %p96 = por %p94, %p95
      %p97 = scmp.ne.s32.totalorder %s89, %s91
      %p98 = scmp.eq.s32.totalorder %s34, 1
      %p99 = por %p97, %p98
      %p100 = scmp.ne.s32.totalorder %s91, %s92
      %p101 = scmp.eq.s32.totalorder %s34, 0
      %p102 = por %p100, %p101
      %p103 = scmp.ne.s32.totalorder %s91, %s92
      %p104 = scmp.eq.s32.totalorder %s35, 1
      %p105 = por %p103, %p104
      %p107 = scmp.ne.s32.totalorder %s92, %s106
      %p108 = scmp.eq.s32.totalorder %s35, 0
      %p109 = por %p107, %p108
      %s111 = sadd.s32 %s110, 1
      %p114 = scmp.eq.s32.totalorder %s29, 1
      %p115 = scmp.ne.s32.totalorder %s110, %s112
      %p116 = scmp.eq.s32.totalorder %s29, 0
      %p117 = por %p115, %p116
      %p118 = scmp.ne.s32.totalorder %s110, %s112
      %p119 = scmp.eq.s32.totalorder %s34, 1
      %p120 = por %p118, %p119
      %p121 = scmp.ne.s32.totalorder %s112, %s113
      %p122 = scmp.eq.s32.totalorder %s34, 0
      %p123 = por %p121, %p122
      %p124 = scmp.ne.s32.totalorder %s112, %s113
      %p125 = scmp.eq.s32.totalorder %s35, 1
      %p126 = por %p124, %p125
      %p128 = scmp.ne.s32.totalorder %s113, %s127
      %p129 = scmp.eq.s32.totalorder %s35, 0
      %p130 = por %p128, %p129
      %s132 = sadd.s32 %s131, 1
      %p135 = scmp.eq.s32.totalorder %s29, 1
      %p136 = scmp.ne.s32.totalorder %s131, %s133
      %p137 = scmp.eq.s32.totalorder %s29, 0
      %p138 = por %p136, %p137
      %p139 = scmp.ne.s32.totalorder %s131, %s133
      %p140 = scmp.eq.s32.totalorder %s34, 1
      %p141 = por %p139, %p140
      %p142 = scmp.ne.s32.totalorder %s133, %s134
      %p143 = scmp.eq.s32.totalorder %s34, 0
      %p144 = por %p142, %p143
      %p145 = scmp.ne.s32.totalorder %s133, %s134
      %p146 = scmp.eq.s32.totalorder %s35, 1
      %p147 = por %p145, %p146
      %p149 = scmp.ne.s32.totalorder %s134, %s148
      %p150 = scmp.eq.s32.totalorder %s35, 0
      %p151 = por %p149, %p150
      %s153 = sadd.s32 %s152, 1
      %p156 = scmp.eq.s32.totalorder %s29, 1
      %p157 = scmp.ne.s32.totalorder %s152, %s154
      %p158 = scmp.eq.s32.totalorder %s29, 0
      %p159 = por %p157, %p158
      %p160 = scmp.ne.s32.totalorder %s152, %s154
      %p161 = scmp.eq.s32.totalorder %s34, 1
      %p162 = por %p160, %p161
      %p163 = scmp.ne.s32.totalorder %s154, %s155
      %p164 = scmp.eq.s32.totalorder %s34, 0
      %p165 = por %p163, %p164
      %p166 = scmp.ne.s32.totalorder %s154, %s155
      %p167 = scmp.eq.s32.totalorder %s35, 1
      %p168 = por %p166, %p167
      %p170 = scmp.ne.s32.totalorder %s155, %s169
      %p171 = scmp.eq.s32.totalorder %s35, 0
      %p172 = por %p170, %p171
      %s174 = sadd.s32 %s173, 1
      %p177 = scmp.eq.s32.totalorder %s29, 1
      %p178 = scmp.ne.s32.totalorder %s173, %s175
      %p179 = scmp.eq.s32.totalorder %s29, 0
      %p180 = por %p178, %p179
      %p181 = scmp.ne.s32.totalorder %s173, %s175
      %p182 = scmp.eq.s32.totalorder %s34, 1
      %p183 = por %p181, %p182
      %p184 = scmp.ne.s32.totalorder %s175, %s176
      %p185 = scmp.eq.s32.totalorder %s34, 0
      %p186 = por %p184, %p185
      %p187 = scmp.ne.s32.totalorder %s175, %s176
      %p188 = scmp.eq.s32.totalorder %s35, 1
      %p189 = por %p187, %p188
      %p191 = scmp.ne.s32.totalorder %s176, %s190
      %p192 = scmp.eq.s32.totalorder %s35, 0
      %p193 = por %p191, %p192
      %s195 = sadd.s32 %s194, 1
      %p198 = scmp.eq.s32.totalorder %s29, 1
      %p199 = scmp.ne.s32.totalorder %s194, %s196
      %p200 = scmp.eq.s32.totalorder %s29, 0
      %p201 = por %p199, %p200
      %p202 = scmp.ne.s32.totalorder %s194, %s196
      %p203 = scmp.eq.s32.totalorder %s34, 1
      %p204 = por %p202, %p203
      %p205 = scmp.ne.s32.totalorder %s196, %s197
      %p206 = scmp.eq.s32.totalorder %s34, 0
      %p207 = por %p205, %p206
      %p208 = scmp.ne.s32.totalorder %s196, %s197
      %p209 = scmp.eq.s32.totalorder %s35, 1
      %p210 = por %p208, %p209
      %p212 = scmp.ne.s32.totalorder %s197, %s211
      %p213 = scmp.eq.s32.totalorder %s35, 0
      %p214 = por %p212, %p213
      %s216 = sadd.s32 %s215, 1
      %p219 = scmp.eq.s32.totalorder %s29, 1
      %p220 = scmp.ne.s32.totalorder %s215, %s217
      %p221 = scmp.eq.s32.totalorder %s29, 0
      %p222 = por %p220, %p221
      %p223 = scmp.ne.s32.totalorder %s215, %s217
      %p224 = scmp.eq.s32.totalorder %s34, 1
      %p225 = por %p223, %p224
      %p226 = scmp.ne.s32.totalorder %s217, %s218
      %p227 = scmp.eq.s32.totalorder %s34, 0
      %p228 = por %p226, %p227
      %p229 = scmp.ne.s32.totalorder %s217, %s218
      %p230 = scmp.eq.s32.totalorder %s35, 1
      %p231 = por %p229, %p230
      %p233 = scmp.ne.s32.totalorder %s218, %s232
      %p234 = scmp.eq.s32.totalorder %s35, 0
      %p235 = por %p233, %p234
      %s237 = sadd.s32 %s236, 1
      %p240 = scmp.eq.s32.totalorder %s29, 1
      %p241 = scmp.ne.s32.totalorder %s236, %s238
      %p242 = scmp.eq.s32.totalorder %s29, 0
      %p243 = por %p241, %p242
      %p244 = scmp.ne.s32.totalorder %s236, %s238
      %p245 = scmp.eq.s32.totalorder %s34, 1
      %p246 = por %p244, %p245
      %p247 = scmp.ne.s32.totalorder %s238, %s239
      %p248 = scmp.eq.s32.totalorder %s34, 0
      %p249 = por %p247, %p248
      %p250 = scmp.ne.s32.totalorder %s238, %s239
      %p251 = scmp.eq.s32.totalorder %s35, 1
      %p252 = por %p250, %p251
      %p254 = scmp.ne.s32.totalorder %s239, %s253
      %p255 = scmp.eq.s32.totalorder %s35, 0
      %p256 = por %p254, %p255
      %s258 = sadd.s32 %s257, 1
      %p261 = scmp.eq.s32.totalorder %s29, 1
      %p262 = scmp.ne.s32.totalorder %s257, %s259
      %p263 = scmp.eq.s32.totalorder %s29, 0
      %p264 = por %p262, %p263
      %p265 = scmp.ne.s32.totalorder %s257, %s259
      %p266 = scmp.eq.s32.totalorder %s34, 1
      %p267 = por %p265, %p266
      %p268 = scmp.ne.s32.totalorder %s259, %s260
      %p269 = scmp.eq.s32.totalorder %s34, 0
      %p270 = por %p268, %p269
      %p271 = scmp.ne.s32.totalorder %s259, %s260
      %p272 = scmp.eq.s32.totalorder %s35, 1
      %p273 = por %p271, %p272
      %p275 = scmp.ne.s32.totalorder %s260, %s274
      %p276 = scmp.eq.s32.totalorder %s35, 0
      %p277 = por %p275, %p276
      %s279 = sadd.s32 %s278, 1
      %p282 = scmp.eq.s32.totalorder %s29, 1
      %p283 = scmp.ne.s32.totalorder %s278, %s280
      %p284 = scmp.eq.s32.totalorder %s29, 0
      %p285 = por %p283, %p284
      %p286 = scmp.ne.s32.totalorder %s278, %s280
      %p287 = scmp.eq.s32.totalorder %s34, 1
      %p288 = por %p286, %p287
      %p289 = scmp.ne.s32.totalorder %s280, %s281
      %p290 = scmp.eq.s32.totalorder %s34, 0
      %p291 = por %p289, %p290
      %p292 = scmp.ne.s32.totalorder %s280, %s281
      %p293 = scmp.eq.s32.totalorder %s35, 1
      %p294 = por %p292, %p293
      %p296 = scmp.ne.s32.totalorder %s281, %s295
      %p297 = scmp.eq.s32.totalorder %s35, 0
      %p298 = por %p296, %p297
      %s300 = sadd.s32 %s299, 1
      %p303 = scmp.eq.s32.totalorder %s29, 1
      %p304 = scmp.ne.s32.totalorder %s299, %s301
      %p305 = scmp.eq.s32.totalorder %s29, 0
      %p306 = por %p304, %p305
      %p307 = scmp.ne.s32.totalorder %s299, %s301
      %p308 = scmp.eq.s32.totalorder %s34, 1
      %p309 = por %p307, %p308
      %p310 = scmp.ne.s32.totalorder %s301, %s302
      %p311 = scmp.eq.s32.totalorder %s34, 0
      %p312 = por %p310, %p311
      %p313 = scmp.ne.s32.totalorder %s301, %s302
      %p314 = scmp.eq.s32.totalorder %s35, 1
      %p315 = por %p313, %p314
      %p317 = scmp.ne.s32.totalorder %s302, %s316
      %p318 = scmp.eq.s32.totalorder %s35, 0
      %p319 = por %p317, %p318
      %s321 = sadd.s32 %s320, 1
      %p324 = scmp.eq.s32.totalorder %s29, 1
      %p325 = scmp.ne.s32.totalorder %s320, %s322
      %p326 = scmp.eq.s32.totalorder %s29, 0
      %p327 = por %p325, %p326
      %p328 = scmp.ne.s32.totalorder %s320, %s322
      %p329 = scmp.eq.s32.totalorder %s34, 1
      %p330 = por %p328, %p329
      %p331 = scmp.ne.s32.totalorder %s322, %s323
      %p332 = scmp.eq.s32.totalorder %s34, 0
      %p333 = por %p331, %p332
      %p334 = scmp.ne.s32.totalorder %s322, %s323
      %p335 = scmp.eq.s32.totalorder %s35, 1
      %p336 = por %p334, %p335
      %p338 = scmp.ne.s32.totalorder %s323, %s337
      %p339 = scmp.eq.s32.totalorder %s35, 0
      %p340 = por %p338, %p339
      %s342 = sadd.s32 %s341, 1
      %p345 = scmp.eq.s32.totalorder %s29, 1
      %p346 = scmp.ne.s32.totalorder %s341, %s343
      %p347 = scmp.eq.s32.totalorder %s29, 0
      %p348 = por %p346, %p347
      %p349 = scmp.ne.s32.totalorder %s341, %s343
      %p350 = scmp.eq.s32.totalorder %s34, 1
      %p351 = por %p349, %p350
      %p352 = scmp.ne.s32.totalorder %s343, %s344
      %p353 = scmp.eq.s32.totalorder %s34, 0
      %p354 = por %p352, %p353
      %p355 = scmp.ne.s32.totalorder %s343, %s344
      %p356 = scmp.eq.s32.totalorder %s35, 1
      %p357 = por %p355, %p356
      %p359 = scmp.ne.s32.totalorder %s344, %s358
      %p360 = scmp.eq.s32.totalorder %s35, 0
      %p361 = por %p359, %p360
      %s363 = sadd.s32 %s362, 1
      %p366 = scmp.eq.s32.totalorder %s29, 1
      %p367 = scmp.ne.s32.totalorder %s362, %s364
      %p368 = scmp.eq.s32.totalorder %s29, 0
      %p369 = por %p367, %p368
      %p370 = scmp.ne.s32.totalorder %s362, %s364
      %p371 = scmp.eq.s32.totalorder %s34, 1
      %p372 = por %p370, %p371
      %p373 = scmp.ne.s32.totalorder %s364, %s365
      %p374 = scmp.eq.s32.totalorder %s34, 0
      %p375 = por %p373, %p374
      %p376 = scmp.ne.s32.totalorder %s364, %s365
      %p377 = scmp.eq.s32.totalorder %s35, 1
      %p378 = por %p376, %p377
      %p380 = scmp.ne.s32.totalorder %s365, %s379
      %p381 = scmp.eq.s32.totalorder %s35, 0
      %p382 = por %p380, %p381
      %s384 = sadd.s32 %s383, 1
      %p387 = scmp.eq.s32.totalorder %s29, 1
      %p388 = scmp.ne.s32.totalorder %s383, %s385
      %p389 = scmp.eq.s32.totalorder %s29, 0
      %p390 = por %p388, %p389
      %p391 = scmp.ne.s32.totalorder %s383, %s385
      %p392 = scmp.eq.s32.totalorder %s34, 1
      %p393 = por %p391, %p392
      %p394 = scmp.ne.s32.totalorder %s385, %s386
      %p395 = scmp.eq.s32.totalorder %s34, 0
      %p396 = por %p394, %p395
      %p397 = scmp.ne.s32.totalorder %s385, %s386
      %p398 = scmp.eq.s32.totalorder %s35, 1
      %p399 = por %p397, %p398
      %p401 = scmp.ne.s32.totalorder %s386, %s400
      %p402 = scmp.eq.s32.totalorder %s35, 0
      %p403 = por %p401, %p402
      %s405 = sadd.s32 %s404, 1
      %p408 = scmp.eq.s32.totalorder %s29, 1
      %p409 = scmp.ne.s32.totalorder %s404, %s406
      %p410 = scmp.eq.s32.totalorder %s29, 0
      %p411 = por %p409, %p410
      %p412 = scmp.ne.s32.totalorder %s404, %s406
      %p413 = scmp.eq.s32.totalorder %s34, 1
      %p414 = por %p412, %p413
      %p415 = scmp.ne.s32.totalorder %s406, %s407
      %p416 = scmp.eq.s32.totalorder %s34, 0
      %p417 = por %p415, %p416
      %p418 = scmp.ne.s32.totalorder %s406, %s407
      %p419 = scmp.eq.s32.totalorder %s35, 1
      %p420 = por %p418, %p419
      %p422 = scmp.ne.s32.totalorder %s407, %s421
      %p423 = scmp.eq.s32.totalorder %s35, 0
      %p424 = por %p422, %p423
      %s426 = sadd.s32 %s425, 1
      %p429 = scmp.eq.s32.totalorder %s29, 1
      %p430 = scmp.ne.s32.totalorder %s425, %s427
      %p431 = scmp.eq.s32.totalorder %s29, 0
      %p432 = por %p430, %p431
      %p433 = scmp.ne.s32.totalorder %s425, %s427
      %p434 = scmp.eq.s32.totalorder %s34, 1
      %p435 = por %p433, %p434
      %p436 = scmp.ne.s32.totalorder %s427, %s428
      %p437 = scmp.eq.s32.totalorder %s34, 0
      %p438 = por %p436, %p437
      %p439 = scmp.ne.s32.totalorder %s427, %s428
      %p440 = scmp.eq.s32.totalorder %s35, 1
      %p441 = por %p439, %p440
      %p443 = scmp.ne.s32.totalorder %s428, %s442
      %p444 = scmp.eq.s32.totalorder %s35, 0
      %p445 = por %p443, %p444
      %s447 = sadd.s32 %s446, 1
      %p450 = scmp.eq.s32.totalorder %s29, 1
      %p451 = scmp.ne.s32.totalorder %s446, %s448
      %p452 = scmp.eq.s32.totalorder %s29, 0
      %p453 = por %p451, %p452
      %p454 = scmp.ne.s32.totalorder %s446, %s448
      %p455 = scmp.eq.s32.totalorder %s34, 1
      %p456 = por %p454, %p455
      %p457 = scmp.ne.s32.totalorder %s448, %s449
      %p458 = scmp.eq.s32.totalorder %s34, 0
      %p459 = por %p457, %p458
      %p460 = scmp.ne.s32.totalorder %s448, %s449
      %p461 = scmp.eq.s32.totalorder %s35, 1
      %p462 = por %p460, %p461
      %p464 = scmp.ne.s32.totalorder %s449, %s463
      %p465 = scmp.eq.s32.totalorder %s35, 0
      %p466 = por %p464, %p465
      %s467 = ssub.s32 %s29, %s36
      %p468 = scmp.eq.s32.totalorder %s467, 0
      %s470 = sadd.s32 %s469, 1
      %s471 = scalar_select %p468, %s469, %s470
      %p474 = pneg %p468
      %p475 = scmp.eq.s32.totalorder %s29, 1
      %p476 = por %p474, %p475
      %p477 = scmp.ne.s32.totalorder %s469, %s472
      %p478 = scmp.eq.s32.totalorder %s29, 0
      %p479 = por %p477, %p478
      %p480 = scmp.ne.s32.totalorder %s469, %s472
      %p481 = scmp.eq.s32.totalorder %s34, 1
      %p482 = por %p480, %p481
      %p483 = scmp.ne.s32.totalorder %s472, %s473
      %p484 = scmp.eq.s32.totalorder %s34, 0
      %p485 = por %p483, %p484
      %p486 = scmp.ne.s32.totalorder %s472, %s473
      %p487 = scmp.eq.s32.totalorder %s35, 1
      %p488 = por %p486, %p487
      %p490 = scmp.ne.s32.totalorder %s473, %s489
      %p491 = scmp.eq.s32.totalorder %s35, 0
      %p492 = por %p490, %p491
      %p493 = scmp.le.s32.totalorder 1, %s29
      %p494 = scmp.lt.s32.totalorder %s29, 3
      %p495 = pnand %p493, %p494
      %p496 = pneg %p495
      // Predicated region
      $region9: #{cps_bert_forward.1} parent=5 // pred_check
        _
      $region10: #{cps_bert_forward.1} parent=5 // pred_check_branch
        %498 = sbr.rel (%p495) target = $region12
      $region11: #{cps_bert_forward.1} parent=5 // pred_region
        %s499 = ssub.s32 %s29, 1
        // Predicated region
        $region13: #{cps_bert_forward.1} parent=11 // pred_check
          %p500 = pneg %p102
        $region14: #{cps_bert_forward.1} parent=11 // pred_check_branch
          %502 = sbr.rel (%p500) target = $region16
        $region15: #{cps_bert_forward.1} parent=11 // pred_region
          _
        $region16: #{cps_bert_forward.1} parent=11 // pred_fallthru
          _
        // Predicated region
        $region17: #{cps_bert_forward.1} parent=11 // pred_check
          %p503 = pneg %p123
        $region18: #{cps_bert_forward.1} parent=11 // pred_check_branch
          %505 = sbr.rel (%p503) target = $region20
        $region19: #{cps_bert_forward.1} parent=11 // pred_region
          _
        $region20: #{cps_bert_forward.1} parent=11 // pred_fallthru
          _
        // Predicated region
        $region21: #{cps_bert_forward.1} parent=11 // pred_check
          %p506 = pneg %p144
        $region22: #{cps_bert_forward.1} parent=11 // pred_check_branch
          %508 = sbr.rel (%p506) target = $region24
        $region23: #{cps_bert_forward.1} parent=11 // pred_region
          _
        $region24: #{cps_bert_forward.1} parent=11 // pred_fallthru
          _
        // Predicated region
        $region25: #{cps_bert_forward.1} parent=11 // pred_check
          %p509 = pneg %p165
        $region26: #{cps_bert_forward.1} parent=11 // pred_check_branch
          %511 = sbr.rel (%p509) target = $region28
        $region27: #{cps_bert_forward.1} parent=11 // pred_region
          _
        $region28: #{cps_bert_forward.1} parent=11 // pred_fallthru
          _
        // Predicated region
        $region29: #{cps_bert_forward.1} parent=11 // pred_check
          %p512 = pneg %p186
        $region30: #{cps_bert_forward.1} parent=11 // pred_check_branch
          %514 = sbr.rel (%p512) target = $region32
        $region31: #{cps_bert_forward.1} parent=11 // pred_region
          _
        $region32: #{cps_bert_forward.1} parent=11 // pred_fallthru
          _
        // Predicated region
        $region33: #{cps_bert_forward.1} parent=11 // pred_check
          %p515 = pneg %p207
        $region34: #{cps_bert_forward.1} parent=11 // pred_check_branch
          %517 = sbr.rel (%p515) target = $region36
        $region35: #{cps_bert_forward.1} parent=11 // pred_region
          _
        $region36: #{cps_bert_forward.1} parent=11 // pred_fallthru
          _
        // Predicated region
        $region37: #{cps_bert_forward.1} parent=11 // pred_check
          %p518 = pneg %p228
        $region38: #{cps_bert_forward.1} parent=11 // pred_check_branch
          %520 = sbr.rel (%p518) target = $region40
        $region39: #{cps_bert_forward.1} parent=11 // pred_region
          _
        $region40: #{cps_bert_forward.1} parent=11 // pred_fallthru
          _
        // Predicated region
        $region41: #{cps_bert_forward.1} parent=11 // pred_check
          %p521 = pneg %p249
        $region42: #{cps_bert_forward.1} parent=11 // pred_check_branch
          %523 = sbr.rel (%p521) target = $region44
        $region43: #{cps_bert_forward.1} parent=11 // pred_region
          _
        $region44: #{cps_bert_forward.1} parent=11 // pred_fallthru
          _
        // Predicated region
        $region45: #{cps_bert_forward.1} parent=11 // pred_check
          %p524 = pneg %p270
        $region46: #{cps_bert_forward.1} parent=11 // pred_check_branch
          %526 = sbr.rel (%p524) target = $region48
        $region47: #{cps_bert_forward.1} parent=11 // pred_region
          _
        $region48: #{cps_bert_forward.1} parent=11 // pred_fallthru
          _
        // Predicated region
        $region49: #{cps_bert_forward.1} parent=11 // pred_check
          %p527 = pneg %p291
        $region50: #{cps_bert_forward.1} parent=11 // pred_check_branch
          %529 = sbr.rel (%p527) target = $region52
        $region51: #{cps_bert_forward.1} parent=11 // pred_region
          _
        $region52: #{cps_bert_forward.1} parent=11 // pred_fallthru
          _
        // Predicated region
        $region53: #{cps_bert_forward.1} parent=11 // pred_check
          %p530 = pneg %p312
        $region54: #{cps_bert_forward.1} parent=11 // pred_check_branch
          %532 = sbr.rel (%p530) target = $region56
        $region55: #{cps_bert_forward.1} parent=11 // pred_region
          _
        $region56: #{cps_bert_forward.1} parent=11 // pred_fallthru
          _
        // Predicated region
        $region57: #{cps_bert_forward.1} parent=11 // pred_check
          %p533 = pneg %p333
        $region58: #{cps_bert_forward.1} parent=11 // pred_check_branch
          %535 = sbr.rel (%p533) target = $region60
        $region59: #{cps_bert_forward.1} parent=11 // pred_region
          _
        $region60: #{cps_bert_forward.1} parent=11 // pred_fallthru
          _
        // Predicated region
        $region61: #{cps_bert_forward.1} parent=11 // pred_check
          %p536 = pneg %p354
        $region62: #{cps_bert_forward.1} parent=11 // pred_check_branch
          %538 = sbr.rel (%p536) target = $region64
        $region63: #{cps_bert_forward.1} parent=11 // pred_region
          _
        $region64: #{cps_bert_forward.1} parent=11 // pred_fallthru
          _
        // Predicated region
        $region65: #{cps_bert_forward.1} parent=11 // pred_check
          %p539 = pneg %p375
        $region66: #{cps_bert_forward.1} parent=11 // pred_check_branch
          %541 = sbr.rel (%p539) target = $region68
        $region67: #{cps_bert_forward.1} parent=11 // pred_region
          _
        $region68: #{cps_bert_forward.1} parent=11 // pred_fallthru
          _
        // Predicated region
        $region69: #{cps_bert_forward.1} parent=11 // pred_check
          %p542 = pneg %p396
        $region70: #{cps_bert_forward.1} parent=11 // pred_check_branch
          %544 = sbr.rel (%p542) target = $region72
        $region71: #{cps_bert_forward.1} parent=11 // pred_region
          _
        $region72: #{cps_bert_forward.1} parent=11 // pred_fallthru
          _
        // Predicated region
        $region73: #{cps_bert_forward.1} parent=11 // pred_check
          %p545 = pneg %p417
        $region74: #{cps_bert_forward.1} parent=11 // pred_check_branch
          %547 = sbr.rel (%p545) target = $region76
        $region75: #{cps_bert_forward.1} parent=11 // pred_region
          _
        $region76: #{cps_bert_forward.1} parent=11 // pred_fallthru
          _
        // Predicated region
        $region77: #{cps_bert_forward.1} parent=11 // pred_check
          %p548 = pneg %p438
        $region78: #{cps_bert_forward.1} parent=11 // pred_check_branch
          %550 = sbr.rel (%p548) target = $region80
        $region79: #{cps_bert_forward.1} parent=11 // pred_region
          _
        $region80: #{cps_bert_forward.1} parent=11 // pred_fallthru
          _
        // Predicated region
        $region81: #{cps_bert_forward.1} parent=11 // pred_check
          %p551 = pneg %p459
        $region82: #{cps_bert_forward.1} parent=11 // pred_check_branch
          %553 = sbr.rel (%p551) target = $region84
        $region83: #{cps_bert_forward.1} parent=11 // pred_region
          _
        $region84: #{cps_bert_forward.1} parent=11 // pred_fallthru
          _
      $region12: #{cps_bert_forward.1} parent=5 // pred_fallthru
        _
      %p554 = scmp.lt.s32.totalorder %s29, 2
      // Predicated region
      $region85: #{cps_bert_forward.1} parent=5 // pred_check
        %p555 = pneg %p554
      $region86: #{cps_bert_forward.1} parent=5 // pred_check_branch
        %557 = sbr.rel (%p555) target = $region88
      $region87: #{cps_bert_forward.1} parent=5 // pred_region
        // Predicated region
        $region89: #{cps_bert_forward.1} parent=87 // pred_check
          %p558 = pneg %p49
        $region90: #{cps_bert_forward.1} parent=87 // pred_check_branch
          %560 = sbr.rel (%p558) target = $region92
        $region91: #{cps_bert_forward.1} parent=87 // pred_region
          %p561 = scmp.lt.s32.totalorder %s29, 1
          %s562 = scalar_select %p561, %s29, 1
          %s563 = smul.addr %s562, 8
          %s564 = scalar_lea.vmem %s0, %s563
        $region92: #{cps_bert_forward.1} parent=87 // pred_fallthru
          _
        // Predicated region
        $region93: #{cps_bert_forward.1} parent=87 // pred_check
          %p565 = pneg %p75
        $region94: #{cps_bert_forward.1} parent=87 // pred_check_branch
          %567 = sbr.rel (%p565) target = $region96
        $region95: #{cps_bert_forward.1} parent=87 // pred_region
          %p568 = scmp.lt.s32.totalorder %s29, 1
          %s569 = scalar_select %p568, %s29, 1
          %s570 = scalar_lea.vmem %s1, %s569
        $region96: #{cps_bert_forward.1} parent=87 // pred_fallthru
          _
      $region88: #{cps_bert_forward.1} parent=5 // pred_fallthru
        _
      %p571 = scmp.le.s32.totalorder 1, %s29
      %p572 = scmp.lt.s32.totalorder %s29, 3
      %p573 = pnand %p571, %p572
      %p574 = pneg %p573
      // Predicated region
      $region97: #{cps_bert_forward.1} parent=5 // pred_check
        _
      $region98: #{cps_bert_forward.1} parent=5 // pred_check_branch
        %576 = sbr.rel (%p573) target = $region100
      $region99: #{cps_bert_forward.1} parent=5 // pred_region
        %s577 = ssub.s32 %s29, 1
        %p578 = scmp.lt.s32.totalorder %s34, 1
        %s579 = scalar_select %p578, %s34, 1
        %s580 = smul.addr %s579, 8
        %s581 = scalar_lea.vmem %s0, %s580
        %p582 = pneg %p55
        %p583 = pneg %p52
        %p584 = scmp.lt.s32.totalorder %s34, 1
        %s585 = scalar_select %p584, %s34, 1
        %s586 = scalar_lea.vmem %s1, %s585
        %p587 = pneg %p81
        %p588 = pneg %p78
        %p589 = pneg %p102
        %p590 = pneg %p99
        %p591 = pneg %p123
        %p592 = pneg %p120
        %p593 = pneg %p144
        %p594 = pneg %p141
        %p595 = pneg %p165
        %p596 = pneg %p162
        %p597 = pneg %p186
        %p598 = pneg %p183
        %p599 = pneg %p207
        %p600 = pneg %p204
        %p601 = pneg %p228
        %p602 = pneg %p225
        %p603 = pneg %p249
        %p604 = pneg %p246
        %p605 = pneg %p270
        %p606 = pneg %p267
        %p607 = pneg %p291
        %p608 = pneg %p288
        %p609 = pneg %p312
        %p610 = pneg %p309
        %p611 = pneg %p333
        %p612 = pneg %p330
        %p613 = pneg %p354
        %p614 = pneg %p351
        %p615 = pneg %p375
        %p616 = pneg %p372
        %p617 = pneg %p396
        %p618 = pneg %p393
        %p619 = pneg %p417
        %p620 = pneg %p414
        %p621 = pneg %p438
        %p622 = pneg %p435
        %p623 = pneg %p459
        %p624 = pneg %p456
        %p625 = pneg %p485
        %p626 = pneg %p482
        %s627 = sand.u32 %s472, 1
        %s628 = scalar_lea.sflag [#allocation3], %s627
        %s629 = sand.u32 %s472, 1
        %s630 = scalar_lea.vmem [#allocation2], %s629
        %p631 = scmp.lt.s32.totalorder %s34, 1
        %s632 = scalar_select %p631, %s34, 1
        %s633 = smul.addr %s632, 8
        %s634 = scalar_lea.vmem %s0, %s633
        %p635 = scmp.lt.s32.totalorder %s34, 1
        %s636 = scalar_select %p635, %s34, 1
        %s637 = scalar_lea.vmem %s1, %s636
        %v638 = vld [vmem:[%s634] sm:$0xff]
        %v639 = vld [vmem:[%s637] sm:$0x1]
        %v640 = vld [vmem:[%s2] sm:$0x1]
        %v641 = vld [vmem:[%s3] sm:$0x1]
        %vm642 = vcmask 261120
        %v643 = vsel %vm642, %v638, 0.0
        %644 = vadd.xlane.f32.xlu0 %v643
        %v645 = vpop.xlane.xlu0 %644
        %v646 = vrcp.pop 32.0
        %v647 = vmul.f32 %v645, %v646
        %v648 = vsub.f32 %v638, %v647
        %v649 = vmul.f32 %v648, %v648
        %v650 = vsel %vm642, %v649, 0.0
        %651 = vadd.xlane.f32.xlu0 %v650
        %v652 = vpop.xlane.xlu0 %651
        %v653 = vmul.f32 %v652, %v646
        %v654 = vadd.f32 %v653, 1e-12
        %v655 = vrsqrt.pop %v654
        %v656 = vmul.f32 %v648, %v655
        %v658 = vlaneseq
        %v659 = vshrl.u32 %v658, 7
        %v660 = vsub.s32 0, %v659
        %v661 = vrot.slane %v640, %v660
        %v663 = vmul.f32 %v656, %v661
        %v665 = vlaneseq
        %v666 = vshrl.u32 %v665, 7
        %v667 = vsub.s32 0, %v666
        %v668 = vrot.slane %v641, %v667
        %v670 = vadd.f32 %v663, %v668
        %v671 = vld [vmem:[%s4] sm:$0xff]
        %v672 = vld [vmem:[%s4 + $0x8] sm:$0xff]
        %v673 = vld [vmem:[%s4 + $0x10] sm:$0xff]
        %v674 = vld [vmem:[%s4 + $0x18] sm:$0xff]
        %v675 = vld [vmem:[%s5] sm:$0x1]
        %v677 = vlaneseq
        %v678 = vshrl.u32 %v677, 7
        %v679 = vsub.s32 0, %v678
        %v680 = vrot.slane %v675, %v679
        %v683 = vsel %vm642, %v670, 0
        %685 = vmatprep.subr.mxu0 0.0
        %686 = vmatpush1.msra.mxu0 %v671
        %687 = vmatprep.subr.mxu0 0.0
        %688 = vmatpush1.msra.mxu0 %v672
        %689 = vmatprep.subr.mxu0 0.0
        %690 = vmatpush1.msra.mxu0 %v673
        %691 = vmatprep.subr.mxu0 0.0
        %692 = vmatpush1.msra.mxu0 %v674
        %693 = vmatprep.subr.mxu0 0.0
        %694 = vmatpush1.msra.mxu0 0.0
        %695 = vmatprep.subr.mxu0 0.0
        %696 = vmatpush1.msra.mxu0 0.0
        %697 = vmatprep.subr.mxu0 0.0
        %698 = vmatpush1.msra.mxu0 0.0
        %699 = vmatprep.subr.mxu0 0.0
        %700 = vmatpush1.msra.mxu0 0.0
        %701 = vmatprep.subr.mxu0 0.0
        %702 = vmatpush1.msra.mxu0 0.0
        %703 = vmatprep.subr.mxu0 0.0
        %704 = vmatpush1.msra.mxu0 0.0
        %705 = vmatprep.subr.mxu0 0.0
        %706 = vmatpush1.msra.mxu0 0.0
        %707 = vmatprep.subr.mxu0 0.0
        %708 = vmatpush1.msra.mxu0 0.0
        %709 = vmatprep.subr.mxu0 0.0
        %710 = vmatpush1.msra.mxu0 0.0
        %711 = vmatprep.subr.mxu0 0.0
        %712 = vmatpush1.msra.mxu0 0.0
        %713 = vmatprep.subr.mxu0 0.0
        %714 = vmatpush1.msra.mxu0 0.0
        %715 = vmatprep.subr.mxu0 0.0
        %716 = vmatpush1.msra.mxu0 0.0
        %717 = vmatprep.subr.mxu0 0.0
        %718 = vmatpush1.msra.mxu0 0.0
        %719 = vmatprep.subr.mxu0 0.0
        %720 = vmatpush1.msra.mxu0 0.0
        %721 = vmatprep.subr.mxu0 0.0
        %722 = vmatpush1.msra.mxu0 0.0
        %723 = vmatprep.subr.mxu0 0.0
        %724 = vmatpush1.msra.mxu0 0.0
        %725 = vmatprep.subr.mxu0 0.0
        %726 = vmatpush1.msra.mxu0 0.0
        %727 = vmatprep.subr.mxu0 0.0
        %728 = vmatpush1.msra.mxu0 0.0
        %729 = vmatprep.subr.mxu0 0.0
        %730 = vmatpush1.msra.mxu0 0.0
        %731 = vmatprep.subr.mxu0 0.0
        %732 = vmatpush1.msra.mxu0 0.0
        %733 = vmatprep.subr.mxu0 0.0
        %734 = vmatpush1.msra.mxu0 0.0
        %735 = vmatprep.subr.mxu0 0.0
        %736 = vmatpush1.msra.mxu0 0.0
        %737 = vmatprep.subr.mxu0 0.0
        %738 = vmatpush1.msra.mxu0 0.0
        %739 = vmatprep.subr.mxu0 0.0
        %740 = vmatpush1.msra.mxu0 0.0
        %741 = vmatprep.subr.mxu0 0.0
        %742 = vmatpush1.msra.mxu0 0.0
        %743 = vmatprep.subr.mxu0 0.0
        %744 = vmatpush1.msra.mxu0 0.0
        %745 = vmatprep.subr.mxu0 0.0
        %746 = vmatpush1.msra.mxu0 0.0
        %747 = vmatprep.subr.mxu0 0.0
        %748 = vmatpush1.msra.mxu0 0.0
        %749 = vmatprep.mubr.f32.mxu0 0.0
        %750 = vmatmul.mubr.f32.gmra.mrb[0].mxu0 %v683
        %v751 = vpop.f32.mrb[0].mxu0
        %v752 = vadd.f32 %v680, %v751
        %v753 = vpop.f32.mrb[0].mxu0
        %754 = vdwg.mxu0
        %v755 = vld [vmem:[%s6] sm:$0xff]
        %v756 = vld [vmem:[%s6 + $0x8] sm:$0xff]
        %v757 = vld [vmem:[%s6 + $0x10] sm:$0xff]
        %v758 = vld [vmem:[%s6 + $0x18] sm:$0xff]
        %760 = vrot.lane.b32.xlu0 %v752, 96
        %v761 = vpop.permute.xlu0 %760
        %vm762 = vcmask 64512
        %v763 = vsel %vm762, %v752, 0
        %v765 = vsel %vm762, %v761, 0
        %767 = vmatprep.subr.mxu0 0.0
        %768 = vmatpush1.xpose.msra.mxu0 %v765
        %769 = vmatprep.subr.mxu0 0.0
        %770 = vmatpush1.xpose.msra.mxu0 0.0
        %771 = vmatprep.subr.mxu0 0.0
        %772 = vmatpush1.xpose.msra.mxu0 0.0
        %773 = vmatprep.subr.mxu0 0.0
        %774 = vmatpush1.xpose.msra.mxu0 0.0
        %775 = vmatprep.subr.mxu0 0.0
        %776 = vmatpush1.xpose.msra.mxu0 0.0
        %777 = vmatprep.subr.mxu0 0.0
        %778 = vmatpush1.xpose.msra.mxu0 0.0
        %779 = vmatprep.subr.mxu0 0.0
        %780 = vmatpush1.xpose.msra.mxu0 0.0
        %781 = vmatprep.subr.mxu0 0.0
        %782 = vmatpush1.xpose.msra.mxu0 0.0
        %783 = vmatprep.subr.mxu0 0.0
        %784 = vmatpush1.xpose.msra.mxu0 0.0
        %785 = vmatprep.subr.mxu0 0.0
        %786 = vmatpush1.xpose.msra.mxu0 0.0
        %787 = vmatprep.subr.mxu0 0.0
        %788 = vmatpush1.xpose.msra.mxu0 0.0
        %789 = vmatprep.subr.mxu0 0.0
        %790 = vmatpush1.xpose.msra.mxu0 0.0
        %791 = vmatprep.subr.mxu0 0.0
        %792 = vmatpush1.xpose.msra.mxu0 0.0
        %793 = vmatprep.subr.mxu0 0.0
        %794 = vmatpush1.xpose.msra.mxu0 0.0
        %795 = vmatprep.subr.mxu0 0.0
        %796 = vmatpush1.xpose.msra.mxu0 0.0
        %797 = vmatprep.subr.mxu0 0.0
        %798 = vmatpush1.xpose.msra.mxu0 0.0
        %799 = vmatprep.subr.mxu0 0.0
        %800 = vmatpush1.xpose.msra.mxu0 0.0
        %801 = vmatprep.subr.mxu0 0.0
        %802 = vmatpush1.xpose.msra.mxu0 0.0
        %803 = vmatprep.subr.mxu0 0.0
        %804 = vmatpush1.xpose.msra.mxu0 0.0
        %805 = vmatprep.subr.mxu0 0.0
        %806 = vmatpush1.xpose.msra.mxu0 0.0
        %807 = vmatprep.subr.mxu0 0.0
        %808 = vmatpush1.xpose.msra.mxu0 0.0
        %809 = vmatprep.subr.mxu0 0.0
        %810 = vmatpush1.xpose.msra.mxu0 0.0
        %811 = vmatprep.subr.mxu0 0.0
        %812 = vmatpush1.xpose.msra.mxu0 0.0
        %813 = vmatprep.subr.mxu0 0.0
        %814 = vmatpush1.xpose.msra.mxu0 0.0
        %815 = vmatprep.subr.mxu0 0.0
        %816 = vmatpush1.xpose.msra.mxu0 0.0
        %817 = vmatprep.subr.mxu0 0.0
        %818 = vmatpush1.xpose.msra.mxu0 0.0
        %819 = vmatprep.subr.mxu0 0.0
        %820 = vmatpush1.xpose.msra.mxu0 0.0
        %821 = vmatprep.subr.mxu0 0.0
        %822 = vmatpush1.xpose.msra.mxu0 0.0
        %823 = vmatprep.subr.mxu0 0.0
        %824 = vmatpush1.xpose.msra.mxu0 0.0
        %825 = vmatprep.subr.mxu0 0.0
        %826 = vmatpush1.xpose.msra.mxu0 0.0
        %827 = vmatprep.subr.mxu0 0.0
        %828 = vmatpush1.xpose.msra.mxu0 0.0
        %829 = vmatprep.subr.mxu0 0.0
        %830 = vmatpush1.xpose.msra.mxu0 0.0
        %831 = vmatprep.mubr.f32.mxu0 0.0
        %832 = vmatmul.mubr.f32.gmra.mrb[0].mxu0 %v763
        %v833 = vpop.f32.mrb[0].mxu0
        %v834 = vadd.f32 0.0, %v833
        %v835 = vpop.f32.mrb[0].mxu0
        %836 = vdwg.mxu0
        %v837 = vmul.f32 %v834, 0.35355338
        %v839 = vlaneseq
        %v840 = vshrl.u32 %v839, 7
        %v841 = vsub.s32 0, %v840
        %v842 = vrot.slane %v639, %v841
        %v844 = vadd.f32 %v837, %v842
        %v845 = vsel %vm762, %v844, -inf
        %846 = vmax.xlane.f32.xlu0 %v845
        %v847 = vpop.xlane.xlu0 %846
        %v848 = vsub.f32 %v844, %v847
        %v849 = vmul.f32 %v848, 1.442695
        %v850 = vpow.pop %v849
        %v851 = vsel %vm762, %v850, 0.0
        %852 = vadd.xlane.f32.xlu0 %v851
        %v853 = vpop.xlane.xlu0 %852
        %v854 = vrcp.pop %v853
        %v855 = vmul.f32 %v850, %v854
        %856 = vrot.lane.b32.xlu0 %v752, 64
        %v857 = vpop.permute.xlu0 %856
        %v860 = vsel %vm762, %v855, 0
        %862 = vmatprep.subr.mxu0 0.0
        %863 = vmatpush1.msra.mxu0 %v857
        %864 = vmatprep.subr.mxu0 0.0
        %865 = vmatpush1.msra.mxu0 0.0
        %866 = vmatprep.subr.mxu0 0.0
        %867 = vmatpush1.msra.mxu0 0.0
        %868 = vmatprep.subr.mxu0 0.0
        %869 = vmatpush1.msra.mxu0 0.0
        %870 = vmatprep.subr.mxu0 0.0
        %871 = vmatpush1.msra.mxu0 0.0
        %872 = vmatprep.subr.mxu0 0.0
        %873 = vmatpush1.msra.mxu0 0.0
        %874 = vmatprep.subr.mxu0 0.0
        %875 = vmatpush1.msra.mxu0 0.0
        %876 = vmatprep.subr.mxu0 0.0
        %877 = vmatpush1.msra.mxu0 0.0
        %878 = vmatprep.subr.mxu0 0.0
        %879 = vmatpush1.msra.mxu0 0.0
        %880 = vmatprep.subr.mxu0 0.0
        %881 = vmatpush1.msra.mxu0 0.0
        %882 = vmatprep.subr.mxu0 0.0
        %883 = vmatpush1.msra.mxu0 0.0
        %884 = vmatprep.subr.mxu0 0.0
        %885 = vmatpush1.msra.mxu0 0.0
        %886 = vmatprep.subr.mxu0 0.0
        %887 = vmatpush1.msra.mxu0 0.0
        %888 = vmatprep.subr.mxu0 0.0
        %889 = vmatpush1.msra.mxu0 0.0
        %890 = vmatprep.subr.mxu0 0.0
        %891 = vmatpush1.msra.mxu0 0.0
        %892 = vmatprep.subr.mxu0 0.0
        %893 = vmatpush1.msra.mxu0 0.0
        %894 = vmatprep.subr.mxu0 0.0
        %895 = vmatpush1.msra.mxu0 0.0
        %896 = vmatprep.subr.mxu0 0.0
        %897 = vmatpush1.msra.mxu0 0.0
        %898 = vmatprep.subr.mxu0 0.0
        %899 = vmatpush1.msra.mxu0 0.0
        %900 = vmatprep.subr.mxu0 0.0
        %901 = vmatpush1.msra.mxu0 0.0
        %902 = vmatprep.subr.mxu0 0.0
        %903 = vmatpush1.msra.mxu0 0.0
        %904 = vmatprep.subr.mxu0 0.0
        %905 = vmatpush1.msra.mxu0 0.0
        %906 = vmatprep.subr.mxu0 0.0
        %907 = vmatpush1.msra.mxu0 0.0
        %908 = vmatprep.subr.mxu0 0.0
        %909 = vmatpush1.msra.mxu0 0.0
        %910 = vmatprep.subr.mxu0 0.0
        %911 = vmatpush1.msra.mxu0 0.0
        %912 = vmatprep.subr.mxu0 0.0
        %913 = vmatpush1.msra.mxu0 0.0
        %914 = vmatprep.subr.mxu0 0.0
        %915 = vmatpush1.msra.mxu0 0.0
        %916 = vmatprep.subr.mxu0 0.0
        %917 = vmatpush1.msra.mxu0 0.0
        %918 = vmatprep.subr.mxu0 0.0
        %919 = vmatpush1.msra.mxu0 0.0
        %920 = vmatprep.subr.mxu0 0.0
        %921 = vmatpush1.msra.mxu0 0.0
        %922 = vmatprep.subr.mxu0 0.0
        %923 = vmatpush1.msra.mxu0 0.0
        %924 = vmatprep.subr.mxu0 0.0
        %925 = vmatpush1.msra.mxu0 0.0
        %926 = vmatprep.mubr.f32.mxu0 0.0
        %927 = vmatmul.mubr.f32.gmra.mrb[0].mxu0 %v860
        %v928 = vpop.f32.mrb[0].mxu0
        %v929 = vadd.f32 0.0, %v928
        %v930 = vpop.f32.mrb[0].mxu0
        %931 = vdwg.mxu0
        %932 = vrot.lane.b32.xlu0 %v752, 120
        %v933 = vpop.permute.xlu0 %932
        %934 = vrot.lane.b32.xlu0 %v752, 88
        %v935 = vpop.permute.xlu0 %934
        %v936 = vsel %vm762, %v933, 0
        %v938 = vsel %vm762, %v935, 0
        %940 = vmatprep.subr.mxu0 0.0
        %941 = vmatpush1.xpose.msra.mxu0 %v938
        %942 = vmatprep.subr.mxu0 0.0
        %943 = vmatpush1.xpose.msra.mxu0 0.0
        %944 = vmatprep.subr.mxu0 0.0
        %945 = vmatpush1.xpose.msra.mxu0 0.0
        %946 = vmatprep.subr.mxu0 0.0
        %947 = vmatpush1.xpose.msra.mxu0 0.0
        %948 = vmatprep.subr.mxu0 0.0
        %949 = vmatpush1.xpose.msra.mxu0 0.0
        %950 = vmatprep.subr.mxu0 0.0
        %951 = vmatpush1.xpose.msra.mxu0 0.0
        %952 = vmatprep.subr.mxu0 0.0
        %953 = vmatpush1.xpose.msra.mxu0 0.0
        %954 = vmatprep.subr.mxu0 0.0
        %955 = vmatpush1.xpose.msra.mxu0 0.0
        %956 = vmatprep.subr.mxu0 0.0
        %957 = vmatpush1.xpose.msra.mxu0 0.0
        %958 = vmatprep.subr.mxu0 0.0
        %959 = vmatpush1.xpose.msra.mxu0 0.0
        %960 = vmatprep.subr.mxu0 0.0
        %961 = vmatpush1.xpose.msra.mxu0 0.0
        %962 = vmatprep.subr.mxu0 0.0
        %963 = vmatpush1.xpose.msra.mxu0 0.0
        %964 = vmatprep.subr.mxu0 0.0
        %965 = vmatpush1.xpose.msra.mxu0 0.0
        %966 = vmatprep.subr.mxu0 0.0
        %967 = vmatpush1.xpose.msra.mxu0 0.0
        %968 = vmatprep.subr.mxu0 0.0
        %969 = vmatpush1.xpose.msra.mxu0 0.0
        %970 = vmatprep.subr.mxu0 0.0
        %971 = vmatpush1.xpose.msra.mxu0 0.0
        %972 = vmatprep.subr.mxu0 0.0
        %973 = vmatpush1.xpose.msra.mxu0 0.0
        %974 = vmatprep.subr.mxu0 0.0
        %975 = vmatpush1.xpose.msra.mxu0 0.0
        %976 = vmatprep.subr.mxu0 0.0
        %977 = vmatpush1.xpose.msra.mxu0 0.0
        %978 = vmatprep.subr.mxu0 0.0
        %979 = vmatpush1.xpose.msra.mxu0 0.0
        %980 = vmatprep.subr.mxu0 0.0
        %981 = vmatpush1.xpose.msra.mxu0 0.0
        %982 = vmatprep.subr.mxu0 0.0
        %983 = vmatpush1.xpose.msra.mxu0 0.0
        %984 = vmatprep.subr.mxu0 0.0
        %985 = vmatpush1.xpose.msra.mxu0 0.0
        %986 = vmatprep.subr.mxu0 0.0
        %987 = vmatpush1.xpose.msra.mxu0 0.0
        %988 = vmatprep.subr.mxu0 0.0
        %989 = vmatpush1.xpose.msra.mxu0 0.0
        %990 = vmatprep.subr.mxu0 0.0
        %991 = vmatpush1.xpose.msra.mxu0 0.0
        %992 = vmatprep.subr.mxu0 0.0
        %993 = vmatpush1.xpose.msra.mxu0 0.0
        %994 = vmatprep.subr.mxu0 0.0
        %995 = vmatpush1.xpose.msra.mxu0 0.0
        %996 = vmatprep.subr.mxu0 0.0
        %997 = vmatpush1.xpose.msra.mxu0 0.0
        %998 = vmatprep.subr.mxu0 0.0
        %999 = vmatpush1.xpose.msra.mxu0 0.0
        %1000 = vmatprep.subr.mxu0 0.0
        %1001 = vmatpush1.xpose.msra.mxu0 0.0
        %1002 = vmatprep.subr.mxu0 0.0
        %1003 = vmatpush1.xpose.msra.mxu0 0.0
        %1004 = vmatprep.mubr.f32.mxu0 0.0
        %1005 = vmatmul.mubr.f32.gmra.mrb[0].mxu0 %v936
        %v1006 = vpop.f32.mrb[0].mxu0
        %v1007 = vadd.f32 0.0, %v1006
        %v1008 = vpop.f32.mrb[0].mxu0
        %1009 = vdwg.mxu0
        %v1010 = vmul.f32 %v1007, 0.35355338
        %v1011 = vadd.f32 %v1010, %v842
        %v1012 = vsel %vm762, %v1011, -inf
        %1013 = vmax.xlane.f32.xlu0 %v1012
        %v1014 = vpop.xlane.xlu0 %1013
        %v1015 = vsub.f32 %v1011, %v1014
        %v1016 = vmul.f32 %v1015, 1.442695
        %v1017 = vpow.pop %v1016
        %v1018 = vsel %vm762, %v1017, 0.0
        %1019 = vadd.xlane.f32.xlu0 %v1018
        %v1020 = vpop.xlane.xlu0 %1019
        %v1021 = vrcp.pop %v1020
        %v1022 = vmul.f32 %v1017, %v1021
        %1023 = vrot.lane.b32.xlu0 %v752, 56
        %v1024 = vpop.permute.xlu0 %1023
        %v1027 = vsel %vm762, %v1022, 0
        %1029 = vmatprep.subr.mxu0 0.0
        %1030 = vmatpush1.msra.mxu0 %v1024
        %1031 = vmatprep.subr.mxu0 0.0
        %1032 = vmatpush1.msra.mxu0 0.0
        %1033 = vmatprep.subr.mxu0 0.0
        %1034 = vmatpush1.msra.mxu0 0.0
        %1035 = vmatprep.subr.mxu0 0.0
        %1036 = vmatpush1.msra.mxu0 0.0
        %1037 = vmatprep.subr.mxu0 0.0
        %1038 = vmatpush1.msra.mxu0 0.0
        %1039 = vmatprep.subr.mxu0 0.0
        %1040 = vmatpush1.msra.mxu0 0.0
        %1041 = vmatprep.subr.mxu0 0.0
        %1042 = vmatpush1.msra.mxu0 0.0
        %1043 = vmatprep.subr.mxu0 0.0
        %1044 = vmatpush1.msra.mxu0 0.0
        %1045 = vmatprep.subr.mxu0 0.0
        %1046 = vmatpush1.msra.mxu0 0.0
        %1047 = vmatprep.subr.mxu0 0.0
        %1048 = vmatpush1.msra.mxu0 0.0
        %1049 = vmatprep.subr.mxu0 0.0
        %1050 = vmatpush1.msra.mxu0 0.0
        %1051 = vmatprep.subr.mxu0 0.0
        %1052 = vmatpush1.msra.mxu0 0.0
        %1053 = vmatprep.subr.mxu0 0.0
        %1054 = vmatpush1.msra.mxu0 0.0
        %1055 = vmatprep.subr.mxu0 0.0
        %1056 = vmatpush1.msra.mxu0 0.0
        %1057 = vmatprep.subr.mxu0 0.0
        %1058 = vmatpush1.msra.mxu0 0.0
        %1059 = vmatprep.subr.mxu0 0.0
        %1060 = vmatpush1.msra.mxu0 0.0
        %1061 = vmatprep.subr.mxu0 0.0
        %1062 = vmatpush1.msra.mxu0 0.0
        %1063 = vmatprep.subr.mxu0 0.0
        %1064 = vmatpush1.msra.mxu0 0.0
        %1065 = vmatprep.subr.mxu0 0.0
        %1066 = vmatpush1.msra.mxu0 0.0
        %1067 = vmatprep.subr.mxu0 0.0
        %1068 = vmatpush1.msra.mxu0 0.0
        %1069 = vmatprep.subr.mxu0 0.0
        %1070 = vmatpush1.msra.mxu0 0.0
        %1071 = vmatprep.subr.mxu0 0.0
        %1072 = vmatpush1.msra.mxu0 0.0
        %1073 = vmatprep.subr.mxu0 0.0
        %1074 = vmatpush1.msra.mxu0 0.0
        %1075 = vmatprep.subr.mxu0 0.0
        %1076 = vmatpush1.msra.mxu0 0.0
        %1077 = vmatprep.subr.mxu0 0.0
        %1078 = vmatpush1.msra.mxu0 0.0
        %1079 = vmatprep.subr.mxu0 0.0
        %1080 = vmatpush1.msra.mxu0 0.0
        %1081 = vmatprep.subr.mxu0 0.0
        %1082 = vmatpush1.msra.mxu0 0.0
        %1083 = vmatprep.subr.mxu0 0.0
        %1084 = vmatpush1.msra.mxu0 0.0
        %1085 = vmatprep.subr.mxu0 0.0
        %1086 = vmatpush1.msra.mxu0 0.0
        %1087 = vmatprep.subr.mxu0 0.0
        %1088 = vmatpush1.msra.mxu0 0.0
        %1089 = vmatprep.subr.mxu0 0.0
        %1090 = vmatpush1.msra.mxu0 0.0
        %1091 = vmatprep.subr.mxu0 0.0
        %1092 = vmatpush1.msra.mxu0 0.0
        %1093 = vmatprep.mubr.f32.mxu0 0.0
        %1094 = vmatmul.mubr.f32.gmra.mrb[0].mxu0 %v1027
        %v1095 = vpop.f32.mrb[0].mxu0
        %v1096 = vadd.f32 0.0, %v1095
        %v1097 = vpop.f32.mrb[0].mxu0
        %1098 = vdwg.mxu0
        %v1100 = vsel %vm762, %v1096, 0
        %1102 = vmatprep.subr.mxu0 0.0
        %1103 = vmatpush1.msra.mxu0 %v756
        %1104 = vmatprep.subr.mxu0 0.0
        %1105 = vmatpush1.msra.mxu0 0.0
        %1106 = vmatprep.subr.mxu0 0.0
        %1107 = vmatpush1.msra.mxu0 0.0
        %1108 = vmatprep.subr.mxu0 0.0
        %1109 = vmatpush1.msra.mxu0 0.0
        %1110 = vmatprep.subr.mxu0 0.0
        %1111 = vmatpush1.msra.mxu0 0.0
        %1112 = vmatprep.subr.mxu0 0.0
        %1113 = vmatpush1.msra.mxu0 0.0
        %1114 = vmatprep.subr.mxu0 0.0
        %1115 = vmatpush1.msra.mxu0 0.0
        %1116 = vmatprep.subr.mxu0 0.0
        %1117 = vmatpush1.msra.mxu0 0.0
        %1118 = vmatprep.subr.mxu0 0.0
        %1119 = vmatpush1.msra.mxu0 0.0
        %1120 = vmatprep.subr.mxu0 0.0
        %1121 = vmatpush1.msra.mxu0 0.0
        %1122 = vmatprep.subr.mxu0 0.0
        %1123 = vmatpush1.msra.mxu0 0.0
        %1124 = vmatprep.subr.mxu0 0.0
        %1125 = vmatpush1.msra.mxu0 0.0
        %1126 = vmatprep.subr.mxu0 0.0
        %1127 = vmatpush1.msra.mxu0 0.0
        %1128 = vmatprep.subr.mxu0 0.0
        %1129 = vmatpush1.msra.mxu0 0.0
        %1130 = vmatprep.subr.mxu0 0.0
        %1131 = vmatpush1.msra.mxu0 0.0
        %1132 = vmatprep.subr.mxu0 0.0
        %1133 = vmatpush1.msra.mxu0 0.0
        %1134 = vmatprep.subr.mxu0 0.0
        %1135 = vmatpush1.msra.mxu0 0.0
        %1136 = vmatprep.subr.mxu0 0.0
        %1137 = vmatpush1.msra.mxu0 0.0
        %1138 = vmatprep.subr.mxu0 0.0
        %1139 = vmatpush1.msra.mxu0 0.0
        %1140 = vmatprep.subr.mxu0 0.0
        %1141 = vmatpush1.msra.mxu0 0.0
        %1142 = vmatprep.subr.mxu0 0.0
        %1143 = vmatpush1.msra.mxu0 0.0
        %1144 = vmatprep.subr.mxu0 0.0
        %1145 = vmatpush1.msra.mxu0 0.0
        %1146 = vmatprep.subr.mxu0 0.0
        %1147 = vmatpush1.msra.mxu0 0.0
        %1148 = vmatprep.subr.mxu0 0.0
        %1149 = vmatpush1.msra.mxu0 0.0
        %1150 = vmatprep.subr.mxu0 0.0
        %1151 = vmatpush1.msra.mxu0 0.0
        %1152 = vmatprep.subr.mxu0 0.0
        %1153 = vmatpush1.msra.mxu0 0.0
        %1154 = vmatprep.subr.mxu0 0.0
        %1155 = vmatpush1.msra.mxu0 0.0
        %1156 = vmatprep.subr.mxu0 0.0
        %1157 = vmatpush1.msra.mxu0 0.0
        %1158 = vmatprep.subr.mxu0 0.0
        %1159 = vmatpush1.msra.mxu0 0.0
        %1160 = vmatprep.subr.mxu0 0.0
        %1161 = vmatpush1.msra.mxu0 0.0
        %1162 = vmatprep.subr.mxu0 0.0
        %1163 = vmatpush1.msra.mxu0 0.0
        %1164 = vmatprep.subr.mxu0 0.0
        %1165 = vmatpush1.msra.mxu0 0.0
        %1166 = vmatprep.mubr.f32.mxu0 0.0
        %1167 = vmatmul.mubr.f32.gmra.mrb[0].mxu0 %v1100
        %v1168 = vpop.f32.mrb[0].mxu0
        %v1169 = vadd.f32 0.0, %v1168
        %v1170 = vpop.f32.mrb[0].mxu0
        %1171 = vdwg.mxu0
        %v1173 = vsel %vm762, %v929, 0
        %1175 = vmatprep.subr.mxu0 0.0
        %1176 = vmatpush1.msra.mxu0 %v755
        %1177 = vmatprep.subr.mxu0 0.0
        %1178 = vmatpush1.msra.mxu0 0.0
        %1179 = vmatprep.subr.mxu0 0.0
        %1180 = vmatpush1.msra.mxu0 0.0
        %1181 = vmatprep.subr.mxu0 0.0
        %1182 = vmatpush1.msra.mxu0 0.0
        %1183 = vmatprep.subr.mxu0 0.0
        %1184 = vmatpush1.msra.mxu0 0.0
        %1185 = vmatprep.subr.mxu0 0.0
        %1186 = vmatpush1.msra.mxu0 0.0
        %1187 = vmatprep.subr.mxu0 0.0
        %1188 = vmatpush1.msra.mxu0 0.0
        %1189 = vmatprep.subr.mxu0 0.0
        %1190 = vmatpush1.msra.mxu0 0.0
        %1191 = vmatprep.subr.mxu0 0.0
        %1192 = vmatpush1.msra.mxu0 0.0
        %1193 = vmatprep.subr.mxu0 0.0
        %1194 = vmatpush1.msra.mxu0 0.0
        %1195 = vmatprep.subr.mxu0 0.0
        %1196 = vmatpush1.msra.mxu0 0.0
        %1197 = vmatprep.subr.mxu0 0.0
        %1198 = vmatpush1.msra.mxu0 0.0
        %1199 = vmatprep.subr.mxu0 0.0
        %1200 = vmatpush1.msra.mxu0 0.0
        %1201 = vmatprep.subr.mxu0 0.0
        %1202 = vmatpush1.msra.mxu0 0.0
        %1203 = vmatprep.subr.mxu0 0.0
        %1204 = vmatpush1.msra.mxu0 0.0
        %1205 = vmatprep.subr.mxu0 0.0
        %1206 = vmatpush1.msra.mxu0 0.0
        %1207 = vmatprep.subr.mxu0 0.0
        %1208 = vmatpush1.msra.mxu0 0.0
        %1209 = vmatprep.subr.mxu0 0.0
        %1210 = vmatpush1.msra.mxu0 0.0
        %1211 = vmatprep.subr.mxu0 0.0
        %1212 = vmatpush1.msra.mxu0 0.0
        %1213 = vmatprep.subr.mxu0 0.0
        %1214 = vmatpush1.msra.mxu0 0.0
        %1215 = vmatprep.subr.mxu0 0.0
        %1216 = vmatpush1.msra.mxu0 0.0
        %1217 = vmatprep.subr.mxu0 0.0
        %1218 = vmatpush1.msra.mxu0 0.0
        %1219 = vmatprep.subr.mxu0 0.0
        %1220 = vmatpush1.msra.mxu0 0.0
        %1221 = vmatprep.subr.mxu0 0.0
        %1222 = vmatpush1.msra.mxu0 0.0
        %1223 = vmatprep.subr.mxu0 0.0
        %1224 = vmatpush1.msra.mxu0 0.0
        %1225 = vmatprep.subr.mxu0 0.0
        %1226 = vmatpush1.msra.mxu0 0.0
        %1227 = vmatprep.subr.mxu0 0.0
        %1228 = vmatpush1.msra.mxu0 0.0
        %1229 = vmatprep.subr.mxu0 0.0
        %1230 = vmatpush1.msra.mxu0 0.0
        %1231 = vmatprep.subr.mxu0 0.0
        %1232 = vmatpush1.msra.mxu0 0.0
        %1233 = vmatprep.subr.mxu0 0.0
        %1234 = vmatpush1.msra.mxu0 0.0
        %1235 = vmatprep.subr.mxu0 0.0
        %1236 = vmatpush1.msra.mxu0 0.0
        %1237 = vmatprep.subr.mxu0 0.0
        %1238 = vmatpush1.msra.mxu0 0.0
        %1239 = vmatprep.mubr.f32.mxu0 0.0
        %1240 = vmatmul.mubr.f32.gmra.mrb[0].mxu0 %v1173
        %v1241 = vpop.f32.mrb[0].mxu0
        %v1242 = vadd.f32 %v1169, %v1241
        %v1243 = vpop.f32.mrb[0].mxu0
        %1244 = vdwg.mxu0
        %1245 = vrot.lane.b32.xlu0 %v752, 112
        %v1246 = vpop.permute.xlu0 %1245
        %1247 = vrot.lane.b32.xlu0 %v752, 80
        %v1248 = vpop.permute.xlu0 %1247
        %v1249 = vsel %vm762, %v1246, 0
        %v1251 = vsel %vm762, %v1248, 0
        %1253 = vmatprep.subr.mxu0 0.0
        %1254 = vmatpush1.xpose.msra.mxu0 %v1251
        %1255 = vmatprep.subr.mxu0 0.0
        %1256 = vmatpush1.xpose.msra.mxu0 0.0
        %1257 = vmatprep.subr.mxu0 0.0
        %1258 = vmatpush1.xpose.msra.mxu0 0.0
        %1259 = vmatprep.subr.mxu0 0.0
        %1260 = vmatpush1.xpose.msra.mxu0 0.0
        %1261 = vmatprep.subr.mxu0 0.0
        %1262 = vmatpush1.xpose.msra.mxu0 0.0
        %1263 = vmatprep.subr.mxu0 0.0
        %1264 = vmatpush1.xpose.msra.mxu0 0.0
        %1265 = vmatprep.subr.mxu0 0.0
        %1266 = vmatpush1.xpose.msra.mxu0 0.0
        %1267 = vmatprep.subr.mxu0 0.0
        %1268 = vmatpush1.xpose.msra.mxu0 0.0
        %1269 = vmatprep.subr.mxu0 0.0
        %1270 = vmatpush1.xpose.msra.mxu0 0.0
        %1271 = vmatprep.subr.mxu0 0.0
        %1272 = vmatpush1.xpose.msra.mxu0 0.0
        %1273 = vmatprep.subr.mxu0 0.0
        %1274 = vmatpush1.xpose.msra.mxu0 0.0
        %1275 = vmatprep.subr.mxu0 0.0
        %1276 = vmatpush1.xpose.msra.mxu0 0.0
        %1277 = vmatprep.subr.mxu0 0.0
        %1278 = vmatpush1.xpose.msra.mxu0 0.0
        %1279 = vmatprep.subr.mxu0 0.0
        %1280 = vmatpush1.xpose.msra.mxu0 0.0
        %1281 = vmatprep.subr.mxu0 0.0
        %1282 = vmatpush1.xpose.msra.mxu0 0.0
        %1283 = vmatprep.subr.mxu0 0.0
        %1284 = vmatpush1.xpose.msra.mxu0 0.0
        %1285 = vmatprep.subr.mxu0 0.0
        %1286 = vmatpush1.xpose.msra.mxu0 0.0
        %1287 = vmatprep.subr.mxu0 0.0
        %1288 = vmatpush1.xpose.msra.mxu0 0.0
        %1289 = vmatprep.subr.mxu0 0.0
        %1290 = vmatpush1.xpose.msra.mxu0 0.0
        %1291 = vmatprep.subr.mxu0 0.0
        %1292 = vmatpush1.xpose.msra.mxu0 0.0
        %1293 = vmatprep.subr.mxu0 0.0
        %1294 = vmatpush1.xpose.msra.mxu0 0.0
        %1295 = vmatprep.subr.mxu0 0.0
        %1296 = vmatpush1.xpose.msra.mxu0 0.0
        %1297 = vmatprep.subr.mxu0 0.0
        %1298 = vmatpush1.xpose.msra.mxu0 0.0
        %1299 = vmatprep.subr.mxu0 0.0
        %1300 = vmatpush1.xpose.msra.mxu0 0.0
        %1301 = vmatprep.subr.mxu0 0.0
        %1302 = vmatpush1.xpose.msra.mxu0 0.0
        %1303 = vmatprep.subr.mxu0 0.0
        %1304 = vmatpush1.xpose.msra.mxu0 0.0
        %1305 = vmatprep.subr.mxu0 0.0
        %1306 = vmatpush1.xpose.msra.mxu0 0.0
        %1307 = vmatprep.subr.mxu0 0.0
        %1308 = vmatpush1.xpose.msra.mxu0 0.0
        %1309 = vmatprep.subr.mxu0 0.0
        %1310 = vmatpush1.xpose.msra.mxu0 0.0
        %1311 = vmatprep.subr.mxu0 0.0
        %1312 = vmatpush1.xpose.msra.mxu0 0.0
        %1313 = vmatprep.subr.mxu0 0.0
        %1314 = vmatpush1.xpose.msra.mxu0 0.0
        %1315 = vmatprep.subr.mxu0 0.0
        %1316 = vmatpush1.xpose.msra.mxu0 0.0
        %1317 = vmatprep.mubr.f32.mxu0 0.0
        %1318 = vmatmul.mubr.f32.gmra.mrb[0].mxu0 %v1249
        %v1319 = vpop.f32.mrb[0].mxu0
        %v1320 = vadd.f32 0.0, %v1319
        %v1321 = vpop.f32.mrb[0].mxu0
        %1322 = vdwg.mxu0
        %v1323 = vmul.f32 %v1320, 0.35355338
        %v1324 = vadd.f32 %v1323, %v842
        %v1325 = vsel %vm762, %v1324, -inf
        %1326 = vmax.xlane.f32.xlu0 %v1325
        %v1327 = vpop.xlane.xlu0 %1326
        %v1328 = vsub.f32 %v1324, %v1327
        %v1329 = vmul.f32 %v1328, 1.442695
        %v1330 = vpow.pop %v1329
        %v1331 = vsel %vm762, %v1330, 0.0
        %1332 = vadd.xlane.f32.xlu0 %v1331
        %v1333 = vpop.xlane.xlu0 %1332
        %v1334 = vrcp.pop %v1333
        %v1335 = vmul.f32 %v1330, %v1334
        %1336 = vrot.lane.b32.xlu0 %v752, 48
        %v1337 = vpop.permute.xlu0 %1336
        %v1340 = vsel %vm762, %v1335, 0
        %1342 = vmatprep.subr.mxu0 0.0
        %1343 = vmatpush1.msra.mxu0 %v1337
        %1344 = vmatprep.subr.mxu0 0.0
        %1345 = vmatpush1.msra.mxu0 0.0
        %1346 = vmatprep.subr.mxu0 0.0
        %1347 = vmatpush1.msra.mxu0 0.0
        %1348 = vmatprep.subr.mxu0 0.0
        %1349 = vmatpush1.msra.mxu0 0.0
        %1350 = vmatprep.subr.mxu0 0.0
        %1351 = vmatpush1.msra.mxu0 0.0
        %1352 = vmatprep.subr.mxu0 0.0
        %1353 = vmatpush1.msra.mxu0 0.0
        %1354 = vmatprep.subr.mxu0 0.0
        %1355 = vmatpush1.msra.mxu0 0.0
        %1356 = vmatprep.subr.mxu0 0.0
        %1357 = vmatpush1.msra.mxu0 0.0
        %1358 = vmatprep.subr.mxu0 0.0
        %1359 = vmatpush1.msra.mxu0 0.0
        %1360 = vmatprep.subr.mxu0 0.0
        %1361 = vmatpush1.msra.mxu0 0.0
        %1362 = vmatprep.subr.mxu0 0.0
        %1363 = vmatpush1.msra.mxu0 0.0
        %1364 = vmatprep.subr.mxu0 0.0
        %1365 = vmatpush1.msra.mxu0 0.0
        %1366 = vmatprep.subr.mxu0 0.0
        %1367 = vmatpush1.msra.mxu0 0.0
        %1368 = vmatprep.subr.mxu0 0.0
        %1369 = vmatpush1.msra.mxu0 0.0
        %1370 = vmatprep.subr.mxu0 0.0
        %1371 = vmatpush1.msra.mxu0 0.0
        %1372 = vmatprep.subr.mxu0 0.0
        %1373 = vmatpush1.msra.mxu0 0.0
        %1374 = vmatprep.subr.mxu0 0.0
        %1375 = vmatpush1.msra.mxu0 0.0
        %1376 = vmatprep.subr.mxu0 0.0
        %1377 = vmatpush1.msra.mxu0 0.0
        %1378 = vmatprep.subr.mxu0 0.0
        %1379 = vmatpush1.msra.mxu0 0.0
        %1380 = vmatprep.subr.mxu0 0.0
        %1381 = vmatpush1.msra.mxu0 0.0
        %1382 = vmatprep.subr.mxu0 0.0
        %1383 = vmatpush1.msra.mxu0 0.0
        %1384 = vmatprep.subr.mxu0 0.0
        %1385 = vmatpush1.msra.mxu0 0.0
        %1386 = vmatprep.subr.mxu0 0.0
        %1387 = vmatpush1.msra.mxu0 0.0
        %1388 = vmatprep.subr.mxu0 0.0
        %1389 = vmatpush1.msra.mxu0 0.0
        %1390 = vmatprep.subr.mxu0 0.0
        %1391 = vmatpush1.msra.mxu0 0.0
        %1392 = vmatprep.subr.mxu0 0.0
        %1393 = vmatpush1.msra.mxu0 0.0
        %1394 = vmatprep.subr.mxu0 0.0
        %1395 = vmatpush1.msra.mxu0 0.0
        %1396 = vmatprep.subr.mxu0 0.0
        %1397 = vmatpush1.msra.mxu0 0.0
        %1398 = vmatprep.subr.mxu0 0.0
        %1399 = vmatpush1.msra.mxu0 0.0
        %1400 = vmatprep.subr.mxu0 0.0
        %1401 = vmatpush1.msra.mxu0 0.0
        %1402 = vmatprep.subr.mxu0 0.0
        %1403 = vmatpush1.msra.mxu0 0.0
        %1404 = vmatprep.subr.mxu0 0.0
        %1405 = vmatpush1.msra.mxu0 0.0
        %1406 = vmatprep.mubr.f32.mxu0 0.0
        %1407 = vmatmul.mubr.f32.gmra.mrb[0].mxu0 %v1340
        %v1408 = vpop.f32.mrb[0].mxu0
        %v1409 = vadd.f32 0.0, %v1408
        %v1410 = vpop.f32.mrb[0].mxu0
        %1411 = vdwg.mxu0
        %v1413 = vsel %vm762, %v1409, 0
        %1415 = vmatprep.subr.mxu0 0.0
        %1416 = vmatpush1.msra.mxu0 %v757
        %1417 = vmatprep.subr.mxu0 0.0
        %1418 = vmatpush1.msra.mxu0 0.0
        %1419 = vmatprep.subr.mxu0 0.0
        %1420 = vmatpush1.msra.mxu0 0.0
        %1421 = vmatprep.subr.mxu0 0.0
        %1422 = vmatpush1.msra.mxu0 0.0
        %1423 = vmatprep.subr.mxu0 0.0
        %1424 = vmatpush1.msra.mxu0 0.0
        %1425 = vmatprep.subr.mxu0 0.0
        %1426 = vmatpush1.msra.mxu0 0.0
        %1427 = vmatprep.subr.mxu0 0.0
        %1428 = vmatpush1.msra.mxu0 0.0
        %1429 = vmatprep.subr.mxu0 0.0
        %1430 = vmatpush1.msra.mxu0 0.0
        %1431 = vmatprep.subr.mxu0 0.0
        %1432 = vmatpush1.msra.mxu0 0.0
        %1433 = vmatprep.subr.mxu0 0.0
        %1434 = vmatpush1.msra.mxu0 0.0
        %1435 = vmatprep.subr.mxu0 0.0
        %1436 = vmatpush1.msra.mxu0 0.0
        %1437 = vmatprep.subr.mxu0 0.0
        %1438 = vmatpush1.msra.mxu0 0.0
        %1439 = vmatprep.subr.mxu0 0.0
        %1440 = vmatpush1.msra.mxu0 0.0
        %1441 = vmatprep.subr.mxu0 0.0
        %1442 = vmatpush1.msra.mxu0 0.0
        %1443 = vmatprep.subr.mxu0 0.0
        %1444 = vmatpush1.msra.mxu0 0.0
        %1445 = vmatprep.subr.mxu0 0.0
        %1446 = vmatpush1.msra.mxu0 0.0
        %1447 = vmatprep.subr.mxu0 0.0
        %1448 = vmatpush1.msra.mxu0 0.0
        %1449 = vmatprep.subr.mxu0 0.0
        %1450 = vmatpush1.msra.mxu0 0.0
        %1451 = vmatprep.subr.mxu0 0.0
        %1452 = vmatpush1.msra.mxu0 0.0
        %1453 = vmatprep.subr.mxu0 0.0
        %1454 = vmatpush1.msra.mxu0 0.0
        %1455 = vmatprep.subr.mxu0 0.0
        %1456 = vmatpush1.msra.mxu0 0.0
        %1457 = vmatprep.subr.mxu0 0.0
        %1458 = vmatpush1.msra.mxu0 0.0
        %1459 = vmatprep.subr.mxu0 0.0
        %1460 = vmatpush1.msra.mxu0 0.0
        %1461 = vmatprep.subr.mxu0 0.0
        %1462 = vmatpush1.msra.mxu0 0.0
        %1463 = vmatprep.subr.mxu0 0.0
        %1464 = vmatpush1.msra.mxu0 0.0
        %1465 = vmatprep.subr.mxu0 0.0
        %1466 = vmatpush1.msra.mxu0 0.0
        %1467 = vmatprep.subr.mxu0 0.0
        %1468 = vmatpush1.msra.mxu0 0.0
        %1469 = vmatprep.subr.mxu0 0.0
        %1470 = vmatpush1.msra.mxu0 0.0
        %1471 = vmatprep.subr.mxu0 0.0
        %1472 = vmatpush1.msra.mxu0 0.0
        %1473 = vmatprep.subr.mxu0 0.0
        %1474 = vmatpush1.msra.mxu0 0.0
        %1475 = vmatprep.subr.mxu0 0.0
        %1476 = vmatpush1.msra.mxu0 0.0
        %1477 = vmatprep.subr.mxu0 0.0
        %1478 = vmatpush1.msra.mxu0 0.0
        %1479 = vmatprep.mubr.f32.mxu0 0.0
        %1480 = vmatmul.mubr.f32.gmra.mrb[0].mxu0 %v1413
        %v1481 = vpop.f32.mrb[0].mxu0
        %v1482 = vadd.f32 0.0, %v1481
        %v1483 = vpop.f32.mrb[0].mxu0
        %1484 = vdwg.mxu0
        %v1485 = vadd.f32 %v1242, %v1482
        %1486 = vrot.lane.b32.xlu0 %v752, 104
        %v1487 = vpop.permute.xlu0 %1486
        %1488 = vrot.lane.b32.xlu0 %v752, 72
        %v1489 = vpop.permute.xlu0 %1488
        %v1490 = vsel %vm762, %v1487, 0
        %v1492 = vsel %vm762, %v1489, 0
        %1494 = vmatprep.subr.mxu0 0.0
        %1495 = vmatpush1.xpose.msra.mxu0 %v1492
        %1496 = vmatprep.subr.mxu0 0.0
        %1497 = vmatpush1.xpose.msra.mxu0 0.0
        %1498 = vmatprep.subr.mxu0 0.0
        %1499 = vmatpush1.xpose.msra.mxu0 0.0
        %1500 = vmatprep.subr.mxu0 0.0
        %1501 = vmatpush1.xpose.msra.mxu0 0.0
        %1502 = vmatprep.subr.mxu0 0.0
        %1503 = vmatpush1.xpose.msra.mxu0 0.0
        %1504 = vmatprep.subr.mxu0 0.0
        %1505 = vmatpush1.xpose.msra.mxu0 0.0
        %1506 = vmatprep.subr.mxu0 0.0
        %1507 = vmatpush1.xpose.msra.mxu0 0.0
        %1508 = vmatprep.subr.mxu0 0.0
        %1509 = vmatpush1.xpose.msra.mxu0 0.0
        %1510 = vmatprep.subr.mxu0 0.0
        %1511 = vmatpush1.xpose.msra.mxu0 0.0
        %1512 = vmatprep.subr.mxu0 0.0
        %1513 = vmatpush1.xpose.msra.mxu0 0.0
        %1514 = vmatprep.subr.mxu0 0.0
        %1515 = vmatpush1.xpose.msra.mxu0 0.0
        %1516 = vmatprep.subr.mxu0 0.0
        %1517 = vmatpush1.xpose.msra.mxu0 0.0
        %1518 = vmatprep.subr.mxu0 0.0
        %1519 = vmatpush1.xpose.msra.mxu0 0.0
        %1520 = vmatprep.subr.mxu0 0.0
        %1521 = vmatpush1.xpose.msra.mxu0 0.0
        %1522 = vmatprep.subr.mxu0 0.0
        %1523 = vmatpush1.xpose.msra.mxu0 0.0
        %1524 = vmatprep.subr.mxu0 0.0
        %1525 = vmatpush1.xpose.msra.mxu0 0.0
        %1526 = vmatprep.subr.mxu0 0.0
        %1527 = vmatpush1.xpose.msra.mxu0 0.0
        %1528 = vmatprep.subr.mxu0 0.0
        %1529 = vmatpush1.xpose.msra.mxu0 0.0
        %1530 = vmatprep.subr.mxu0 0.0
        %1531 = vmatpush1.xpose.msra.mxu0 0.0
        %1532 = vmatprep.subr.mxu0 0.0
        %1533 = vmatpush1.xpose.msra.mxu0 0.0
        %1534 = vmatprep.subr.mxu0 0.0
        %1535 = vmatpush1.xpose.msra.mxu0 0.0
        %1536 = vmatprep.subr.mxu0 0.0
        %1537 = vmatpush1.xpose.msra.mxu0 0.0
        %1538 = vmatprep.subr.mxu0 0.0
        %1539 = vmatpush1.xpose.msra.mxu0 0.0
        %1540 = vmatprep.subr.mxu0 0.0
        %1541 = vmatpush1.xpose.msra.mxu0 0.0
        %1542 = vmatprep.subr.mxu0 0.0
        %1543 = vmatpush1.xpose.msra.mxu0 0.0
        %1544 = vmatprep.subr.mxu0 0.0
        %1545 = vmatpush1.xpose.msra.mxu0 0.0
        %1546 = vmatprep.subr.mxu0 0.0
        %1547 = vmatpush1.xpose.msra.mxu0 0.0
        %1548 = vmatprep.subr.mxu0 0.0
        %1549 = vmatpush1.xpose.msra.mxu0 0.0
        %1550 = vmatprep.subr.mxu0 0.0
        %1551 = vmatpush1.xpose.msra.mxu0 0.0
        %1552 = vmatprep.subr.mxu0 0.0
        %1553 = vmatpush1.xpose.msra.mxu0 0.0
        %1554 = vmatprep.subr.mxu0 0.0
        %1555 = vmatpush1.xpose.msra.mxu0 0.0
        %1556 = vmatprep.subr.mxu0 0.0
        %1557 = vmatpush1.xpose.msra.mxu0 0.0
        %1558 = vmatprep.mubr.f32.mxu0 0.0
        %1559 = vmatmul.mubr.f32.gmra.mrb[0].mxu0 %v1490
        %v1560 = vpop.f32.mrb[0].mxu0
        %v1561 = vadd.f32 0.0, %v1560
        %v1562 = vpop.f32.mrb[0].mxu0
        %1563 = vdwg.mxu0
        %v1564 = vmul.f32 %v1561, 0.35355338
        %v1565 = vadd.f32 %v1564, %v842
        %v1566 = vsel %vm762, %v1565, -inf
        %1567 = vmax.xlane.f32.xlu0 %v1566
        %v1568 = vpop.xlane.xlu0 %1567
        %v1569 = vsub.f32 %v1565, %v1568
        %v1570 = vmul.f32 %v1569, 1.442695
        %v1571 = vpow.pop %v1570
        %v1572 = vsel %vm762, %v1571, 0.0
        %1573 = vadd.xlane.f32.xlu0 %v1572
        %v1574 = vpop.xlane.xlu0 %1573
        %v1575 = vrcp.pop %v1574
        %v1576 = vmul.f32 %v1571, %v1575
        %1577 = vrot.lane.b32.xlu0 %v752, 40
        %v1578 = vpop.permute.xlu0 %1577
        %v1581 = vsel %vm762, %v1576, 0
        %1583 = vmatprep.subr.mxu0 0.0
        %1584 = vmatpush1.msra.mxu0 %v1578
        %1585 = vmatprep.subr.mxu0 0.0
        %1586 = vmatpush1.msra.mxu0 0.0
        %1587 = vmatprep.subr.mxu0 0.0
        %1588 = vmatpush1.msra.mxu0 0.0
        %1589 = vmatprep.subr.mxu0 0.0
        %1590 = vmatpush1.msra.mxu0 0.0
        %1591 = vmatprep.subr.mxu0 0.0
        %1592 = vmatpush1.msra.mxu0 0.0
        %1593 = vmatprep.subr.mxu0 0.0
        %1594 = vmatpush1.msra.mxu0 0.0
        %1595 = vmatprep.subr.mxu0 0.0
        %1596 = vmatpush1.msra.mxu0 0.0
        %1597 = vmatprep.subr.mxu0 0.0
        %1598 = vmatpush1.msra.mxu0 0.0
        %1599 = vmatprep.subr.mxu0 0.0
        %1600 = vmatpush1.msra.mxu0 0.0
        %1601 = vmatprep.subr.mxu0 0.0
        %1602 = vmatpush1.msra.mxu0 0.0
        %1603 = vmatprep.subr.mxu0 0.0
        %1604 = vmatpush1.msra.mxu0 0.0
        %1605 = vmatprep.subr.mxu0 0.0
        %1606 = vmatpush1.msra.mxu0 0.0
        %1607 = vmatprep.subr.mxu0 0.0
        %1608 = vmatpush1.msra.mxu0 0.0
        %1609 = vmatprep.subr.mxu0 0.0
        %1610 = vmatpush1.msra.mxu0 0.0
        %1611 = vmatprep.subr.mxu0 0.0
        %1612 = vmatpush1.msra.mxu0 0.0
        %1613 = vmatprep.subr.mxu0 0.0
        %1614 = vmatpush1.msra.mxu0 0.0
        %1615 = vmatprep.subr.mxu0 0.0
        %1616 = vmatpush1.msra.mxu0 0.0
        %1617 = vmatprep.subr.mxu0 0.0
        %1618 = vmatpush1.msra.mxu0 0.0
        %1619 = vmatprep.subr.mxu0 0.0
        %1620 = vmatpush1.msra.mxu0 0.0
        %1621 = vmatprep.subr.mxu0 0.0
        %1622 = vmatpush1.msra.mxu0 0.0
        %1623 = vmatprep.subr.mxu0 0.0
        %1624 = vmatpush1.msra.mxu0 0.0
        %1625 = vmatprep.subr.mxu0 0.0
        %1626 = vmatpush1.msra.mxu0 0.0
        %1627 = vmatprep.subr.mxu0 0.0
        %1628 = vmatpush1.msra.mxu0 0.0
        %1629 = vmatprep.subr.mxu0 0.0
        %1630 = vmatpush1.msra.mxu0 0.0
        %1631 = vmatprep.subr.mxu0 0.0
        %1632 = vmatpush1.msra.mxu0 0.0
        %1633 = vmatprep.subr.mxu0 0.0
        %1634 = vmatpush1.msra.mxu0 0.0
        %1635 = vmatprep.subr.mxu0 0.0
        %1636 = vmatpush1.msra.mxu0 0.0
        %1637 = vmatprep.subr.mxu0 0.0
        %1638 = vmatpush1.msra.mxu0 0.0
        %1639 = vmatprep.subr.mxu0 0.0
        %1640 = vmatpush1.msra.mxu0 0.0
        %1641 = vmatprep.subr.mxu0 0.0
        %1642 = vmatpush1.msra.mxu0 0.0
        %1643 = vmatprep.subr.mxu0 0.0
        %1644 = vmatpush1.msra.mxu0 0.0
        %1645 = vmatprep.subr.mxu0 0.0
        %1646 = vmatpush1.msra.mxu0 0.0
        %1647 = vmatprep.mubr.f32.mxu0 0.0
        %1648 = vmatmul.mubr.f32.gmra.mrb[0].mxu0 %v1581
        %v1649 = vpop.f32.mrb[0].mxu0
        %v1650 = vadd.f32 0.0, %v1649
        %v1651 = vpop.f32.mrb[0].mxu0
        %1652 = vdwg.mxu0
        %v1654 = vsel %vm762, %v1650, 0
        %1656 = vmatprep.subr.mxu0 0.0
        %1657 = vmatpush1.msra.mxu0 %v758
        %1658 = vmatprep.subr.mxu0 0.0
        %1659 = vmatpush1.msra.mxu0 0.0
        %1660 = vmatprep.subr.mxu0 0.0
        %1661 = vmatpush1.msra.mxu0 0.0
        %1662 = vmatprep.subr.mxu0 0.0
        %1663 = vmatpush1.msra.mxu0 0.0
        %1664 = vmatprep.subr.mxu0 0.0
        %1665 = vmatpush1.msra.mxu0 0.0
        %1666 = vmatprep.subr.mxu0 0.0
        %1667 = vmatpush1.msra.mxu0 0.0
        %1668 = vmatprep.subr.mxu0 0.0
        %1669 = vmatpush1.msra.mxu0 0.0
        %1670 = vmatprep.subr.mxu0 0.0
        %1671 = vmatpush1.msra.mxu0 0.0
        %1672 = vmatprep.subr.mxu0 0.0
        %1673 = vmatpush1.msra.mxu0 0.0
        %1674 = vmatprep.subr.mxu0 0.0
        %1675 = vmatpush1.msra.mxu0 0.0
        %1676 = vmatprep.subr.mxu0 0.0
        %1677 = vmatpush1.msra.mxu0 0.0
        %1678 = vmatprep.subr.mxu0 0.0
        %1679 = vmatpush1.msra.mxu0 0.0
        %1680 = vmatprep.subr.mxu0 0.0
        %1681 = vmatpush1.msra.mxu0 0.0
        %1682 = vmatprep.subr.mxu0 0.0
        %1683 = vmatpush1.msra.mxu0 0.0
        %1684 = vmatprep.subr.mxu0 0.0
        %1685 = vmatpush1.msra.mxu0 0.0
        %1686 = vmatprep.subr.mxu0 0.0
        %1687 = vmatpush1.msra.mxu0 0.0
        %1688 = vmatprep.subr.mxu0 0.0
        %1689 = vmatpush1.msra.mxu0 0.0
        %1690 = vmatprep.subr.mxu0 0.0
        %1691 = vmatpush1.msra.mxu0 0.0
        %1692 = vmatprep.subr.mxu0 0.0
        %1693 = vmatpush1.msra.mxu0 0.0
        %1694 = vmatprep.subr.mxu0 0.0
        %1695 = vmatpush1.msra.mxu0 0.0
        %1696 = vmatprep.subr.mxu0 0.0
        %1697 = vmatpush1.msra.mxu0 0.0
        %1698 = vmatprep.subr.mxu0 0.0
        %1699 = vmatpush1.msra.mxu0 0.0
        %1700 = vmatprep.subr.mxu0 0.0
        %1701 = vmatpush1.msra.mxu0 0.0
        %1702 = vmatprep.subr.mxu0 0.0
        %1703 = vmatpush1.msra.mxu0 0.0
        %1704 = vmatprep.subr.mxu0 0.0
        %1705 = vmatpush1.msra.mxu0 0.0
        %1706 = vmatprep.subr.mxu0 0.0
        %1707 = vmatpush1.msra.mxu0 0.0
        %1708 = vmatprep.subr.mxu0 0.0
        %1709 = vmatpush1.msra.mxu0 0.0
        %1710 = vmatprep.subr.mxu0 0.0
        %1711 = vmatpush1.msra.mxu0 0.0
        %1712 = vmatprep.subr.mxu0 0.0
        %1713 = vmatpush1.msra.mxu0 0.0
        %1714 = vmatprep.subr.mxu0 0.0
        %1715 = vmatpush1.msra.mxu0 0.0
        %1716 = vmatprep.subr.mxu0 0.0
        %1717 = vmatpush1.msra.mxu0 0.0
        %1718 = vmatprep.subr.mxu0 0.0
        %1719 = vmatpush1.msra.mxu0 0.0
        %1720 = vmatprep.mubr.f32.mxu0 0.0
        %1721 = vmatmul.mubr.f32.gmra.mrb[0].mxu0 %v1654
        %v1722 = vpop.f32.mrb[0].mxu0
        %v1723 = vadd.f32 0.0, %v1722
        %v1724 = vpop.f32.mrb[0].mxu0
        %1725 = vdwg.mxu0
        %v1726 = vadd.f32 %v1485, %v1723
        %v1727 = vld [vmem:[%s7] sm:$0x1]
        %v1729 = vlaneseq
        %v1730 = vshrl.u32 %v1729, 7
        %v1731 = vsub.s32 0, %v1730
        %v1732 = vrot.slane %v1727, %v1731
        %v1734 = vadd.f32 %v1726, %v1732
        %v1735 = vadd.f32 %v1734, %v670
        %v1736 = vld [vmem:[%s8] sm:$0x1]
        %v1737 = vld [vmem:[%s9] sm:$0x1]
        %v1738 = vsel %vm642, %v1735, 0.0
        %1739 = vadd.xlane.f32.xlu0 %v1738
        %v1740 = vpop.xlane.xlu0 %1739
        %v1741 = vmul.f32 %v1740, %v646
        %v1742 = vsub.f32 %v1735, %v1741
        %v1743 = vmul.f32 %v1742, %v1742
        %v1744 = vsel %vm642, %v1743, 0.0
        %1745 = vadd.xlane.f32.xlu0 %v1744
        %v1746 = vpop.xlane.xlu0 %1745
        %v1747 = vmul.f32 %v1746, %v646
        %v1748 = vadd.f32 %v1747, 1e-12
        %v1749 = vrsqrt.pop %v1748
        %v1750 = vmul.f32 %v1742, %v1749
        %v1752 = vlaneseq
        %v1753 = vshrl.u32 %v1752, 7
        %v1754 = vsub.s32 0, %v1753
        %v1755 = vrot.slane %v1736, %v1754
        %v1757 = vmul.f32 %v1750, %v1755
        %v1759 = vlaneseq
        %v1760 = vshrl.u32 %v1759, 7
        %v1761 = vsub.s32 0, %v1760
        %v1762 = vrot.slane %v1737, %v1761
        %v1764 = vadd.f32 %v1757, %v1762
        %v1765 = vld [vmem:[%s10] sm:$0xff]
        %v1766 = vld [vmem:[%s10 + $0x8] sm:$0xff]
        %v1767 = vld [vmem:[%s10 + $0x10] sm:$0xff]
        %v1768 = vld [vmem:[%s10 + $0x18] sm:$0xff]
        %v1769 = vld [vmem:[%s11] sm:$0x1]
        %v1771 = vlaneseq
        %v1772 = vshrl.u32 %v1771, 7
        %v1773 = vsub.s32 0, %v1772
        %v1774 = vrot.slane %v1769, %v1773
        %v1777 = vsel %vm642, %v1764, 0
        %1779 = vmatprep.subr.mxu0 0.0
        %1780 = vmatpush1.msra.mxu0 %v1765
        %1781 = vmatprep.subr.mxu0 0.0
        %1782 = vmatpush1.msra.mxu0 %v1766
        %1783 = vmatprep.subr.mxu0 0.0
        %1784 = vmatpush1.msra.mxu0 %v1767
        %1785 = vmatprep.subr.mxu0 0.0
        %1786 = vmatpush1.msra.mxu0 %v1768
        %1787 = vmatprep.subr.mxu0 0.0
        %1788 = vmatpush1.msra.mxu0 0.0
        %1789 = vmatprep.subr.mxu0 0.0
        %1790 = vmatpush1.msra.mxu0 0.0
        %1791 = vmatprep.subr.mxu0 0.0
        %1792 = vmatpush1.msra.mxu0 0.0
        %1793 = vmatprep.subr.mxu0 0.0
        %1794 = vmatpush1.msra.mxu0 0.0
        %1795 = vmatprep.subr.mxu0 0.0
        %1796 = vmatpush1.msra.mxu0 0.0
        %1797 = vmatprep.subr.mxu0 0.0
        %1798 = vmatpush1.msra.mxu0 0.0
        %1799 = vmatprep.subr.mxu0 0.0
        %1800 = vmatpush1.msra.mxu0 0.0
        %1801 = vmatprep.subr.mxu0 0.0
        %1802 = vmatpush1.msra.mxu0 0.0
        %1803 = vmatprep.subr.mxu0 0.0
        %1804 = vmatpush1.msra.mxu0 0.0
        %1805 = vmatprep.subr.mxu0 0.0
        %1806 = vmatpush1.msra.mxu0 0.0
        %1807 = vmatprep.subr.mxu0 0.0
        %1808 = vmatpush1.msra.mxu0 0.0
        %1809 = vmatprep.subr.mxu0 0.0
        %1810 = vmatpush1.msra.mxu0 0.0
        %1811 = vmatprep.subr.mxu0 0.0
        %1812 = vmatpush1.msra.mxu0 0.0
        %1813 = vmatprep.subr.mxu0 0.0
        %1814 = vmatpush1.msra.mxu0 0.0
        %1815 = vmatprep.subr.mxu0 0.0
        %1816 = vmatpush1.msra.mxu0 0.0
        %1817 = vmatprep.subr.mxu0 0.0
        %1818 = vmatpush1.msra.mxu0 0.0
        %1819 = vmatprep.subr.mxu0 0.0
        %1820 = vmatpush1.msra.mxu0 0.0
        %1821 = vmatprep.subr.mxu0 0.0
        %1822 = vmatpush1.msra.mxu0 0.0
        %1823 = vmatprep.subr.mxu0 0.0
        %1824 = vmatpush1.msra.mxu0 0.0
        %1825 = vmatprep.subr.mxu0 0.0
        %1826 = vmatpush1.msra.mxu0 0.0
        %1827 = vmatprep.subr.mxu0 0.0
        %1828 = vmatpush1.msra.mxu0 0.0
        %1829 = vmatprep.subr.mxu0 0.0
        %1830 = vmatpush1.msra.mxu0 0.0
        %1831 = vmatprep.subr.mxu0 0.0
        %1832 = vmatpush1.msra.mxu0 0.0
        %1833 = vmatprep.subr.mxu0 0.0
        %1834 = vmatpush1.msra.mxu0 0.0
        %1835 = vmatprep.subr.mxu0 0.0
        %1836 = vmatpush1.msra.mxu0 0.0
        %1837 = vmatprep.subr.mxu0 0.0
        %1838 = vmatpush1.msra.mxu0 0.0
        %1839 = vmatprep.subr.mxu0 0.0
        %1840 = vmatpush1.msra.mxu0 0.0
        %1841 = vmatprep.subr.mxu0 0.0
        %1842 = vmatpush1.msra.mxu0 0.0
        %1843 = vmatprep.mubr.f32.mxu0 0.0
        %1844 = vmatmul.mubr.f32.gmra.mrb[0].mxu0 %v1777
        %v1845 = vpop.f32.mrb[0].mxu0
        %v1846 = vadd.f32 %v1774, %v1845
        %v1847 = vpop.f32.mrb[0].mxu0
        %1848 = vdwg.mxu0
        %v1849 = vmul.f32 %v1846, 0.5
        %v1850 = vmul.f32 %v1846, 0.70710677
        %vm1851 = vcmp.ge.f32.partialorder %v1850, 0.0
        %v1852 = vsel %vm1851, 1.0, -1.0
        %v1853 = vand.u32 2147483647, %v1850
        %v1854 = vmul.f32 %v1853, 0.3275911
        %v1855 = vadd.f32 %v1854, 1.0
        %v1856 = vrcp.pop %v1855
        %v1857 = vmul.f32 1.0, %v1856
        %v1858 = vmul.f32 %v1857, 1.0614054
        %v1859 = vadd.f32 %v1858, -1.4531521
        %v1860 = vmul.f32 %v1859, %v1857
        %v1861 = vadd.f32 %v1860, 1.4214138
        %v1862 = vmul.f32 %v1861, %v1857
        %v1863 = vadd.f32 %v1862, -0.28449672
        %v1864 = vmul.f32 %v1863, %v1857
        %v1865 = vadd.f32 %v1864, 0.2548296
        %v1866 = vmul.f32 %v1865, %v1857
        %v1867 = vsub.f32 0.0, %v1853
        %v1868 = vmul.f32 %v1867, %v1853
        %v1869 = vmul.f32 %v1868, 1.442695
        %v1870 = vpow.pop %v1869
        %v1871 = vmul.f32 %v1866, %v1870
        %v1872 = vsub.f32 1.0, %v1871
        %v1873 = vmul.f32 %v1852, %v1872
        %v1874 = vadd.f32 %v1873, 1.0
        %v1875 = vmul.f32 %v1849, %v1874
        %v1876 = vld [vmem:[%s12] sm:$0xff]
        %v1877 = vld [vmem:[%s12 + $0x8] sm:$0xff]
        %v1878 = vld [vmem:[%s12 + $0x10] sm:$0xff]
        %v1879 = vld [vmem:[%s12 + $0x18] sm:$0xff]
        %v1880 = vld [vmem:[%s12 + $0x20] sm:$0xff]
        %v1881 = vld [vmem:[%s12 + $0x28] sm:$0xff]
        %v1882 = vld [vmem:[%s12 + $0x30] sm:$0xff]
        %v1883 = vld [vmem:[%s12 + $0x38] sm:$0xff]
        %v1884 = vld [vmem:[%s13] sm:$0x1]
        %v1886 = vlaneseq
        %v1887 = vshrl.u32 %v1886, 7
        %v1888 = vsub.s32 0, %v1887
        %v1889 = vrot.slane %v1884, %v1888
        %vm1891 = vcmask 523264
        %v1893 = vsel %vm1891, %v1875, 0
        %1895 = vmatprep.subr.mxu0 0.0
        %1896 = vmatpush1.msra.mxu0 %v1876
        %1897 = vmatprep.subr.mxu0 0.0
        %1898 = vmatpush1.msra.mxu0 %v1877
        %1899 = vmatprep.subr.mxu0 0.0
        %1900 = vmatpush1.msra.mxu0 %v1878
        %1901 = vmatprep.subr.mxu0 0.0
        %1902 = vmatpush1.msra.mxu0 %v1879
        %1903 = vmatprep.subr.mxu0 0.0
        %1904 = vmatpush1.msra.mxu0 %v1880
        %1905 = vmatprep.subr.mxu0 0.0
        %1906 = vmatpush1.msra.mxu0 %v1881
        %1907 = vmatprep.subr.mxu0 0.0
        %1908 = vmatpush1.msra.mxu0 %v1882
        %1909 = vmatprep.subr.mxu0 0.0
        %1910 = vmatpush1.msra.mxu0 %v1883
        %1911 = vmatprep.subr.mxu0 0.0
        %1912 = vmatpush1.msra.mxu0 0.0
        %1913 = vmatprep.subr.mxu0 0.0
        %1914 = vmatpush1.msra.mxu0 0.0
        %1915 = vmatprep.subr.mxu0 0.0
        %1916 = vmatpush1.msra.mxu0 0.0
        %1917 = vmatprep.subr.mxu0 0.0
        %1918 = vmatpush1.msra.mxu0 0.0
        %1919 = vmatprep.subr.mxu0 0.0
        %1920 = vmatpush1.msra.mxu0 0.0
        %1921 = vmatprep.subr.mxu0 0.0
        %1922 = vmatpush1.msra.mxu0 0.0
        %1923 = vmatprep.subr.mxu0 0.0
        %1924 = vmatpush1.msra.mxu0 0.0
        %1925 = vmatprep.subr.mxu0 0.0
        %1926 = vmatpush1.msra.mxu0 0.0
        %1927 = vmatprep.subr.mxu0 0.0
        %1928 = vmatpush1.msra.mxu0 0.0
        %1929 = vmatprep.subr.mxu0 0.0
        %1930 = vmatpush1.msra.mxu0 0.0
        %1931 = vmatprep.subr.mxu0 0.0
        %1932 = vmatpush1.msra.mxu0 0.0
        %1933 = vmatprep.subr.mxu0 0.0
        %1934 = vmatpush1.msra.mxu0 0.0
        %1935 = vmatprep.subr.mxu0 0.0
        %1936 = vmatpush1.msra.mxu0 0.0
        %1937 = vmatprep.subr.mxu0 0.0
        %1938 = vmatpush1.msra.mxu0 0.0
        %1939 = vmatprep.subr.mxu0 0.0
        %1940 = vmatpush1.msra.mxu0 0.0
        %1941 = vmatprep.subr.mxu0 0.0
        %1942 = vmatpush1.msra.mxu0 0.0
        %1943 = vmatprep.subr.mxu0 0.0
        %1944 = vmatpush1.msra.mxu0 0.0
        %1945 = vmatprep.subr.mxu0 0.0
        %1946 = vmatpush1.msra.mxu0 0.0
        %1947 = vmatprep.subr.mxu0 0.0
        %1948 = vmatpush1.msra.mxu0 0.0
        %1949 = vmatprep.subr.mxu0 0.0
        %1950 = vmatpush1.msra.mxu0 0.0
        %1951 = vmatprep.subr.mxu0 0.0
        %1952 = vmatpush1.msra.mxu0 0.0
        %1953 = vmatprep.subr.mxu0 0.0
        %1954 = vmatpush1.msra.mxu0 0.0
        %1955 = vmatprep.subr.mxu0 0.0
        %1956 = vmatpush1.msra.mxu0 0.0
        %1957 = vmatprep.subr.mxu0 0.0
        %1958 = vmatpush1.msra.mxu0 0.0
        %1959 = vmatprep.mubr.f32.mxu0 0.0
        %1960 = vmatmul.mubr.f32.gmra.mrb[0].mxu0 %v1893
        %v1961 = vpop.f32.mrb[0].mxu0
        %v1962 = vadd.f32 %v1889, %v1961
        %v1963 = vpop.f32.mrb[0].mxu0
        %1964 = vdwg.mxu0
        %v1965 = vadd.f32 %v1962, %v1764
        %v1966 = vld [vmem:[%s14] sm:$0x1]
        %v1967 = vld [vmem:[%s15] sm:$0x1]
        %v1968 = vsel %vm642, %v1965, 0.0
        %1969 = vadd.xlane.f32.xlu0 %v1968
        %v1970 = vpop.xlane.xlu0 %1969
        %v1971 = vmul.f32 %v1970, %v646
        %v1972 = vsub.f32 %v1965, %v1971
        %v1973 = vmul.f32 %v1972, %v1972
        %v1974 = vsel %vm642, %v1973, 0.0
        %1975 = vadd.xlane.f32.xlu0 %v1974
        %v1976 = vpop.xlane.xlu0 %1975
        %v1977 = vmul.f32 %v1976, %v646
        %v1978 = vadd.f32 %v1977, 1e-12
        %v1979 = vrsqrt.pop %v1978
        %v1980 = vmul.f32 %v1972, %v1979
        %v1982 = vlaneseq
        %v1983 = vshrl.u32 %v1982, 7
        %v1984 = vsub.s32 0, %v1983
        %v1985 = vrot.slane %v1966, %v1984
        %v1987 = vmul.f32 %v1980, %v1985
        %v1989 = vlaneseq
        %v1990 = vshrl.u32 %v1989, 7
        %v1991 = vsub.s32 0, %v1990
        %v1992 = vrot.slane %v1967, %v1991
        %v1994 = vadd.f32 %v1987, %v1992
        %s1995 = scalar_lea.vmem %s4, 32
        %v1996 = vld [vmem:[%s1995] sm:$0xff]
        %v1997 = vld [vmem:[%s1995 + $0x8] sm:$0xff]
        %v1998 = vld [vmem:[%s1995 + $0x10] sm:$0xff]
        %v1999 = vld [vmem:[%s1995 + $0x18] sm:$0xff]
        %s2000 = scalar_lea.vmem %s5, 1
        %v2001 = vld [vmem:[%s2000] sm:$0x1]
        %v2003 = vlaneseq
        %v2004 = vshrl.u32 %v2003, 7
        %v2005 = vsub.s32 0, %v2004
        %v2006 = vrot.slane %v2001, %v2005
        %v2009 = vsel %vm642, %v1994, 0
        %2011 = vmatprep.subr.mxu0 0.0
        %2012 = vmatpush1.msra.mxu0 %v1996
        %2013 = vmatprep.subr.mxu0 0.0
        %2014 = vmatpush1.msra.mxu0 %v1997
        %2015 = vmatprep.subr.mxu0 0.0
        %2016 = vmatpush1.msra.mxu0 %v1998
        %2017 = vmatprep.subr.mxu0 0.0
        %2018 = vmatpush1.msra.mxu0 %v1999
        %2019 = vmatprep.subr.mxu0 0.0
        %2020 = vmatpush1.msra.mxu0 0.0
        %2021 = vmatprep.subr.mxu0 0.0
        %2022 = vmatpush1.msra.mxu0 0.0
        %2023 = vmatprep.subr.mxu0 0.0
        %2024 = vmatpush1.msra.mxu0 0.0
        %2025 = vmatprep.subr.mxu0 0.0
        %2026 = vmatpush1.msra.mxu0 0.0
        %2027 = vmatprep.subr.mxu0 0.0
        %2028 = vmatpush1.msra.mxu0 0.0
        %2029 = vmatprep.subr.mxu0 0.0
        %2030 = vmatpush1.msra.mxu0 0.0
        %2031 = vmatprep.subr.mxu0 0.0
        %2032 = vmatpush1.msra.mxu0 0.0
        %2033 = vmatprep.subr.mxu0 0.0
        %2034 = vmatpush1.msra.mxu0 0.0
        %2035 = vmatprep.subr.mxu0 0.0
        %2036 = vmatpush1.msra.mxu0 0.0
        %2037 = vmatprep.subr.mxu0 0.0
        %2038 = vmatpush1.msra.mxu0 0.0
        %2039 = vmatprep.subr.mxu0 0.0
        %2040 = vmatpush1.msra.mxu0 0.0
        %2041 = vmatprep.subr.mxu0 0.0
        %2042 = vmatpush1.msra.mxu0 0.0
        %2043 = vmatprep.subr.mxu0 0.0
        %2044 = vmatpush1.msra.mxu0 0.0
        %2045 = vmatprep.subr.mxu0 0.0
        %2046 = vmatpush1.msra.mxu0 0.0
        %2047 = vmatprep.subr.mxu0 0.0
        %2048 = vmatpush1.msra.mxu0 0.0
        %2049 = vmatprep.subr.mxu0 0.0
        %2050 = vmatpush1.msra.mxu0 0.0
        %2051 = vmatprep.subr.mxu0 0.0
        %2052 = vmatpush1.msra.mxu0 0.0
        %2053 = vmatprep.subr.mxu0 0.0
        %2054 = vmatpush1.msra.mxu0 0.0
        %2055 = vmatprep.subr.mxu0 0.0
        %2056 = vmatpush1.msra.mxu0 0.0
        %2057 = vmatprep.subr.mxu0 0.0
        %2058 = vmatpush1.msra.mxu0 0.0
        %2059 = vmatprep.subr.mxu0 0.0
        %2060 = vmatpush1.msra.mxu0 0.0
        %2061 = vmatprep.subr.mxu0 0.0
        %2062 = vmatpush1.msra.mxu0 0.0
        %2063 = vmatprep.subr.mxu0 0.0
        %2064 = vmatpush1.msra.mxu0 0.0
        %2065 = vmatprep.subr.mxu0 0.0
        %2066 = vmatpush1.msra.mxu0 0.0
        %2067 = vmatprep.subr.mxu0 0.0
        %2068 = vmatpush1.msra.mxu0 0.0
        %2069 = vmatprep.subr.mxu0 0.0
        %2070 = vmatpush1.msra.mxu0 0.0
        %2071 = vmatprep.subr.mxu0 0.0
        %2072 = vmatpush1.msra.mxu0 0.0
        %2073 = vmatprep.subr.mxu0 0.0
        %2074 = vmatpush1.msra.mxu0 0.0
        %2075 = vmatprep.mubr.f32.mxu0 0.0
        %2076 = vmatmul.mubr.f32.gmra.mrb[0].mxu0 %v2009
        %v2077 = vpop.f32.mrb[0].mxu0
        %v2078 = vadd.f32 %v2006, %v2077
        %v2079 = vpop.f32.mrb[0].mxu0
        %2080 = vdwg.mxu0
        %s2081 = scalar_lea.vmem %s6, 32
        %v2082 = vld [vmem:[%s2081] sm:$0xff]
        %v2083 = vld [vmem:[%s2081 + $0x8] sm:$0xff]
        %v2084 = vld [vmem:[%s2081 + $0x10] sm:$0xff]
        %v2085 = vld [vmem:[%s2081 + $0x18] sm:$0xff]
        %2087 = vrot.lane.b32.xlu0 %v2078, 96
        %v2088 = vpop.permute.xlu0 %2087
        %v2089 = vsel %vm762, %v2078, 0
        %v2091 = vsel %vm762, %v2088, 0
        %2093 = vmatprep.subr.mxu0 0.0
        %2094 = vmatpush1.xpose.msra.mxu0 %v2091
        %2095 = vmatprep.subr.mxu0 0.0
        %2096 = vmatpush1.xpose.msra.mxu0 0.0
        %2097 = vmatprep.subr.mxu0 0.0
        %2098 = vmatpush1.xpose.msra.mxu0 0.0
        %2099 = vmatprep.subr.mxu0 0.0
        %2100 = vmatpush1.xpose.msra.mxu0 0.0
        %2101 = vmatprep.subr.mxu0 0.0
        %2102 = vmatpush1.xpose.msra.mxu0 0.0
        %2103 = vmatprep.subr.mxu0 0.0
        %2104 = vmatpush1.xpose.msra.mxu0 0.0
        %2105 = vmatprep.subr.mxu0 0.0
        %2106 = vmatpush1.xpose.msra.mxu0 0.0
        %2107 = vmatprep.subr.mxu0 0.0
        %2108 = vmatpush1.xpose.msra.mxu0 0.0
        %2109 = vmatprep.subr.mxu0 0.0
        %2110 = vmatpush1.xpose.msra.mxu0 0.0
        %2111 = vmatprep.subr.mxu0 0.0
        %2112 = vmatpush1.xpose.msra.mxu0 0.0
        %2113 = vmatprep.subr.mxu0 0.0
        %2114 = vmatpush1.xpose.msra.mxu0 0.0
        %2115 = vmatprep.subr.mxu0 0.0
        %2116 = vmatpush1.xpose.msra.mxu0 0.0
        %2117 = vmatprep.subr.mxu0 0.0
        %2118 = vmatpush1.xpose.msra.mxu0 0.0
        %2119 = vmatprep.subr.mxu0 0.0
        %2120 = vmatpush1.xpose.msra.mxu0 0.0
        %2121 = vmatprep.subr.mxu0 0.0
        %2122 = vmatpush1.xpose.msra.mxu0 0.0
        %2123 = vmatprep.subr.mxu0 0.0
        %2124 = vmatpush1.xpose.msra.mxu0 0.0
        %2125 = vmatprep.subr.mxu0 0.0
        %2126 = vmatpush1.xpose.msra.mxu0 0.0
        %2127 = vmatprep.subr.mxu0 0.0
        %2128 = vmatpush1.xpose.msra.mxu0 0.0
        %2129 = vmatprep.subr.mxu0 0.0
        %2130 = vmatpush1.xpose.msra.mxu0 0.0
        %2131 = vmatprep.subr.mxu0 0.0
        %2132 = vmatpush1.xpose.msra.mxu0 0.0
        %2133 = vmatprep.subr.mxu0 0.0
        %2134 = vmatpush1.xpose.msra.mxu0 0.0
        %2135 = vmatprep.subr.mxu0 0.0
        %2136 = vmatpush1.xpose.msra.mxu0 0.0
        %2137 = vmatprep.subr.mxu0 0.0
        %2138 = vmatpush1.xpose.msra.mxu0 0.0
        %2139 = vmatprep.subr.mxu0 0.0
        %2140 = vmatpush1.xpose.msra.mxu0 0.0
        %2141 = vmatprep.subr.mxu0 0.0
        %2142 = vmatpush1.xpose.msra.mxu0 0.0
        %2143 = vmatprep.subr.mxu0 0.0
        %2144 = vmatpush1.xpose.msra.mxu0 0.0
        %2145 = vmatprep.subr.mxu0 0.0
        %2146 = vmatpush1.xpose.msra.mxu0 0.0
        %2147 = vmatprep.subr.mxu0 0.0
        %2148 = vmatpush1.xpose.msra.mxu0 0.0
        %2149 = vmatprep.subr.mxu0 0.0
        %2150 = vmatpush1.xpose.msra.mxu0 0.0
        %2151 = vmatprep.subr.mxu0 0.0
        %2152 = vmatpush1.xpose.msra.mxu0 0.0
        %2153 = vmatprep.subr.mxu0 0.0
        %2154 = vmatpush1.xpose.msra.mxu0 0.0
        %2155 = vmatprep.subr.mxu0 0.0
        %2156 = vmatpush1.xpose.msra.mxu0 0.0
        %2157 = vmatprep.mubr.f32.mxu0 0.0
        %2158 = vmatmul.mubr.f32.gmra.mrb[0].mxu0 %v2089
        %v2159 = vpop.f32.mrb[0].mxu0
        %v2160 = vadd.f32 0.0, %v2159
        %v2161 = vpop.f32.mrb[0].mxu0
        %2162 = vdwg.mxu0
        %v2163 = vmul.f32 %v2160, 0.35355338
        %v2164 = vadd.f32 %v2163, %v842
        %v2165 = vsel %vm762, %v2164, -inf
        %2166 = vmax.xlane.f32.xlu0 %v2165
        %v2167 = vpop.xlane.xlu0 %2166
        %v2168 = vsub.f32 %v2164, %v2167
        %v2169 = vmul.f32 %v2168, 1.442695
        %v2170 = vpow.pop %v2169
        %v2171 = vsel %vm762, %v2170, 0.0
        %2172 = vadd.xlane.f32.xlu0 %v2171
        %v2173 = vpop.xlane.xlu0 %2172
        %v2174 = vrcp.pop %v2173
        %v2175 = vmul.f32 %v2170, %v2174
        %2176 = vrot.lane.b32.xlu0 %v2078, 64
        %v2177 = vpop.permute.xlu0 %2176
        %v2180 = vsel %vm762, %v2175, 0
        %2182 = vmatprep.subr.mxu0 0.0
        %2183 = vmatpush1.msra.mxu0 %v2177
        %2184 = vmatprep.subr.mxu0 0.0
        %2185 = vmatpush1.msra.mxu0 0.0
        %2186 = vmatprep.subr.mxu0 0.0
        %2187 = vmatpush1.msra.mxu0 0.0
        %2188 = vmatprep.subr.mxu0 0.0
        %2189 = vmatpush1.msra.mxu0 0.0
        %2190 = vmatprep.subr.mxu0 0.0
        %2191 = vmatpush1.msra.mxu0 0.0
        %2192 = vmatprep.subr.mxu0 0.0
        %2193 = vmatpush1.msra.mxu0 0.0
        %2194 = vmatprep.subr.mxu0 0.0
        %2195 = vmatpush1.msra.mxu0 0.0
        %2196 = vmatprep.subr.mxu0 0.0
        %2197 = vmatpush1.msra.mxu0 0.0
        %2198 = vmatprep.subr.mxu0 0.0
        %2199 = vmatpush1.msra.mxu0 0.0
        %2200 = vmatprep.subr.mxu0 0.0
        %2201 = vmatpush1.msra.mxu0 0.0
        %2202 = vmatprep.subr.mxu0 0.0
        %2203 = vmatpush1.msra.mxu0 0.0
        %2204 = vmatprep.subr.mxu0 0.0
        %2205 = vmatpush1.msra.mxu0 0.0
        %2206 = vmatprep.subr.mxu0 0.0
        %2207 = vmatpush1.msra.mxu0 0.0
        %2208 = vmatprep.subr.mxu0 0.0
        %2209 = vmatpush1.msra.mxu0 0.0
        %2210 = vmatprep.subr.mxu0 0.0
        %2211 = vmatpush1.msra.mxu0 0.0
        %2212 = vmatprep.subr.mxu0 0.0
        %2213 = vmatpush1.msra.mxu0 0.0
        %2214 = vmatprep.subr.mxu0 0.0
        %2215 = vmatpush1.msra.mxu0 0.0
        %2216 = vmatprep.subr.mxu0 0.0
        %2217 = vmatpush1.msra.mxu0 0.0
        %2218 = vmatprep.subr.mxu0 0.0
        %2219 = vmatpush1.msra.mxu0 0.0
        %2220 = vmatprep.subr.mxu0 0.0
        %2221 = vmatpush1.msra.mxu0 0.0
        %2222 = vmatprep.subr.mxu0 0.0
        %2223 = vmatpush1.msra.mxu0 0.0
        %2224 = vmatprep.subr.mxu0 0.0
        %2225 = vmatpush1.msra.mxu0 0.0
        %2226 = vmatprep.subr.mxu0 0.0
        %2227 = vmatpush1.msra.mxu0 0.0
        %2228 = vmatprep.subr.mxu0 0.0
        %2229 = vmatpush1.msra.mxu0 0.0
        %2230 = vmatprep.subr.mxu0 0.0
        %2231 = vmatpush1.msra.mxu0 0.0
        %2232 = vmatprep.subr.mxu0 0.0
        %2233 = vmatpush1.msra.mxu0 0.0
        %2234 = vmatprep.subr.mxu0 0.0
        %2235 = vmatpush1.msra.mxu0 0.0
        %2236 = vmatprep.subr.mxu0 0.0
        %2237 = vmatpush1.msra.mxu0 0.0
        %2238 = vmatprep.subr.mxu0 0.0
        %2239 = vmatpush1.msra.mxu0 0.0
        %2240 = vmatprep.subr.mxu0 0.0
        %2241 = vmatpush1.msra.mxu0 0.0
        %2242 = vmatprep.subr.mxu0 0.0
        %2243 = vmatpush1.msra.mxu0 0.0
        %2244 = vmatprep.subr.mxu0 0.0
        %2245 = vmatpush1.msra.mxu0 0.0
        %2246 = vmatprep.mubr.f32.mxu0 0.0
        %2247 = vmatmul.mubr.f32.gmra.mrb[0].mxu0 %v2180
        %v2248 = vpop.f32.mrb[0].mxu0
        %v2249 = vadd.f32 0.0, %v2248
        %v2250 = vpop.f32.mrb[0].mxu0
        %2251 = vdwg.mxu0
        %2252 = vrot.lane.b32.xlu0 %v2078, 120
        %v2253 = vpop.permute.xlu0 %2252
        %2254 = vrot.lane.b32.xlu0 %v2078, 88
        %v2255 = vpop.permute.xlu0 %2254
        %v2256 = vsel %vm762, %v2253, 0
        %v2258 = vsel %vm762, %v2255, 0
        %2260 = vmatprep.subr.mxu0 0.0
        %2261 = vmatpush1.xpose.msra.mxu0 %v2258
        %2262 = vmatprep.subr.mxu0 0.0
        %2263 = vmatpush1.xpose.msra.mxu0 0.0
        %2264 = vmatprep.subr.mxu0 0.0
        %2265 = vmatpush1.xpose.msra.mxu0 0.0
        %2266 = vmatprep.subr.mxu0 0.0
        %2267 = vmatpush1.xpose.msra.mxu0 0.0
        %2268 = vmatprep.subr.mxu0 0.0
        %2269 = vmatpush1.xpose.msra.mxu0 0.0
        %2270 = vmatprep.subr.mxu0 0.0
        %2271 = vmatpush1.xpose.msra.mxu0 0.0
        %2272 = vmatprep.subr.mxu0 0.0
        %2273 = vmatpush1.xpose.msra.mxu0 0.0
        %2274 = vmatprep.subr.mxu0 0.0
        %2275 = vmatpush1.xpose.msra.mxu0 0.0
        %2276 = vmatprep.subr.mxu0 0.0
        %2277 = vmatpush1.xpose.msra.mxu0 0.0
        %2278 = vmatprep.subr.mxu0 0.0
        %2279 = vmatpush1.xpose.msra.mxu0 0.0
        %2280 = vmatprep.subr.mxu0 0.0
        %2281 = vmatpush1.xpose.msra.mxu0 0.0
        %2282 = vmatprep.subr.mxu0 0.0
        %2283 = vmatpush1.xpose.msra.mxu0 0.0
        %2284 = vmatprep.subr.mxu0 0.0
        %2285 = vmatpush1.xpose.msra.mxu0 0.0
        %2286 = vmatprep.subr.mxu0 0.0
        %2287 = vmatpush1.xpose.msra.mxu0 0.0
        %2288 = vmatprep.subr.mxu0 0.0
        %2289 = vmatpush1.xpose.msra.mxu0 0.0
        %2290 = vmatprep.subr.mxu0 0.0
        %2291 = vmatpush1.xpose.msra.mxu0 0.0
        %2292 = vmatprep.subr.mxu0 0.0
        %2293 = vmatpush1.xpose.msra.mxu0 0.0
        %2294 = vmatprep.subr.mxu0 0.0
        %2295 = vmatpush1.xpose.msra.mxu0 0.0
        %2296 = vmatprep.subr.mxu0 0.0
        %2297 = vmatpush1.xpose.msra.mxu0 0.0
        %2298 = vmatprep.subr.mxu0 0.0
        %2299 = vmatpush1.xpose.msra.mxu0 0.0
        %2300 = vmatprep.subr.mxu0 0.0
        %2301 = vmatpush1.xpose.msra.mxu0 0.0
        %2302 = vmatprep.subr.mxu0 0.0
        %2303 = vmatpush1.xpose.msra.mxu0 0.0
        %2304 = vmatprep.subr.mxu0 0.0
        %2305 = vmatpush1.xpose.msra.mxu0 0.0
        %2306 = vmatprep.subr.mxu0 0.0
        %2307 = vmatpush1.xpose.msra.mxu0 0.0
        %2308 = vmatprep.subr.mxu0 0.0
        %2309 = vmatpush1.xpose.msra.mxu0 0.0
        %2310 = vmatprep.subr.mxu0 0.0
        %2311 = vmatpush1.xpose.msra.mxu0 0.0
        %2312 = vmatprep.subr.mxu0 0.0
        %2313 = vmatpush1.xpose.msra.mxu0 0.0
        %2314 = vmatprep.subr.mxu0 0.0
        %2315 = vmatpush1.xpose.msra.mxu0 0.0
        %2316 = vmatprep.subr.mxu0 0.0
        %2317 = vmatpush1.xpose.msra.mxu0 0.0
        %2318 = vmatprep.subr.mxu0 0.0
        %2319 = vmatpush1.xpose.msra.mxu0 0.0
        %2320 = vmatprep.subr.mxu0 0.0
        %2321 = vmatpush1.xpose.msra.mxu0 0.0
        %2322 = vmatprep.subr.mxu0 0.0
        %2323 = vmatpush1.xpose.msra.mxu0 0.0
        %2324 = vmatprep.mubr.f32.mxu0 0.0
        %2325 = vmatmul.mubr.f32.gmra.mrb[0].mxu0 %v2256
        %v2326 = vpop.f32.mrb[0].mxu0
        %v2327 = vadd.f32 0.0, %v2326
        %v2328 = vpop.f32.mrb[0].mxu0
        %2329 = vdwg.mxu0
        %v2330 = vmul.f32 %v2327, 0.35355338
        %v2331 = vadd.f32 %v2330, %v842
        %v2332 = vsel %vm762, %v2331, -inf
        %2333 = vmax.xlane.f32.xlu0 %v2332
        %v2334 = vpop.xlane.xlu0 %2333
        %v2335 = vsub.f32 %v2331, %v2334
        %v2336 = vmul.f32 %v2335, 1.442695
        %v2337 = vpow.pop %v2336
        %v2338 = vsel %vm762, %v2337, 0.0
        %2339 = vadd.xlane.f32.xlu0 %v2338
        %v2340 = vpop.xlane.xlu0 %2339
        %v2341 = vrcp.pop %v2340
        %v2342 = vmul.f32 %v2337, %v2341
        %2343 = vrot.lane.b32.xlu0 %v2078, 56
        %v2344 = vpop.permute.xlu0 %2343
        %v2347 = vsel %vm762, %v2342, 0
        %2349 = vmatprep.subr.mxu0 0.0
        %2350 = vmatpush1.msra.mxu0 %v2344
        %2351 = vmatprep.subr.mxu0 0.0
        %2352 = vmatpush1.msra.mxu0 0.0
        %2353 = vmatprep.subr.mxu0 0.0
        %2354 = vmatpush1.msra.mxu0 0.0
        %2355 = vmatprep.subr.mxu0 0.0
        %2356 = vmatpush1.msra.mxu0 0.0
        %2357 = vmatprep.subr.mxu0 0.0
        %2358 = vmatpush1.msra.mxu0 0.0
        %2359 = vmatprep.subr.mxu0 0.0
        %2360 = vmatpush1.msra.mxu0 0.0
        %2361 = vmatprep.subr.mxu0 0.0
        %2362 = vmatpush1.msra.mxu0 0.0
        %2363 = vmatprep.subr.mxu0 0.0
        %2364 = vmatpush1.msra.mxu0 0.0
        %2365 = vmatprep.subr.mxu0 0.0
        %2366 = vmatpush1.msra.mxu0 0.0
        %2367 = vmatprep.subr.mxu0 0.0
        %2368 = vmatpush1.msra.mxu0 0.0
        %2369 = vmatprep.subr.mxu0 0.0
        %2370 = vmatpush1.msra.mxu0 0.0
        %2371 = vmatprep.subr.mxu0 0.0
        %2372 = vmatpush1.msra.mxu0 0.0
        %2373 = vmatprep.subr.mxu0 0.0
        %2374 = vmatpush1.msra.mxu0 0.0
        %2375 = vmatprep.subr.mxu0 0.0
        %2376 = vmatpush1.msra.mxu0 0.0
        %2377 = vmatprep.subr.mxu0 0.0
        %2378 = vmatpush1.msra.mxu0 0.0
        %2379 = vmatprep.subr.mxu0 0.0
        %2380 = vmatpush1.msra.mxu0 0.0
        %2381 = vmatprep.subr.mxu0 0.0
        %2382 = vmatpush1.msra.mxu0 0.0
        %2383 = vmatprep.subr.mxu0 0.0
        %2384 = vmatpush1.msra.mxu0 0.0
        %2385 = vmatprep.subr.mxu0 0.0
        %2386 = vmatpush1.msra.mxu0 0.0
        %2387 = vmatprep.subr.mxu0 0.0
        %2388 = vmatpush1.msra.mxu0 0.0
        %2389 = vmatprep.subr.mxu0 0.0
        %2390 = vmatpush1.msra.mxu0 0.0
        %2391 = vmatprep.subr.mxu0 0.0
        %2392 = vmatpush1.msra.mxu0 0.0
        %2393 = vmatprep.subr.mxu0 0.0
        %2394 = vmatpush1.msra.mxu0 0.0
        %2395 = vmatprep.subr.mxu0 0.0
        %2396 = vmatpush1.msra.mxu0 0.0
        %2397 = vmatprep.subr.mxu0 0.0
        %2398 = vmatpush1.msra.mxu0 0.0
        %2399 = vmatprep.subr.mxu0 0.0
        %2400 = vmatpush1.msra.mxu0 0.0
        %2401 = vmatprep.subr.mxu0 0.0
        %2402 = vmatpush1.msra.mxu0 0.0
        %2403 = vmatprep.subr.mxu0 0.0
        %2404 = vmatpush1.msra.mxu0 0.0
        %2405 = vmatprep.subr.mxu0 0.0
        %2406 = vmatpush1.msra.mxu0 0.0
        %2407 = vmatprep.subr.mxu0 0.0
        %2408 = vmatpush1.msra.mxu0 0.0
        %2409 = vmatprep.subr.mxu0 0.0
        %2410 = vmatpush1.msra.mxu0 0.0
        %2411 = vmatprep.subr.mxu0 0.0
        %2412 = vmatpush1.msra.mxu0 0.0
        %2413 = vmatprep.mubr.f32.mxu0 0.0
        %2414 = vmatmul.mubr.f32.gmra.mrb[0].mxu0 %v2347
        %v2415 = vpop.f32.mrb[0].mxu0
        %v2416 = vadd.f32 0.0, %v2415
        %v2417 = vpop.f32.mrb[0].mxu0
        %2418 = vdwg.mxu0
        %v2420 = vsel %vm762, %v2416, 0
        %2422 = vmatprep.subr.mxu0 0.0
        %2423 = vmatpush1.msra.mxu0 %v2083
        %2424 = vmatprep.subr.mxu0 0.0
        %2425 = vmatpush1.msra.mxu0 0.0
        %2426 = vmatprep.subr.mxu0 0.0
        %2427 = vmatpush1.msra.mxu0 0.0
        %2428 = vmatprep.subr.mxu0 0.0
        %2429 = vmatpush1.msra.mxu0 0.0
        %2430 = vmatprep.subr.mxu0 0.0
        %2431 = vmatpush1.msra.mxu0 0.0
        %2432 = vmatprep.subr.mxu0 0.0
        %2433 = vmatpush1.msra.mxu0 0.0
        %2434 = vmatprep.subr.mxu0 0.0
        %2435 = vmatpush1.msra.mxu0 0.0
        %2436 = vmatprep.subr.mxu0 0.0
        %2437 = vmatpush1.msra.mxu0 0.0
        %2438 = vmatprep.subr.mxu0 0.0
        %2439 = vmatpush1.msra.mxu0 0.0
        %2440 = vmatprep.subr.mxu0 0.0
        %2441 = vmatpush1.msra.mxu0 0.0
        %2442 = vmatprep.subr.mxu0 0.0
        %2443 = vmatpush1.msra.mxu0 0.0
        %2444 = vmatprep.subr.mxu0 0.0
        %2445 = vmatpush1.msra.mxu0 0.0
        %2446 = vmatprep.subr.mxu0 0.0
        %2447 = vmatpush1.msra.mxu0 0.0
        %2448 = vmatprep.subr.mxu0 0.0
        %2449 = vmatpush1.msra.mxu0 0.0
        %2450 = vmatprep.subr.mxu0 0.0
        %2451 = vmatpush1.msra.mxu0 0.0
        %2452 = vmatprep.subr.mxu0 0.0
        %2453 = vmatpush1.msra.mxu0 0.0
        %2454 = vmatprep.subr.mxu0 0.0
        %2455 = vmatpush1.msra.mxu0 0.0
        %2456 = vmatprep.subr.mxu0 0.0
        %2457 = vmatpush1.msra.mxu0 0.0
        %2458 = vmatprep.subr.mxu0 0.0
        %2459 = vmatpush1.msra.mxu0 0.0
        %2460 = vmatprep.subr.mxu0 0.0
        %2461 = vmatpush1.msra.mxu0 0.0
        %2462 = vmatprep.subr.mxu0 0.0
        %2463 = vmatpush1.msra.mxu0 0.0
        %2464 = vmatprep.subr.mxu0 0.0
        %2465 = vmatpush1.msra.mxu0 0.0
        %2466 = vmatprep.subr.mxu0 0.0
        %2467 = vmatpush1.msra.mxu0 0.0
        %2468 = vmatprep.subr.mxu0 0.0
        %2469 = vmatpush1.msra.mxu0 0.0
        %2470 = vmatprep.subr.mxu0 0.0
        %2471 = vmatpush1.msra.mxu0 0.0
        %2472 = vmatprep.subr.mxu0 0.0
        %2473 = vmatpush1.msra.mxu0 0.0
        %2474 = vmatprep.subr.mxu0 0.0
        %2475 = vmatpush1.msra.mxu0 0.0
        %2476 = vmatprep.subr.mxu0 0.0
        %2477 = vmatpush1.msra.mxu0 0.0
        %2478 = vmatprep.subr.mxu0 0.0
        %2479 = vmatpush1.msra.mxu0 0.0
        %2480 = vmatprep.subr.mxu0 0.0
        %2481 = vmatpush1.msra.mxu0 0.0
        %2482 = vmatprep.subr.mxu0 0.0
        %2483 = vmatpush1.msra.mxu0 0.0
        %2484 = vmatprep.subr.mxu0 0.0
        %2485 = vmatpush1.msra.mxu0 0.0
        %2486 = vmatprep.mubr.f32.mxu0 0.0
        %2487 = vmatmul.mubr.f32.gmra.mrb[0].mxu0 %v2420
        %v2488 = vpop.f32.mrb[0].mxu0
        %v2489 = vadd.f32 0.0, %v2488
        %v2490 = vpop.f32.mrb[0].mxu0
        %2491 = vdwg.mxu0
        %v2493 = vsel %vm762, %v2249, 0
        %2495 = vmatprep.subr.mxu0 0.0
        %2496 = vmatpush1.msra.mxu0 %v2082
        %2497 = vmatprep.subr.mxu0 0.0
        %2498 = vmatpush1.msra.mxu0 0.0
        %2499 = vmatprep.subr.mxu0 0.0
        %2500 = vmatpush1.msra.mxu0 0.0
        %2501 = vmatprep.subr.mxu0 0.0
        %2502 = vmatpush1.msra.mxu0 0.0
        %2503 = vmatprep.subr.mxu0 0.0
        %2504 = vmatpush1.msra.mxu0 0.0
        %2505 = vmatprep.subr.mxu0 0.0
        %2506 = vmatpush1.msra.mxu0 0.0
        %2507 = vmatprep.subr.mxu0 0.0
        %2508 = vmatpush1.msra.mxu0 0.0
        %2509 = vmatprep.subr.mxu0 0.0
        %2510 = vmatpush1.msra.mxu0 0.0
        %2511 = vmatprep.subr.mxu0 0.0
        %2512 = vmatpush1.msra.mxu0 0.0
        %2513 = vmatprep.subr.mxu0 0.0
        %2514 = vmatpush1.msra.mxu0 0.0
        %2515 = vmatprep.subr.mxu0 0.0
        %2516 = vmatpush1.msra.mxu0 0.0
        %2517 = vmatprep.subr.mxu0 0.0
        %2518 = vmatpush1.msra.mxu0 0.0
        %2519 = vmatprep.subr.mxu0 0.0
        %2520 = vmatpush1.msra.mxu0 0.0
        %2521 = vmatprep.subr.mxu0 0.0
        %2522 = vmatpush1.msra.mxu0 0.0
        %2523 = vmatprep.subr.mxu0 0.0
        %2524 = vmatpush1.msra.mxu0 0.0
        %2525 = vmatprep.subr.mxu0 0.0
        %2526 = vmatpush1.msra.mxu0 0.0
        %2527 = vmatprep.subr.mxu0 0.0
        %2528 = vmatpush1.msra.mxu0 0.0
        %2529 = vmatprep.subr.mxu0 0.0
        %2530 = vmatpush1.msra.mxu0 0.0
        %2531 = vmatprep.subr.mxu0 0.0
        %2532 = vmatpush1.msra.mxu0 0.0
        %2533 = vmatprep.subr.mxu0 0.0
        %2534 = vmatpush1.msra.mxu0 0.0
        %2535 = vmatprep.subr.mxu0 0.0
        %2536 = vmatpush1.msra.mxu0 0.0
        %2537 = vmatprep.subr.mxu0 0.0
        %2538 = vmatpush1.msra.mxu0 0.0
        %2539 = vmatprep.subr.mxu0 0.0
        %2540 = vmatpush1.msra.mxu0 0.0
        %2541 = vmatprep.subr.mxu0 0.0
        %2542 = vmatpush1.msra.mxu0 0.0
        %2543 = vmatprep.subr.mxu0 0.0
        %2544 = vmatpush1.msra.mxu0 0.0
        %2545 = vmatprep.subr.mxu0 0.0
        %2546 = vmatpush1.msra.mxu0 0.0
        %2547 = vmatprep.subr.mxu0 0.0
        %2548 = vmatpush1.msra.mxu0 0.0
        %2549 = vmatprep.subr.mxu0 0.0
        %2550 = vmatpush1.msra.mxu0 0.0
        %2551 = vmatprep.subr.mxu0 0.0
        %2552 = vmatpush1.msra.mxu0 0.0
        %2553 = vmatprep.subr.mxu0 0.0
        %2554 = vmatpush1.msra.mxu0 0.0
        %2555 = vmatprep.subr.mxu0 0.0
        %2556 = vmatpush1.msra.mxu0 0.0
        %2557 = vmatprep.subr.mxu0 0.0
        %2558 = vmatpush1.msra.mxu0 0.0
        %2559 = vmatprep.mubr.f32.mxu0 0.0
        %2560 = vmatmul.mubr.f32.gmra.mrb[0].mxu0 %v2493
        %v2561 = vpop.f32.mrb[0].mxu0
        %v2562 = vadd.f32 %v2489, %v2561
        %v2563 = vpop.f32.mrb[0].mxu0
        %2564 = vdwg.mxu0
        %2565 = vrot.lane.b32.xlu0 %v2078, 112
        %v2566 = vpop.permute.xlu0 %2565
        %2567 = vrot.lane.b32.xlu0 %v2078, 80
        %v2568 = vpop.permute.xlu0 %2567
        %v2569 = vsel %vm762, %v2566, 0
        %v2571 = vsel %vm762, %v2568, 0
        %2573 = vmatprep.subr.mxu0 0.0
        %2574 = vmatpush1.xpose.msra.mxu0 %v2571
        %2575 = vmatprep.subr.mxu0 0.0
        %2576 = vmatpush1.xpose.msra.mxu0 0.0
        %2577 = vmatprep.subr.mxu0 0.0
        %2578 = vmatpush1.xpose.msra.mxu0 0.0
        %2579 = vmatprep.subr.mxu0 0.0
        %2580 = vmatpush1.xpose.msra.mxu0 0.0
        %2581 = vmatprep.subr.mxu0 0.0
        %2582 = vmatpush1.xpose.msra.mxu0 0.0
        %2583 = vmatprep.subr.mxu0 0.0
        %2584 = vmatpush1.xpose.msra.mxu0 0.0
        %2585 = vmatprep.subr.mxu0 0.0
        %2586 = vmatpush1.xpose.msra.mxu0 0.0
        %2587 = vmatprep.subr.mxu0 0.0
        %2588 = vmatpush1.xpose.msra.mxu0 0.0
        %2589 = vmatprep.subr.mxu0 0.0
        %2590 = vmatpush1.xpose.msra.mxu0 0.0
        %2591 = vmatprep.subr.mxu0 0.0
        %2592 = vmatpush1.xpose.msra.mxu0 0.0
        %2593 = vmatprep.subr.mxu0 0.0
        %2594 = vmatpush1.xpose.msra.mxu0 0.0
        %2595 = vmatprep.subr.mxu0 0.0
        %2596 = vmatpush1.xpose.msra.mxu0 0.0
        %2597 = vmatprep.subr.mxu0 0.0
        %2598 = vmatpush1.xpose.msra.mxu0 0.0
        %2599 = vmatprep.subr.mxu0 0.0
        %2600 = vmatpush1.xpose.msra.mxu0 0.0
        %2601 = vmatprep.subr.mxu0 0.0
        %2602 = vmatpush1.xpose.msra.mxu0 0.0
        %2603 = vmatprep.subr.mxu0 0.0
        %2604 = vmatpush1.xpose.msra.mxu0 0.0
        %2605 = vmatprep.subr.mxu0 0.0
        %2606 = vmatpush1.xpose.msra.mxu0 0.0
        %2607 = vmatprep.subr.mxu0 0.0
        %2608 = vmatpush1.xpose.msra.mxu0 0.0
        %2609 = vmatprep.subr.mxu0 0.0
        %2610 = vmatpush1.xpose.msra.mxu0 0.0
        %2611 = vmatprep.subr.mxu0 0.0
        %2612 = vmatpush1.xpose.msra.mxu0 0.0
        %2613 = vmatprep.subr.mxu0 0.0
        %2614 = vmatpush1.xpose.msra.mxu0 0.0
        %2615 = vmatprep.subr.mxu0 0.0
        %2616 = vmatpush1.xpose.msra.mxu0 0.0
        %2617 = vmatprep.subr.mxu0 0.0
        %2618 = vmatpush1.xpose.msra.mxu0 0.0
        %2619 = vmatprep.subr.mxu0 0.0
        %2620 = vmatpush1.xpose.msra.mxu0 0.0
        %2621 = vmatprep.subr.mxu0 0.0
        %2622 = vmatpush1.xpose.msra.mxu0 0.0
        %2623 = vmatprep.subr.mxu0 0.0
        %2624 = vmatpush1.xpose.msra.mxu0 0.0
        %2625 = vmatprep.subr.mxu0 0.0
        %2626 = vmatpush1.xpose.msra.mxu0 0.0
        %2627 = vmatprep.subr.mxu0 0.0
        %2628 = vmatpush1.xpose.msra.mxu0 0.0
        %2629 = vmatprep.subr.mxu0 0.0
        %2630 = vmatpush1.xpose.msra.mxu0 0.0
        %2631 = vmatprep.subr.mxu0 0.0
        %2632 = vmatpush1.xpose.msra.mxu0 0.0
        %2633 = vmatprep.subr.mxu0 0.0
        %2634 = vmatpush1.xpose.msra.mxu0 0.0
        %2635 = vmatprep.subr.mxu0 0.0
        %2636 = vmatpush1.xpose.msra.mxu0 0.0
        %2637 = vmatprep.mubr.f32.mxu0 0.0
        %2638 = vmatmul.mubr.f32.gmra.mrb[0].mxu0 %v2569
        %v2639 = vpop.f32.mrb[0].mxu0
        %v2640 = vadd.f32 0.0, %v2639
        %v2641 = vpop.f32.mrb[0].mxu0
        %2642 = vdwg.mxu0
        %v2643 = vmul.f32 %v2640, 0.35355338
        %v2644 = vadd.f32 %v2643, %v842
        %v2645 = vsel %vm762, %v2644, -inf
        %2646 = vmax.xlane.f32.xlu0 %v2645
        %v2647 = vpop.xlane.xlu0 %2646
        %v2648 = vsub.f32 %v2644, %v2647
        %v2649 = vmul.f32 %v2648, 1.442695
        %v2650 = vpow.pop %v2649
        %v2651 = vsel %vm762, %v2650, 0.0
        %2652 = vadd.xlane.f32.xlu0 %v2651
        %v2653 = vpop.xlane.xlu0 %2652
        %v2654 = vrcp.pop %v2653
        %v2655 = vmul.f32 %v2650, %v2654
        %2656 = vrot.lane.b32.xlu0 %v2078, 48
        %v2657 = vpop.permute.xlu0 %2656
        %v2660 = vsel %vm762, %v2655, 0
        %2662 = vmatprep.subr.mxu0 0.0
        %2663 = vmatpush1.msra.mxu0 %v2657
        %2664 = vmatprep.subr.mxu0 0.0
        %2665 = vmatpush1.msra.mxu0 0.0
        %2666 = vmatprep.subr.mxu0 0.0
        %2667 = vmatpush1.msra.mxu0 0.0
        %2668 = vmatprep.subr.mxu0 0.0
        %2669 = vmatpush1.msra.mxu0 0.0
        %2670 = vmatprep.subr.mxu0 0.0
        %2671 = vmatpush1.msra.mxu0 0.0
        %2672 = vmatprep.subr.mxu0 0.0
        %2673 = vmatpush1.msra.mxu0 0.0
        %2674 = vmatprep.subr.mxu0 0.0
        %2675 = vmatpush1.msra.mxu0 0.0
        %2676 = vmatprep.subr.mxu0 0.0
        %2677 = vmatpush1.msra.mxu0 0.0
        %2678 = vmatprep.subr.mxu0 0.0
        %2679 = vmatpush1.msra.mxu0 0.0
        %2680 = vmatprep.subr.mxu0 0.0
        %2681 = vmatpush1.msra.mxu0 0.0
        %2682 = vmatprep.subr.mxu0 0.0
        %2683 = vmatpush1.msra.mxu0 0.0
        %2684 = vmatprep.subr.mxu0 0.0
        %2685 = vmatpush1.msra.mxu0 0.0
        %2686 = vmatprep.subr.mxu0 0.0
        %2687 = vmatpush1.msra.mxu0 0.0
        %2688 = vmatprep.subr.mxu0 0.0
        %2689 = vmatpush1.msra.mxu0 0.0
        %2690 = vmatprep.subr.mxu0 0.0
        %2691 = vmatpush1.msra.mxu0 0.0
        %2692 = vmatprep.subr.mxu0 0.0
        %2693 = vmatpush1.msra.mxu0 0.0
        %2694 = vmatprep.subr.mxu0 0.0
        %2695 = vmatpush1.msra.mxu0 0.0
        %2696 = vmatprep.subr.mxu0 0.0
        %2697 = vmatpush1.msra.mxu0 0.0
        %2698 = vmatprep.subr.mxu0 0.0
        %2699 = vmatpush1.msra.mxu0 0.0
        %2700 = vmatprep.subr.mxu0 0.0
        %2701 = vmatpush1.msra.mxu0 0.0
        %2702 = vmatprep.subr.mxu0 0.0
        %2703 = vmatpush1.msra.mxu0 0.0
        %2704 = vmatprep.subr.mxu0 0.0
        %2705 = vmatpush1.msra.mxu0 0.0
        %2706 = vmatprep.subr.mxu0 0.0
        %2707 = vmatpush1.msra.mxu0 0.0
        %2708 = vmatprep.subr.mxu0 0.0
        %2709 = vmatpush1.msra.mxu0 0.0
        %2710 = vmatprep.subr.mxu0 0.0
        %2711 = vmatpush1.msra.mxu0 0.0
        %2712 = vmatprep.subr.mxu0 0.0
        %2713 = vmatpush1.msra.mxu0 0.0
        %2714 = vmatprep.subr.mxu0 0.0
        %2715 = vmatpush1.msra.mxu0 0.0
        %2716 = vmatprep.subr.mxu0 0.0
        %2717 = vmatpush1.msra.mxu0 0.0
        %2718 = vmatprep.subr.mxu0 0.0
        %2719 = vmatpush1.msra.mxu0 0.0
        %2720 = vmatprep.subr.mxu0 0.0
        %2721 = vmatpush1.msra.mxu0 0.0
        %2722 = vmatprep.subr.mxu0 0.0
        %2723 = vmatpush1.msra.mxu0 0.0
        %2724 = vmatprep.subr.mxu0 0.0
        %2725 = vmatpush1.msra.mxu0 0.0
        %2726 = vmatprep.mubr.f32.mxu0 0.0
        %2727 = vmatmul.mubr.f32.gmra.mrb[0].mxu0 %v2660
        %v2728 = vpop.f32.mrb[0].mxu0
        %v2729 = vadd.f32 0.0, %v2728
        %v2730 = vpop.f32.mrb[0].mxu0
        %2731 = vdwg.mxu0
        %v2733 = vsel %vm762, %v2729, 0
        %2735 = vmatprep.subr.mxu0 0.0
        %2736 = vmatpush1.msra.mxu0 %v2084
        %2737 = vmatprep.subr.mxu0 0.0
        %2738 = vmatpush1.msra.mxu0 0.0
        %2739 = vmatprep.subr.mxu0 0.0
        %2740 = vmatpush1.msra.mxu0 0.0
        %2741 = vmatprep.subr.mxu0 0.0
        %2742 = vmatpush1.msra.mxu0 0.0
        %2743 = vmatprep.subr.mxu0 0.0
        %2744 = vmatpush1.msra.mxu0 0.0
        %2745 = vmatprep.subr.mxu0 0.0
        %2746 = vmatpush1.msra.mxu0 0.0
        %2747 = vmatprep.subr.mxu0 0.0
        %2748 = vmatpush1.msra.mxu0 0.0
        %2749 = vmatprep.subr.mxu0 0.0
        %2750 = vmatpush1.msra.mxu0 0.0
        %2751 = vmatprep.subr.mxu0 0.0
        %2752 = vmatpush1.msra.mxu0 0.0
        %2753 = vmatprep.subr.mxu0 0.0
        %2754 = vmatpush1.msra.mxu0 0.0
        %2755 = vmatprep.subr.mxu0 0.0
        %2756 = vmatpush1.msra.mxu0 0.0
        %2757 = vmatprep.subr.mxu0 0.0
        %2758 = vmatpush1.msra.mxu0 0.0
        %2759 = vmatprep.subr.mxu0 0.0
        %2760 = vmatpush1.msra.mxu0 0.0
        %2761 = vmatprep.subr.mxu0 0.0
        %2762 = vmatpush1.msra.mxu0 0.0
        %2763 = vmatprep.subr.mxu0 0.0
        %2764 = vmatpush1.msra.mxu0 0.0
        %2765 = vmatprep.subr.mxu0 0.0
        %2766 = vmatpush1.msra.mxu0 0.0
        %2767 = vmatprep.subr.mxu0 0.0
        %2768 = vmatpush1.msra.mxu0 0.0
        %2769 = vmatprep.subr.mxu0 0.0
        %2770 = vmatpush1.msra.mxu0 0.0
        %2771 = vmatprep.subr.mxu0 0.0
        %2772 = vmatpush1.msra.mxu0 0.0
        %2773 = vmatprep.subr.mxu0 0.0
        %2774 = vmatpush1.msra.mxu0 0.0
        %2775 = vmatprep.subr.mxu0 0.0
        %2776 = vmatpush1.msra.mxu0 0.0
        %2777 = vmatprep.subr.mxu0 0.0
        %2778 = vmatpush1.msra.mxu0 0.0
        %2779 = vmatprep.subr.mxu0 0.0
        %2780 = vmatpush1.msra.mxu0 0.0
        %2781 = vmatprep.subr.mxu0 0.0
        %2782 = vmatpush1.msra.mxu0 0.0
        %2783 = vmatprep.subr.mxu0 0.0
        %2784 = vmatpush1.msra.mxu0 0.0
        %2785 = vmatprep.subr.mxu0 0.0
        %2786 = vmatpush1.msra.mxu0 0.0
        %2787 = vmatprep.subr.mxu0 0.0
        %2788 = vmatpush1.msra.mxu0 0.0
        %2789 = vmatprep.subr.mxu0 0.0
        %2790 = vmatpush1.msra.mxu0 0.0
        %2791 = vmatprep.subr.mxu0 0.0
        %2792 = vmatpush1.msra.mxu0 0.0
        %2793 = vmatprep.subr.mxu0 0.0
        %2794 = vmatpush1.msra.mxu0 0.0
        %2795 = vmatprep.subr.mxu0 0.0
        %2796 = vmatpush1.msra.mxu0 0.0
        %2797 = vmatprep.subr.mxu0 0.0
        %2798 = vmatpush1.msra.mxu0 0.0
        %2799 = vmatprep.mubr.f32.mxu0 0.0
        %2800 = vmatmul.mubr.f32.gmra.mrb[0].mxu0 %v2733
        %v2801 = vpop.f32.mrb[0].mxu0
        %v2802 = vadd.f32 0.0, %v2801
        %v2803 = vpop.f32.mrb[0].mxu0
        %2804 = vdwg.mxu0
        %v2805 = vadd.f32 %v2562, %v2802
        %2806 = vrot.lane.b32.xlu0 %v2078, 104
        %v2807 = vpop.permute.xlu0 %2806
        %2808 = vrot.lane.b32.xlu0 %v2078, 72
        %v2809 = vpop.permute.xlu0 %2808
        %v2810 = vsel %vm762, %v2807, 0
        %v2812 = vsel %vm762, %v2809, 0
        %2814 = vmatprep.subr.mxu0 0.0
        %2815 = vmatpush1.xpose.msra.mxu0 %v2812
        %2816 = vmatprep.subr.mxu0 0.0
        %2817 = vmatpush1.xpose.msra.mxu0 0.0
        %2818 = vmatprep.subr.mxu0 0.0
        %2819 = vmatpush1.xpose.msra.mxu0 0.0
        %2820 = vmatprep.subr.mxu0 0.0
        %2821 = vmatpush1.xpose.msra.mxu0 0.0
        %2822 = vmatprep.subr.mxu0 0.0
        %2823 = vmatpush1.xpose.msra.mxu0 0.0
        %2824 = vmatprep.subr.mxu0 0.0
        %2825 = vmatpush1.xpose.msra.mxu0 0.0
        %2826 = vmatprep.subr.mxu0 0.0
        %2827 = vmatpush1.xpose.msra.mxu0 0.0
        %2828 = vmatprep.subr.mxu0 0.0
        %2829 = vmatpush1.xpose.msra.mxu0 0.0
        %2830 = vmatprep.subr.mxu0 0.0
        %2831 = vmatpush1.xpose.msra.mxu0 0.0
        %2832 = vmatprep.subr.mxu0 0.0
        %2833 = vmatpush1.xpose.msra.mxu0 0.0
        %2834 = vmatprep.subr.mxu0 0.0
        %2835 = vmatpush1.xpose.msra.mxu0 0.0
        %2836 = vmatprep.subr.mxu0 0.0
        %2837 = vmatpush1.xpose.msra.mxu0 0.0
        %2838 = vmatprep.subr.mxu0 0.0
        %2839 = vmatpush1.xpose.msra.mxu0 0.0
        %2840 = vmatprep.subr.mxu0 0.0
        %2841 = vmatpush1.xpose.msra.mxu0 0.0
        %2842 = vmatprep.subr.mxu0 0.0
        %2843 = vmatpush1.xpose.msra.mxu0 0.0
        %2844 = vmatprep.subr.mxu0 0.0
        %2845 = vmatpush1.xpose.msra.mxu0 0.0
        %2846 = vmatprep.subr.mxu0 0.0
        %2847 = vmatpush1.xpose.msra.mxu0 0.0
        %2848 = vmatprep.subr.mxu0 0.0
        %2849 = vmatpush1.xpose.msra.mxu0 0.0
        %2850 = vmatprep.subr.mxu0 0.0
        %2851 = vmatpush1.xpose.msra.mxu0 0.0
        %2852 = vmatprep.subr.mxu0 0.0
        %2853 = vmatpush1.xpose.msra.mxu0 0.0
        %2854 = vmatprep.subr.mxu0 0.0
        %2855 = vmatpush1.xpose.msra.mxu0 0.0
        %2856 = vmatprep.subr.mxu0 0.0
        %2857 = vmatpush1.xpose.msra.mxu0 0.0
        %2858 = vmatprep.subr.mxu0 0.0
        %2859 = vmatpush1.xpose.msra.mxu0 0.0
        %2860 = vmatprep.subr.mxu0 0.0
        %2861 = vmatpush1.xpose.msra.mxu0 0.0
        %2862 = vmatprep.subr.mxu0 0.0
        %2863 = vmatpush1.xpose.msra.mxu0 0.0
        %2864 = vmatprep.subr.mxu0 0.0
        %2865 = vmatpush1.xpose.msra.mxu0 0.0
        %2866 = vmatprep.subr.mxu0 0.0
        %2867 = vmatpush1.xpose.msra.mxu0 0.0
        %2868 = vmatprep.subr.mxu0 0.0
        %2869 = vmatpush1.xpose.msra.mxu0 0.0
        %2870 = vmatprep.subr.mxu0 0.0
        %2871 = vmatpush1.xpose.msra.mxu0 0.0
        %2872 = vmatprep.subr.mxu0 0.0
        %2873 = vmatpush1.xpose.msra.mxu0 0.0
        %2874 = vmatprep.subr.mxu0 0.0
        %2875 = vmatpush1.xpose.msra.mxu0 0.0
        %2876 = vmatprep.subr.mxu0 0.0
        %2877 = vmatpush1.xpose.msra.mxu0 0.0
        %2878 = vmatprep.mubr.f32.mxu0 0.0
        %2879 = vmatmul.mubr.f32.gmra.mrb[0].mxu0 %v2810
        %v2880 = vpop.f32.mrb[0].mxu0
        %v2881 = vadd.f32 0.0, %v2880
        %v2882 = vpop.f32.mrb[0].mxu0
        %2883 = vdwg.mxu0
        %v2884 = vmul.f32 %v2881, 0.35355338
        %v2885 = vadd.f32 %v2884, %v842
        %v2886 = vsel %vm762, %v2885, -inf
        %2887 = vmax.xlane.f32.xlu0 %v2886
        %v2888 = vpop.xlane.xlu0 %2887
        %v2889 = vsub.f32 %v2885, %v2888
        %v2890 = vmul.f32 %v2889, 1.442695
        %v2891 = vpow.pop %v2890
        %v2892 = vsel %vm762, %v2891, 0.0
        %2893 = vadd.xlane.f32.xlu0 %v2892
        %v2894 = vpop.xlane.xlu0 %2893
        %v2895 = vrcp.pop %v2894
        %v2896 = vmul.f32 %v2891, %v2895
        %2897 = vrot.lane.b32.xlu0 %v2078, 40
        %v2898 = vpop.permute.xlu0 %2897
        %v2901 = vsel %vm762, %v2896, 0
        %2903 = vmatprep.subr.mxu0 0.0
        %2904 = vmatpush1.msra.mxu0 %v2898
        %2905 = vmatprep.subr.mxu0 0.0
        %2906 = vmatpush1.msra.mxu0 0.0
        %2907 = vmatprep.subr.mxu0 0.0
        %2908 = vmatpush1.msra.mxu0 0.0
        %2909 = vmatprep.subr.mxu0 0.0
        %2910 = vmatpush1.msra.mxu0 0.0
        %2911 = vmatprep.subr.mxu0 0.0
        %2912 = vmatpush1.msra.mxu0 0.0
        %2913 = vmatprep.subr.mxu0 0.0
        %2914 = vmatpush1.msra.mxu0 0.0
        %2915 = vmatprep.subr.mxu0 0.0
        %2916 = vmatpush1.msra.mxu0 0.0
        %2917 = vmatprep.subr.mxu0 0.0
        %2918 = vmatpush1.msra.mxu0 0.0
        %2919 = vmatprep.subr.mxu0 0.0
        %2920 = vmatpush1.msra.mxu0 0.0
        %2921 = vmatprep.subr.mxu0 0.0
        %2922 = vmatpush1.msra.mxu0 0.0
        %2923 = vmatprep.subr.mxu0 0.0
        %2924 = vmatpush1.msra.mxu0 0.0
        %2925 = vmatprep.subr.mxu0 0.0
        %2926 = vmatpush1.msra.mxu0 0.0
        %2927 = vmatprep.subr.mxu0 0.0
        %2928 = vmatpush1.msra.mxu0 0.0
        %2929 = vmatprep.subr.mxu0 0.0
        %2930 = vmatpush1.msra.mxu0 0.0
        %2931 = vmatprep.subr.mxu0 0.0
        %2932 = vmatpush1.msra.mxu0 0.0
        %2933 = vmatprep.subr.mxu0 0.0
        %2934 = vmatpush1.msra.mxu0 0.0
        %2935 = vmatprep.subr.mxu0 0.0
        %2936 = vmatpush1.msra.mxu0 0.0
        %2937 = vmatprep.subr.mxu0 0.0
        %2938 = vmatpush1.msra.mxu0 0.0
        %2939 = vmatprep.subr.mxu0 0.0
        %2940 = vmatpush1.msra.mxu0 0.0
        %2941 = vmatprep.subr.mxu0 0.0
        %2942 = vmatpush1.msra.mxu0 0.0
        %2943 = vmatprep.subr.mxu0 0.0
        %2944 = vmatpush1.msra.mxu0 0.0
        %2945 = vmatprep.subr.mxu0 0.0
        %2946 = vmatpush1.msra.mxu0 0.0
        %2947 = vmatprep.subr.mxu0 0.0
        %2948 = vmatpush1.msra.mxu0 0.0
        %2949 = vmatprep.subr.mxu0 0.0
        %2950 = vmatpush1.msra.mxu0 0.0
        %2951 = vmatprep.subr.mxu0 0.0
        %2952 = vmatpush1.msra.mxu0 0.0
        %2953 = vmatprep.subr.mxu0 0.0
        %2954 = vmatpush1.msra.mxu0 0.0
        %2955 = vmatprep.subr.mxu0 0.0
        %2956 = vmatpush1.msra.mxu0 0.0
        %2957 = vmatprep.subr.mxu0 0.0
        %2958 = vmatpush1.msra.mxu0 0.0
        %2959 = vmatprep.subr.mxu0 0.0
        %2960 = vmatpush1.msra.mxu0 0.0
        %2961 = vmatprep.subr.mxu0 0.0
        %2962 = vmatpush1.msra.mxu0 0.0
        %2963 = vmatprep.subr.mxu0 0.0
        %2964 = vmatpush1.msra.mxu0 0.0
        %2965 = vmatprep.subr.mxu0 0.0
        %2966 = vmatpush1.msra.mxu0 0.0
        %2967 = vmatprep.mubr.f32.mxu0 0.0
        %2968 = vmatmul.mubr.f32.gmra.mrb[0].mxu0 %v2901
        %v2969 = vpop.f32.mrb[0].mxu0
        %v2970 = vadd.f32 0.0, %v2969
        %v2971 = vpop.f32.mrb[0].mxu0
        %2972 = vdwg.mxu0
        %v2974 = vsel %vm762, %v2970, 0
        %2976 = vmatprep.subr.mxu0 0.0
        %2977 = vmatpush1.msra.mxu0 %v2085
        %2978 = vmatprep.subr.mxu0 0.0
        %2979 = vmatpush1.msra.mxu0 0.0
        %2980 = vmatprep.subr.mxu0 0.0
        %2981 = vmatpush1.msra.mxu0 0.0
        %2982 = vmatprep.subr.mxu0 0.0
        %2983 = vmatpush1.msra.mxu0 0.0
        %2984 = vmatprep.subr.mxu0 0.0
        %2985 = vmatpush1.msra.mxu0 0.0
        %2986 = vmatprep.subr.mxu0 0.0
        %2987 = vmatpush1.msra.mxu0 0.0
        %2988 = vmatprep.subr.mxu0 0.0
        %2989 = vmatpush1.msra.mxu0 0.0
        %2990 = vmatprep.subr.mxu0 0.0
        %2991 = vmatpush1.msra.mxu0 0.0
        %2992 = vmatprep.subr.mxu0 0.0
        %2993 = vmatpush1.msra.mxu0 0.0
        %2994 = vmatprep.subr.mxu0 0.0
        %2995 = vmatpush1.msra.mxu0 0.0
        %2996 = vmatprep.subr.mxu0 0.0
        %2997 = vmatpush1.msra.mxu0 0.0
        %2998 = vmatprep.subr.mxu0 0.0
        %2999 = vmatpush1.msra.mxu0 0.0
        %3000 = vmatprep.subr.mxu0 0.0
        %3001 = vmatpush1.msra.mxu0 0.0
        %3002 = vmatprep.subr.mxu0 0.0
        %3003 = vmatpush1.msra.mxu0 0.0
        %3004 = vmatprep.subr.mxu0 0.0
        %3005 = vmatpush1.msra.mxu0 0.0
        %3006 = vmatprep.subr.mxu0 0.0
        %3007 = vmatpush1.msra.mxu0 0.0
        %3008 = vmatprep.subr.mxu0 0.0
        %3009 = vmatpush1.msra.mxu0 0.0
        %3010 = vmatprep.subr.mxu0 0.0
        %3011 = vmatpush1.msra.mxu0 0.0
        %3012 = vmatprep.subr.mxu0 0.0
        %3013 = vmatpush1.msra.mxu0 0.0
        %3014 = vmatprep.subr.mxu0 0.0
        %3015 = vmatpush1.msra.mxu0 0.0
        %3016 = vmatprep.subr.mxu0 0.0
        %3017 = vmatpush1.msra.mxu0 0.0
        %3018 = vmatprep.subr.mxu0 0.0
        %3019 = vmatpush1.msra.mxu0 0.0
        %3020 = vmatprep.subr.mxu0 0.0
        %3021 = vmatpush1.msra.mxu0 0.0
        %3022 = vmatprep.subr.mxu0 0.0
        %3023 = vmatpush1.msra.mxu0 0.0
        %3024 = vmatprep.subr.mxu0 0.0
        %3025 = vmatpush1.msra.mxu0 0.0
        %3026 = vmatprep.subr.mxu0 0.0
        %3027 = vmatpush1.msra.mxu0 0.0
        %3028 = vmatprep.subr.mxu0 0.0
        %3029 = vmatpush1.msra.mxu0 0.0
        %3030 = vmatprep.subr.mxu0 0.0
        %3031 = vmatpush1.msra.mxu0 0.0
        %3032 = vmatprep.subr.mxu0 0.0
        %3033 = vmatpush1.msra.mxu0 0.0
        %3034 = vmatprep.subr.mxu0 0.0
        %3035 = vmatpush1.msra.mxu0 0.0
        %3036 = vmatprep.subr.mxu0 0.0
        %3037 = vmatpush1.msra.mxu0 0.0
        %3038 = vmatprep.subr.mxu0 0.0
        %3039 = vmatpush1.msra.mxu0 0.0
        %3040 = vmatprep.mubr.f32.mxu0 0.0
        %3041 = vmatmul.mubr.f32.gmra.mrb[0].mxu0 %v2974
        %v3042 = vpop.f32.mrb[0].mxu0
        %v3043 = vadd.f32 0.0, %v3042
        %v3044 = vpop.f32.mrb[0].mxu0
        %3045 = vdwg.mxu0
        %v3046 = vadd.f32 %v2805, %v3043
        %s3047 = scalar_lea.vmem %s7, 1
        %v3048 = vld [vmem:[%s3047] sm:$0x1]
        %v3050 = vlaneseq
        %v3051 = vshrl.u32 %v3050, 7
        %v3052 = vsub.s32 0, %v3051
        %v3053 = vrot.slane %v3048, %v3052
        %v3055 = vadd.f32 %v3046, %v3053
        %v3056 = vadd.f32 %v3055, %v1994
        %s3057 = scalar_lea.vmem %s8, 1
        %v3058 = vld [vmem:[%s3057] sm:$0x1]
        %s3059 = scalar_lea.vmem %s9, 1
        %v3060 = vld [vmem:[%s3059] sm:$0x1]
        %v3061 = vsel %vm642, %v3056, 0.0
        %3062 = vadd.xlane.f32.xlu0 %v3061
        %v3063 = vpop.xlane.xlu0 %3062
        %v3064 = vmul.f32 %v3063, %v646
        %v3065 = vsub.f32 %v3056, %v3064
        %v3066 = vmul.f32 %v3065, %v3065
        %v3067 = vsel %vm642, %v3066, 0.0
        %3068 = vadd.xlane.f32.xlu0 %v3067
        %v3069 = vpop.xlane.xlu0 %3068
        %v3070 = vmul.f32 %v3069, %v646
        %v3071 = vadd.f32 %v3070, 1e-12
        %v3072 = vrsqrt.pop %v3071
        %v3073 = vmul.f32 %v3065, %v3072
        %v3075 = vlaneseq
        %v3076 = vshrl.u32 %v3075, 7
        %v3077 = vsub.s32 0, %v3076
        %v3078 = vrot.slane %v3058, %v3077
        %v3080 = vmul.f32 %v3073, %v3078
        %v3082 = vlaneseq
        %v3083 = vshrl.u32 %v3082, 7
        %v3084 = vsub.s32 0, %v3083
        %v3085 = vrot.slane %v3060, %v3084
        %v3087 = vadd.f32 %v3080, %v3085
        %s3088 = scalar_lea.vmem %s10, 32
        %v3089 = vld [vmem:[%s3088] sm:$0xff]
        %v3090 = vld [vmem:[%s3088 + $0x8] sm:$0xff]
        %v3091 = vld [vmem:[%s3088 + $0x10] sm:$0xff]
        %v3092 = vld [vmem:[%s3088 + $0x18] sm:$0xff]
        %s3093 = scalar_lea.vmem %s11, 1
        %v3094 = vld [vmem:[%s3093] sm:$0x1]
        %v3096 = vlaneseq
        %v3097 = vshrl.u32 %v3096, 7
        %v3098 = vsub.s32 0, %v3097
        %v3099 = vrot.slane %v3094, %v3098
        %v3102 = vsel %vm642, %v3087, 0
        %3104 = vmatprep.subr.mxu0 0.0
        %3105 = vmatpush1.msra.mxu0 %v3089
        %3106 = vmatprep.subr.mxu0 0.0
        %3107 = vmatpush1.msra.mxu0 %v3090
        %3108 = vmatprep.subr.mxu0 0.0
        %3109 = vmatpush1.msra.mxu0 %v3091
        %3110 = vmatprep.subr.mxu0 0.0
        %3111 = vmatpush1.msra.mxu0 %v3092
        %3112 = vmatprep.subr.mxu0 0.0
        %3113 = vmatpush1.msra.mxu0 0.0
        %3114 = vmatprep.subr.mxu0 0.0
        %3115 = vmatpush1.msra.mxu0 0.0
        %3116 = vmatprep.subr.mxu0 0.0
        %3117 = vmatpush1.msra.mxu0 0.0
        %3118 = vmatprep.subr.mxu0 0.0
        %3119 = vmatpush1.msra.mxu0 0.0
        %3120 = vmatprep.subr.mxu0 0.0
        %3121 = vmatpush1.msra.mxu0 0.0
        %3122 = vmatprep.subr.mxu0 0.0
        %3123 = vmatpush1.msra.mxu0 0.0
        %3124 = vmatprep.subr.mxu0 0.0
        %3125 = vmatpush1.msra.mxu0 0.0
        %3126 = vmatprep.subr.mxu0 0.0
        %3127 = vmatpush1.msra.mxu0 0.0
        %3128 = vmatprep.subr.mxu0 0.0
        %3129 = vmatpush1.msra.mxu0 0.0
        %3130 = vmatprep.subr.mxu0 0.0
        %3131 = vmatpush1.msra.mxu0 0.0
        %3132 = vmatprep.subr.mxu0 0.0
        %3133 = vmatpush1.msra.mxu0 0.0
        %3134 = vmatprep.subr.mxu0 0.0
        %3135 = vmatpush1.msra.mxu0 0.0
        %3136 = vmatprep.subr.mxu0 0.0
        %3137 = vmatpush1.msra.mxu0 0.0
        %3138 = vmatprep.subr.mxu0 0.0
        %3139 = vmatpush1.msra.mxu0 0.0
        %3140 = vmatprep.subr.mxu0 0.0
        %3141 = vmatpush1.msra.mxu0 0.0
        %3142 = vmatprep.subr.mxu0 0.0
        %3143 = vmatpush1.msra.mxu0 0.0
        %3144 = vmatprep.subr.mxu0 0.0
        %3145 = vmatpush1.msra.mxu0 0.0
        %3146 = vmatprep.subr.mxu0 0.0
        %3147 = vmatpush1.msra.mxu0 0.0
        %3148 = vmatprep.subr.mxu0 0.0
        %3149 = vmatpush1.msra.mxu0 0.0
        %3150 = vmatprep.subr.mxu0 0.0
        %3151 = vmatpush1.msra.mxu0 0.0
        %3152 = vmatprep.subr.mxu0 0.0
        %3153 = vmatpush1.msra.mxu0 0.0
        %3154 = vmatprep.subr.mxu0 0.0
        %3155 = vmatpush1.msra.mxu0 0.0
        %3156 = vmatprep.subr.mxu0 0.0
        %3157 = vmatpush1.msra.mxu0 0.0
        %3158 = vmatprep.subr.mxu0 0.0
        %3159 = vmatpush1.msra.mxu0 0.0
        %3160 = vmatprep.subr.mxu0 0.0
        %3161 = vmatpush1.msra.mxu0 0.0
        %3162 = vmatprep.subr.mxu0 0.0
        %3163 = vmatpush1.msra.mxu0 0.0
        %3164 = vmatprep.subr.mxu0 0.0
        %3165 = vmatpush1.msra.mxu0 0.0
        %3166 = vmatprep.subr.mxu0 0.0
        %3167 = vmatpush1.msra.mxu0 0.0
        %3168 = vmatprep.mubr.f32.mxu0 0.0
        %3169 = vmatmul.mubr.f32.gmra.mrb[0].mxu0 %v3102
        %v3170 = vpop.f32.mrb[0].mxu0
        %v3171 = vadd.f32 %v3099, %v3170
        %v3172 = vpop.f32.mrb[0].mxu0
        %3173 = vdwg.mxu0
        %v3174 = vmul.f32 %v3171, 0.5
        %v3175 = vmul.f32 %v3171, 0.70710677
        %vm3176 = vcmp.ge.f32.partialorder %v3175, 0.0
        %v3177 = vsel %vm3176, 1.0, -1.0
        %v3178 = vand.u32 2147483647, %v3175
        %v3179 = vmul.f32 %v3178, 0.3275911
        %v3180 = vadd.f32 %v3179, 1.0
        %v3181 = vrcp.pop %v3180
        %v3182 = vmul.f32 1.0, %v3181
        %v3183 = vmul.f32 %v3182, 1.0614054
        %v3184 = vadd.f32 %v3183, -1.4531521
        %v3185 = vmul.f32 %v3184, %v3182
        %v3186 = vadd.f32 %v3185, 1.4214138
        %v3187 = vmul.f32 %v3186, %v3182
        %v3188 = vadd.f32 %v3187, -0.28449672
        %v3189 = vmul.f32 %v3188, %v3182
        %v3190 = vadd.f32 %v3189, 0.2548296
        %v3191 = vmul.f32 %v3190, %v3182
        %v3192 = vsub.f32 0.0, %v3178
        %v3193 = vmul.f32 %v3192, %v3178
        %v3194 = vmul.f32 %v3193, 1.442695
        %v3195 = vpow.pop %v3194
        %v3196 = vmul.f32 %v3191, %v3195
        %v3197 = vsub.f32 1.0, %v3196
        %v3198 = vmul.f32 %v3177, %v3197
        %v3199 = vadd.f32 %v3198, 1.0
        %v3200 = vmul.f32 %v3174, %v3199
        %s3201 = scalar_lea.vmem %s12, 64
        %v3202 = vld [vmem:[%s3201] sm:$0xff]
        %v3203 = vld [vmem:[%s3201 + $0x8] sm:$0xff]
        %v3204 = vld [vmem:[%s3201 + $0x10] sm:$0xff]
        %v3205 = vld [vmem:[%s3201 + $0x18] sm:$0xff]
        %v3206 = vld [vmem:[%s3201 + $0x20] sm:$0xff]
        %v3207 = vld [vmem:[%s3201 + $0x28] sm:$0xff]
        %v3208 = vld [vmem:[%s3201 + $0x30] sm:$0xff]
        %v3209 = vld [vmem:[%s3201 + $0x38] sm:$0xff]
        %s3210 = scalar_lea.vmem %s13, 1
        %v3211 = vld [vmem:[%s3210] sm:$0x1]
        %v3213 = vlaneseq
        %v3214 = vshrl.u32 %v3213, 7
        %v3215 = vsub.s32 0, %v3214
        %v3216 = vrot.slane %v3211, %v3215
        %v3219 = vsel %vm1891, %v3200, 0
        %3221 = vmatprep.subr.mxu0 0.0
        %3222 = vmatpush1.msra.mxu0 %v3202
        %3223 = vmatprep.subr.mxu0 0.0
        %3224 = vmatpush1.msra.mxu0 %v3203
        %3225 = vmatprep.subr.mxu0 0.0
        %3226 = vmatpush1.msra.mxu0 %v3204
        %3227 = vmatprep.subr.mxu0 0.0
        %3228 = vmatpush1.msra.mxu0 %v3205
        %3229 = vmatprep.subr.mxu0 0.0
        %3230 = vmatpush1.msra.mxu0 %v3206
        %3231 = vmatprep.subr.mxu0 0.0
        %3232 = vmatpush1.msra.mxu0 %v3207
        %3233 = vmatprep.subr.mxu0 0.0
        %3234 = vmatpush1.msra.mxu0 %v3208
        %3235 = vmatprep.subr.mxu0 0.0
        %3236 = vmatpush1.msra.mxu0 %v3209
        %3237 = vmatprep.subr.mxu0 0.0
        %3238 = vmatpush1.msra.mxu0 0.0
        %3239 = vmatprep.subr.mxu0 0.0
        %3240 = vmatpush1.msra.mxu0 0.0
        %3241 = vmatprep.subr.mxu0 0.0
        %3242 = vmatpush1.msra.mxu0 0.0
        %3243 = vmatprep.subr.mxu0 0.0
        %3244 = vmatpush1.msra.mxu0 0.0
        %3245 = vmatprep.subr.mxu0 0.0
        %3246 = vmatpush1.msra.mxu0 0.0
        %3247 = vmatprep.subr.mxu0 0.0
        %3248 = vmatpush1.msra.mxu0 0.0
        %3249 = vmatprep.subr.mxu0 0.0
        %3250 = vmatpush1.msra.mxu0 0.0
        %3251 = vmatprep.subr.mxu0 0.0
        %3252 = vmatpush1.msra.mxu0 0.0
        %3253 = vmatprep.subr.mxu0 0.0
        %3254 = vmatpush1.msra.mxu0 0.0
        %3255 = vmatprep.subr.mxu0 0.0
        %3256 = vmatpush1.msra.mxu0 0.0
        %3257 = vmatprep.subr.mxu0 0.0
        %3258 = vmatpush1.msra.mxu0 0.0
        %3259 = vmatprep.subr.mxu0 0.0
        %3260 = vmatpush1.msra.mxu0 0.0
        %3261 = vmatprep.subr.mxu0 0.0
        %3262 = vmatpush1.msra.mxu0 0.0
        %3263 = vmatprep.subr.mxu0 0.0
        %3264 = vmatpush1.msra.mxu0 0.0
        %3265 = vmatprep.subr.mxu0 0.0
        %3266 = vmatpush1.msra.mxu0 0.0
        %3267 = vmatprep.subr.mxu0 0.0
        %3268 = vmatpush1.msra.mxu0 0.0
        %3269 = vmatprep.subr.mxu0 0.0
        %3270 = vmatpush1.msra.mxu0 0.0
        %3271 = vmatprep.subr.mxu0 0.0
        %3272 = vmatpush1.msra.mxu0 0.0
        %3273 = vmatprep.subr.mxu0 0.0
        %3274 = vmatpush1.msra.mxu0 0.0
        %3275 = vmatprep.subr.mxu0 0.0
        %3276 = vmatpush1.msra.mxu0 0.0
        %3277 = vmatprep.subr.mxu0 0.0
        %3278 = vmatpush1.msra.mxu0 0.0
        %3279 = vmatprep.subr.mxu0 0.0
        %3280 = vmatpush1.msra.mxu0 0.0
        %3281 = vmatprep.subr.mxu0 0.0
        %3282 = vmatpush1.msra.mxu0 0.0
        %3283 = vmatprep.subr.mxu0 0.0
        %3284 = vmatpush1.msra.mxu0 0.0
        %3285 = vmatprep.mubr.f32.mxu0 0.0
        %3286 = vmatmul.mubr.f32.gmra.mrb[0].mxu0 %v3219
        %v3287 = vpop.f32.mrb[0].mxu0
        %v3288 = vadd.f32 %v3216, %v3287
        %v3289 = vpop.f32.mrb[0].mxu0
        %3290 = vdwg.mxu0
        %v3291 = vadd.f32 %v3288, %v3087
        %s3292 = scalar_lea.vmem %s14, 1
        %v3293 = vld [vmem:[%s3292] sm:$0x1]
        %s3294 = scalar_lea.vmem %s15, 1
        %v3295 = vld [vmem:[%s3294] sm:$0x1]
        %v3296 = vsel %vm642, %v3291, 0.0
        %3297 = vadd.xlane.f32.xlu0 %v3296
        %v3298 = vpop.xlane.xlu0 %3297
        %v3299 = vmul.f32 %v3298, %v646
        %v3300 = vsub.f32 %v3291, %v3299
        %v3301 = vmul.f32 %v3300, %v3300
        %v3302 = vsel %vm642, %v3301, 0.0
        %3303 = vadd.xlane.f32.xlu0 %v3302
        %v3304 = vpop.xlane.xlu0 %3303
        %v3305 = vmul.f32 %v3304, %v646
        %v3306 = vadd.f32 %v3305, 1e-12
        %v3307 = vrsqrt.pop %v3306
        %v3308 = vmul.f32 %v3300, %v3307
        %v3310 = vlaneseq
        %v3311 = vshrl.u32 %v3310, 7
        %v3312 = vsub.s32 0, %v3311
        %v3313 = vrot.slane %v3293, %v3312
        %v3315 = vmul.f32 %v3308, %v3313
        %v3317 = vlaneseq
        %v3318 = vshrl.u32 %v3317, 7
        %v3319 = vsub.s32 0, %v3318
        %v3320 = vrot.slane %v3295, %v3319
        %v3322 = vadd.f32 %v3315, %v3320
        %v3323 = vld [vmem:[%s16] sm:$0xff]
        %v3324 = vld [vmem:[%s16 + $0x8] sm:$0xff]
        %v3325 = vld [vmem:[%s16 + $0x10] sm:$0xff]
        %v3326 = vld [vmem:[%s16 + $0x18] sm:$0xff]
        %v3327 = vld [vmem:[%s17] sm:$0x1]
        %v3329 = vsel %vm642, %v3322, 0
        %3331 = vmatprep.subr.mxu0 0.0
        %3332 = vmatpush1.msra.mxu0 %v3323
        %3333 = vmatprep.subr.mxu0 0.0
        %3334 = vmatpush1.msra.mxu0 %v3324
        %3335 = vmatprep.subr.mxu0 0.0
        %3336 = vmatpush1.msra.mxu0 %v3325
        %3337 = vmatprep.subr.mxu0 0.0
        %3338 = vmatpush1.msra.mxu0 %v3326
        %3339 = vmatprep.subr.mxu0 0.0
        %3340 = vmatpush1.msra.mxu0 0.0
        %3341 = vmatprep.subr.mxu0 0.0
        %3342 = vmatpush1.msra.mxu0 0.0
        %3343 = vmatprep.subr.mxu0 0.0
        %3344 = vmatpush1.msra.mxu0 0.0
        %3345 = vmatprep.subr.mxu0 0.0
        %3346 = vmatpush1.msra.mxu0 0.0
        %3347 = vmatprep.subr.mxu0 0.0
        %3348 = vmatpush1.msra.mxu0 0.0
        %3349 = vmatprep.subr.mxu0 0.0
        %3350 = vmatpush1.msra.mxu0 0.0
        %3351 = vmatprep.subr.mxu0 0.0
        %3352 = vmatpush1.msra.mxu0 0.0
        %3353 = vmatprep.subr.mxu0 0.0
        %3354 = vmatpush1.msra.mxu0 0.0
        %3355 = vmatprep.subr.mxu0 0.0
        %3356 = vmatpush1.msra.mxu0 0.0
        %3357 = vmatprep.subr.mxu0 0.0
        %3358 = vmatpush1.msra.mxu0 0.0
        %3359 = vmatprep.subr.mxu0 0.0
        %3360 = vmatpush1.msra.mxu0 0.0
        %3361 = vmatprep.subr.mxu0 0.0
        %3362 = vmatpush1.msra.mxu0 0.0
        %3363 = vmatprep.subr.mxu0 0.0
        %3364 = vmatpush1.msra.mxu0 0.0
        %3365 = vmatprep.subr.mxu0 0.0
        %3366 = vmatpush1.msra.mxu0 0.0
        %3367 = vmatprep.subr.mxu0 0.0
        %3368 = vmatpush1.msra.mxu0 0.0
        %3369 = vmatprep.subr.mxu0 0.0
        %3370 = vmatpush1.msra.mxu0 0.0
        %3371 = vmatprep.subr.mxu0 0.0
        %3372 = vmatpush1.msra.mxu0 0.0
        %3373 = vmatprep.subr.mxu0 0.0
        %3374 = vmatpush1.msra.mxu0 0.0
        %3375 = vmatprep.subr.mxu0 0.0
        %3376 = vmatpush1.msra.mxu0 0.0
        %3377 = vmatprep.subr.mxu0 0.0
        %3378 = vmatpush1.msra.mxu0 0.0
        %3379 = vmatprep.subr.mxu0 0.0
        %3380 = vmatpush1.msra.mxu0 0.0
        %3381 = vmatprep.subr.mxu0 0.0
        %3382 = vmatpush1.msra.mxu0 0.0
        %3383 = vmatprep.subr.mxu0 0.0
        %3384 = vmatpush1.msra.mxu0 0.0
        %3385 = vmatprep.subr.mxu0 0.0
        %3386 = vmatpush1.msra.mxu0 0.0
        %3387 = vmatprep.subr.mxu0 0.0
        %3388 = vmatpush1.msra.mxu0 0.0
        %3389 = vmatprep.subr.mxu0 0.0
        %3390 = vmatpush1.msra.mxu0 0.0
        %3391 = vmatprep.subr.mxu0 0.0
        %3392 = vmatpush1.msra.mxu0 0.0
        %3393 = vmatprep.subr.mxu0 0.0
        %3394 = vmatpush1.msra.mxu0 0.0
        %3395 = vmatprep.mubr.f32.mxu0 0.0
        %3396 = vmatmul.mubr.f32.gmra.mrb[0].mxu0 %v3329
        %v3397 = vpop.f32.mrb[0].mxu0
        %v3398 = vadd.f32 %v3327, %v3397
        %v3399 = vpop.f32.mrb[0].mxu0
        %3400 = vdwg.mxu0
        %v3401 = vtanh.pop %v3398
        %v3402 = vld [vmem:[%s18] sm:$0xff]
        %v3403 = vld [vmem:[%s18 + $0x8] sm:$0xff]
        %v3404 = vld [vmem:[%s18 + $0x10] sm:$0xff]
        %v3405 = vld [vmem:[%s18 + $0x18] sm:$0xff]
        %v3406 = vld [vmem:[%s19] sm:$0x1]
        %v3408 = vsel %vm642, %v3401, 0
        %3410 = vmatprep.subr.mxu0 0.0
        %3411 = vmatpush1.msra.mxu0 %v3402
        %3412 = vmatprep.subr.mxu0 0.0
        %3413 = vmatpush1.msra.mxu0 %v3403
        %3414 = vmatprep.subr.mxu0 0.0
        %3415 = vmatpush1.msra.mxu0 %v3404
        %3416 = vmatprep.subr.mxu0 0.0
        %3417 = vmatpush1.msra.mxu0 %v3405
        %3418 = vmatprep.subr.mxu0 0.0
        %3419 = vmatpush1.msra.mxu0 0.0
        %3420 = vmatprep.subr.mxu0 0.0
        %3421 = vmatpush1.msra.mxu0 0.0
        %3422 = vmatprep.subr.mxu0 0.0
        %3423 = vmatpush1.msra.mxu0 0.0
        %3424 = vmatprep.subr.mxu0 0.0
        %3425 = vmatpush1.msra.mxu0 0.0
        %3426 = vmatprep.subr.mxu0 0.0
        %3427 = vmatpush1.msra.mxu0 0.0
        %3428 = vmatprep.subr.mxu0 0.0
        %3429 = vmatpush1.msra.mxu0 0.0
        %3430 = vmatprep.subr.mxu0 0.0
        %3431 = vmatpush1.msra.mxu0 0.0
        %3432 = vmatprep.subr.mxu0 0.0
        %3433 = vmatpush1.msra.mxu0 0.0
        %3434 = vmatprep.subr.mxu0 0.0
        %3435 = vmatpush1.msra.mxu0 0.0
        %3436 = vmatprep.subr.mxu0 0.0
        %3437 = vmatpush1.msra.mxu0 0.0
        %3438 = vmatprep.subr.mxu0 0.0
        %3439 = vmatpush1.msra.mxu0 0.0
        %3440 = vmatprep.subr.mxu0 0.0
        %3441 = vmatpush1.msra.mxu0 0.0
        %3442 = vmatprep.subr.mxu0 0.0
        %3443 = vmatpush1.msra.mxu0 0.0
        %3444 = vmatprep.subr.mxu0 0.0
        %3445 = vmatpush1.msra.mxu0 0.0
        %3446 = vmatprep.subr.mxu0 0.0
        %3447 = vmatpush1.msra.mxu0 0.0
        %3448 = vmatprep.subr.mxu0 0.0
        %3449 = vmatpush1.msra.mxu0 0.0
        %3450 = vmatprep.subr.mxu0 0.0
        %3451 = vmatpush1.msra.mxu0 0.0
        %3452 = vmatprep.subr.mxu0 0.0
        %3453 = vmatpush1.msra.mxu0 0.0
        %3454 = vmatprep.subr.mxu0 0.0
        %3455 = vmatpush1.msra.mxu0 0.0
        %3456 = vmatprep.subr.mxu0 0.0
        %3457 = vmatpush1.msra.mxu0 0.0
        %3458 = vmatprep.subr.mxu0 0.0
        %3459 = vmatpush1.msra.mxu0 0.0
        %3460 = vmatprep.subr.mxu0 0.0
        %3461 = vmatpush1.msra.mxu0 0.0
        %3462 = vmatprep.subr.mxu0 0.0
        %3463 = vmatpush1.msra.mxu0 0.0
        %3464 = vmatprep.subr.mxu0 0.0
        %3465 = vmatpush1.msra.mxu0 0.0
        %3466 = vmatprep.subr.mxu0 0.0
        %3467 = vmatpush1.msra.mxu0 0.0
        %3468 = vmatprep.subr.mxu0 0.0
        %3469 = vmatpush1.msra.mxu0 0.0
        %3470 = vmatprep.subr.mxu0 0.0
        %3471 = vmatpush1.msra.mxu0 0.0
        %3472 = vmatprep.subr.mxu0 0.0
        %3473 = vmatpush1.msra.mxu0 0.0
        %3474 = vmatprep.mubr.f32.mxu0 0.0
        %3475 = vmatmul.mubr.f32.gmra.mrb[0].mxu0 %v3408
        %v3476 = vpop.f32.mrb[0].mxu0
        %v3477 = vadd.f32 %v3406, %v3476
        %v3478 = vpop.f32.mrb[0].mxu0
        %3479 = vdwg.mxu0
        %vm3480 = vcmask 57344
        %3481 = vst.msk [vmem:[%s630] sm:$0x1] %vm3480, %v3477
        %s3482 = sand.u32 %s472, 1
        %s3483 = scalar_lea.sflag [#allocation3], %s3482
        %s3484 = sand.u32 %s472, 1
        %s3485 = scalar_lea.vmem [#allocation2], %s3484
        // Predicated region
        $region101: #{cps_bert_forward.1} parent=99 // pred_check
          %p3486 = pneg %p482
        $region102: #{cps_bert_forward.1} parent=99 // pred_check_branch
          %3488 = sbr.rel (%p3486) target = $region104
        $region103: #{cps_bert_forward.1} parent=99 // pred_region
          %s3490 = ssub.s32 16, 16
          %3491 = vsyncadd %s3483, %s3490
          %s3492 = smul.addr %s34, 16
          %s3493 = scalar_lea.hbm %s20, %s3492
          %s3495 = sshll.u32 %s3485, 4
          %s3496 = int_to_ptr.vmem [resolvable:$true] %s3495
          %3498 = dma.vmem_to_hbm [thread:$0]  %s3496, 16, %s3493, %s3483
        $region104: #{cps_bert_forward.1} parent=99 // pred_fallthru
          _
      $region100: #{cps_bert_forward.1} parent=5 // pred_fallthru
        _
      %p3499 = scmp.le.s32.totalorder 2, %s29
      // Predicated region
      $region105: #{cps_bert_forward.1} parent=5 // pred_check
        %p3500 = pneg %p3499
      $region106: #{cps_bert_forward.1} parent=5 // pred_check_branch
        %3502 = sbr.rel (%p3500) target = $region108
      $region107: #{cps_bert_forward.1} parent=5 // pred_region
        %s3503 = ssub.s32 %s29, 2
        // Predicated region
        $region109: #{cps_bert_forward.1} parent=107 // pred_check
          %p3504 = pneg %p488
        $region110: #{cps_bert_forward.1} parent=107 // pred_check_branch
          %3506 = sbr.rel (%p3504) target = $region112
        $region111: #{cps_bert_forward.1} parent=107 // pred_region
          %s3507 = sand.u32 %s473, 1
          %s3508 = scalar_lea.sflag [#allocation3], %s3507
          %s3509 = sand.u32 %s473, 1
          %s3510 = scalar_lea.vmem [#allocation2], %s3509
          %3511 = dma.done %s3508, 16
        $region112: #{cps_bert_forward.1} parent=107 // pred_fallthru
          _
      $region108: #{cps_bert_forward.1} parent=5 // pred_fallthru
        _
    $region6: #{cps_bert_forward.1} parent=1 // loop_footer
      %s33 = sadd.s32 1, %s29
    $region7: #{cps_bert_forward.1} parent=1 // loop_footer_branch
      %28 = sbr.rel target = $region3
    $region8: #{cps_bert_forward.1} parent=1 // loop_exit
      _
    %3512 = vsyncpa [#allocation3], 1
    %s3513 = scalar_lea.sflag [#allocation3], 1
    %3514 = vsyncpa %s3513, 1

</llo_original>
